<compile_context>
chip_gen: v5e
topology: v5e:2x2
jax: 0.10.0
libtpu: 0.0.40
codegen_flags: <defaults>
</compile_context>

<pallas_src>
import jax
import jax.numpy as jnp
from jax.experimental import pallas as pl
from jax.experimental.pallas import tpu as pltpu


# ----------------------------------------------------------------------------
# Kernel 1: bottleneck + 3 fused "same" convs + maxpool+1x1 conv + BN partials.
# ----------------------------------------------------------------------------
def _inception_kernel(xp_ref, whead_ref, bb_ref, wconv_ref, bias_ref,
                      out_ref, stats_ref, u_ref, bpad_ref, stack_ref):
    # xp_ref   : (B_blk, c_in, L + 2)  raw input, time padded with -inf (maxpool)
    # whead_ref: (nb_ch + nf, c_in)    [bottleneck ; maxpool-branch] 1x1 weights
    # bb_ref   : (nb_ch, 1)            bottleneck bias
    # wconv_ref: (3*nf, Kmax*nb_ch)    fused "same"-conv weights (zero padded)
    # bias_ref : (4*nf, 1)             output-channel biases (3 convs + mp conv)
    # out_ref  : (4*nf, B_blk*L)       lane-dense channel-major output tile
    # stats_ref: (1, 4*nf, 2)          per-block [sum, sum-of-squares]
    # u_ref    : (c_in, 2*B_blk*L)     scratch: [x | maxpool(x)] lane-packed
    # bpad_ref : (nb_ch, B_blk*Lp)     scratch: per-sample zero-padded bottleneck
    # stack_ref: (Kmax*nb_ch, B_blk*L) scratch: im2col stack of shifted windows
    B_blk, c_in, Lq = xp_ref.shape
    L = Lq - 2
    nb_ch = bb_ref.shape[0]
    c_out, BL = out_ref.shape
    nf = c_out // 4
    Kmax = wconv_ref.shape[1] // nb_ch
    pmax = Kmax // 2
    Lp = L + 2 * pmax

    # ---- per-sample real input slice + maxpool(3, stride 1, pad 1), packed
    #      onto the lane axis of a single (c_in, 2*B_blk*L) operand.
    for b in range(B_blk):
        xb = xp_ref[b]                                   # (c_in, L + 2)
        u_ref[:, b * L:(b + 1) * L] = xb[:, 1:1 + L]
        u_ref[:, BL + b * L:BL + (b + 1) * L] = jnp.maximum(
            jnp.maximum(xb[:, 0:L], xb[:, 1:1 + L]), xb[:, 2:2 + L])

    # ---- fused 1x1 convs: bottleneck (rows :nb_ch, on x) and the maxpool
    #      branch conv (rows nb_ch:, on maxpool(x)) in one MXU matmul.
    head = jnp.dot(whead_ref[...], u_ref[...],
                   preferred_element_type=jnp.float32)   # (nb_ch + nf, 2*BL)
    bott = head[:nb_ch, :BL] + bb_ref[...]               # (nb_ch, BL)
    mpc = head[nb_ch:, BL:] + bias_ref[3 * nf:, :]       # (nf, BL)

    # ---- scatter bottleneck output into per-sample zero-padded scratch
    #      (only the pad margins are zeroed, not the whole buffer).
    zpad = jnp.zeros((nb_ch, pmax), jnp.float32)
    for b in range(B_blk):
        base = b * Lp
        bpad_ref[:, base:base + pmax] = zpad
        bpad_ref[:, base + pmax:base + pmax + L] = bott[:, b * L:(b + 1) * L]
        bpad_ref[:, base + pmax + L:base + Lp] = zpad

    # ---- im2col stack: sublane row-block k holds the tap-k shifted window
    for k in range(Kmax):
        r = k * nb_ch
        for b in range(B_blk):
            stack_ref[r:r + nb_ch, b * L:(b + 1) * L] = (
                bpad_ref[:, b * Lp + k:b * Lp + k + L])

    # ---- all three "same" conv branches in ONE MXU matmul (96 out channels)
    conv = jnp.dot(wconv_ref[...], stack_ref[...],
                   preferred_element_type=jnp.float32)   # (3*nf, BL)
    conv = conv + bias_ref[:3 * nf, :]

    out_ref[:3 * nf, :] = conv
    out_ref[3 * nf:, :] = mpc

    # ---- per-block BatchNorm partial statistics (sum, sum of squares);
    #      reduced to mean/var in plain JAX so the activation is not re-read.
    stats_ref[0, :3 * nf, 0:1] = jnp.sum(conv, axis=1, keepdims=True)
    stats_ref[0, :3 * nf, 1:2] = jnp.sum(conv * conv, axis=1, keepdims=True)
    stats_ref[0, 3 * nf:, 0:1] = jnp.sum(mpc, axis=1, keepdims=True)
    stats_ref[0, 3 * nf:, 1:2] = jnp.sum(mpc * mpc, axis=1, keepdims=True)


# ----------------------------------------------------------------------------
# Kernel 2: tiled, lane-dense normalize (precomputed scale/shift) + ReLU.
# ----------------------------------------------------------------------------
def _bn_relu_kernel(x_ref, scale_ref, shift_ref, out_ref):
    out_ref[...] = jnp.maximum(x_ref[...] * scale_ref[...] + shift_ref[...], 0.0)


# ----------------------------------------------------------------------------
# Tiling helpers
# ----------------------------------------------------------------------------
def _pick_batch_block(N, L):
    """Batch elements folded onto the lane axis per grid step (lane-dense output,
    bounded im2col scratch)."""
    best = None
    for d in range(1, N + 1):
        if N % d:
            continue
        if d * L > 1024:                       # bound the im2col scratch in VMEM
            continue
        if d != N and (d * L) % 128 != 0:      # keep the output block lane-aligned
            continue
        best = d
    return best if best is not None else N


def _pick_col_tile(total):
    for t in (2048, 1024, 512, 256, 128):
        if total % t == 0:
            return t
    return total


# ----------------------------------------------------------------------------
# Wrapper
# ----------------------------------------------------------------------------
def inception_layer(x, p):
    N, c_in, L = x.shape
    nf = p["wc"].shape[0]                    # nb_filters
    nb_ch = p["wb"].shape[0]                 # bottleneck channels
    kss = [w.shape[-1] for w in p["conv_w"]]
    Kmax = max(kss)
    pmax = Kmax // 2
    Lp = L + 2 * pmax
    c_out = 4 * nf

    B_blk = _pick_batch_block(N, L)
    n_blocks = N // B_blk

    # glue: pad the time axis with -inf (only the maxpool branch reads the pads)
    x_mp = jnp.pad(x, ((0, 0), (0, 0), (1, 1)), constant_values=-jnp.inf)

    # glue: prepack weights --------------------------------------------------
    # fused 1x1 head: [bottleneck ; maxpool-branch conv]
    w_head = jnp.concatenate([p["wb"][:, :, 0], p["wc"][:, :, 0]], axis=0)
    bb = p["bb"][:, None]
    # fused "same" convs: branch i -> rows [i*nf, (i+1)*nf); tap k of branch i
    # -> columns [(off_i+k)*nb_ch, (off_i+k+1)*nb_ch), off_i = pmax - K_i//2.
    w_conv = jnp.zeros((3 * nf, Kmax * nb_ch), jnp.float32)
    for i, w in enumerate(p["conv_w"]):
        K = w.shape[-1]
        off = pmax - K // 2
        wt = jnp.transpose(w, (0, 2, 1)).reshape(nf, K * nb_ch)
        w_conv = w_conv.at[i * nf:(i + 1) * nf,
                           off * nb_ch:(off + K) * nb_ch].set(wt)
    bias_all = jnp.concatenate(list(p["conv_b"]) + [p["bc"]])[:, None]

    inc_t, stats = pl.pallas_call(
        _inception_kernel,
        out_shape=(jax.ShapeDtypeStruct((c_out, N * L), jnp.float32),
                   jax.ShapeDtypeStruct((n_blocks, c_out, 2), jnp.float32)),
        grid_spec=pltpu.PrefetchScalarGridSpec(
            num_scalar_prefetch=0,
            grid=(n_blocks,),
            in_specs=[
                pl.BlockSpec((B_blk, c_in, L + 2), lambda nb: (nb, 0, 0)),
                pl.BlockSpec(w_head.shape, lambda nb: (0, 0)),
                pl.BlockSpec(bb.shape, lambda nb: (0, 0)),
                pl.BlockSpec(w_conv.shape, lambda nb: (0, 0)),
                pl.BlockSpec(bias_all.shape, lambda nb: (0, 0)),
            ],
            out_specs=[
                pl.BlockSpec((c_out, B_blk * L), lambda nb: (0, nb)),
                pl.BlockSpec((1, c_out, 2), lambda nb: (nb, 0, 0)),
            ],
            scratch_shapes=[
                pltpu.VMEM((c_in, 2 * B_blk * L), jnp.float32),
                pltpu.VMEM((nb_ch, B_blk * Lp), jnp.float32),
                pltpu.VMEM((Kmax * nb_ch, B_blk * L), jnp.float32),
            ],
        ),
        compiler_params=pltpu.CompilerParams(
            dimension_semantics=("parallel",),
            vmem_limit_bytes=48 * 1024 * 1024),
    )(x_mp, w_head, bb, w_conv, bias_all)

    # glue: reduce per-block partial sums to a per-channel scale / shift
    count = float(N * L)
    s = jnp.sum(stats, axis=0)                      # (c_out, 2)
    mean = s[:, 0] / count
    var = s[:, 1] / count - mean * mean             # biased variance (training mode)
    inv = jax.lax.rsqrt(var + 1e-5)
    scale = (p["gamma"] * inv)[:, None]             # (c_out, 1)
    shift = (p["beta"] - mean * p["gamma"] * inv)[:, None]

    tile = _pick_col_tile(N * L)
    y_t = pl.pallas_call(
        _bn_relu_kernel,
        out_shape=jax.ShapeDtypeStruct((c_out, N * L), jnp.float32),
        grid_spec=pltpu.PrefetchScalarGridSpec(
            num_scalar_prefetch=0,
            grid=(N * L // tile,),
            in_specs=[
                pl.BlockSpec((c_out, tile), lambda i: (0, i)),
                pl.BlockSpec((c_out, 1), lambda i: (0, 0)),
                pl.BlockSpec((c_out, 1), lambda i: (0, 0)),
            ],
            out_specs=pl.BlockSpec((c_out, tile), lambda i: (0, i)),
        ),
        compiler_params=pltpu.CompilerParams(
            dimension_semantics=("parallel",),
            vmem_limit_bytes=48 * 1024 * 1024),
    )(inc_t, scale, shift)

    # glue: back to the PyTorch (N, C, L) layout
    return jnp.transpose(y_t.reshape(c_out, N, L), (1, 0, 2))


# ----------------------------------------------------------------------------
# Deterministic parameter init (shapes from InceptionLayer.__init__)
# ----------------------------------------------------------------------------
def init_params(key, c_in, bottleneck=32, kernel_size=40, nb_filters=32):
    kss = [kernel_size // 2 ** i for i in range(3)]
    kss = [k if k % 2 != 0 else k - 1 for k in kss]          # [39, 19, 9]
    keys = jax.random.split(key, 12)

    def unif(k, shape, fan_in):
        bound = 1.0 / (fan_in ** 0.5)
        return jax.random.uniform(k, shape, jnp.float32, -bound, bound)

    p = {
        "wb": unif(keys[0], (bottleneck, c_in, 1), c_in),
        "bb": unif(keys[1], (bottleneck,), c_in),
        "conv_w": [],
        "conv_b": [],
        "wc": unif(keys[8], (nb_filters, c_in, 1), c_in),
        "bc": unif(keys[9], (nb_filters,), c_in),
        "gamma": 1.0 + 0.1 * jax.random.normal(keys[10], (nb_filters * 4,), jnp.float32),
        "beta": 0.1 * jax.random.normal(keys[11], (nb_filters * 4,), jnp.float32),
    }
    for i, k in enumerate(kss):
        p["conv_w"].append(unif(keys[2 + 2 * i], (nb_filters, bottleneck, k),
                                bottleneck * k))
        p["conv_b"].append(unif(keys[3 + 2 * i], (nb_filters,), bottleneck * k))
    return p


# ----------------------------------------------------------------------------
# Pure-JAX reference (mirrors the PyTorch forward in training mode)
# ----------------------------------------------------------------------------
def _conv1d_ref(x, w, b, pad):
    y = jax.lax.conv_general_dilated(
        x, w, window_strides=(1,), padding=[(pad, pad)],
        dimension_numbers=("NCH", "OIH", "NCH"),
        precision=jax.lax.Precision.HIGHEST)
    return y + b[None, :, None]


def inception_reference(x, p):
    bott = _conv1d_ref(x, p["wb"], p["bb"], 0)
    outs = []
    for w, b in zip(p["conv_w"], p["conv_b"]):
        k = w.shape[-1]
        outs.append(_conv1d_ref(bott, w, b, k // 2))
    mp = jax.lax.reduce_window(x, -jnp.inf, jax.lax.max,
                               (1, 1, 3), (1, 1, 1),
                               [(0, 0), (0, 0), (1, 1)])
    outs.append(_conv1d_ref(mp, p["wc"], p["bc"], 0))
    inc = jnp.concatenate(outs, axis=1)
    mean = jnp.mean(inc, axis=(0, 2), keepdims=True)
    var = jnp.mean((inc - mean) ** 2, axis=(0, 2), keepdims=True)
    y = (inc - mean) / jnp.sqrt(var + 1e-5)
    y = y * p["gamma"][None, :, None] + p["beta"][None, :, None]
    return jnp.maximum(y, 0.0)


if __name__ == "__main__":
    key = jax.random.PRNGKey(0)
    N, C_IN, L = 2, 4, 64
    kx, kp = jax.random.split(key)
    x = jax.random.normal(kx, (N, C_IN, L), jnp.float32)
    params = init_params(kp, C_IN)

    out = jax.jit(inception_layer)(x, params)
    out = jax.block_until_ready(out)

    ref = inception_reference(x, params)
    assert out.shape == (N, 128, L), out.shape
    err = float(jnp.max(jnp.abs(out - ref)))
    assert err < 2e-3, f"max abs err too large: {err}"
    print("KERNEL_OK")
</pallas_src>

<mosaic_0001>
module attributes {stable_mosaic.version = 11 : i64} {
  func.func @_bn_relu_kernel(%arg0: i32, %arg1: memref<128x128xf32, #tpu.memory_space<vmem>>, %arg2: memref<128x1xf32, #tpu.memory_space<vmem>>, %arg3: memref<128x1xf32, #tpu.memory_space<vmem>>, %arg4: memref<128x128xf32, #tpu.memory_space<vmem>>) attributes {dimension_semantics = [#tpu.dimension_semantics<parallel>], iteration_bounds = array<i64: 1>, scalar_prefetch = 0 : i64, scratch_operands = 0 : i64, tpu.core_type = #tpu.core_type<tc>, window_params = [{transform_indices = @transform_0, window_bounds = array<i64: 128, 128>}, {pipeline_mode = #tpu.pipeline_mode<synchronous>, transform_indices = @transform_1, window_bounds = array<i64: 128, 1>}, {pipeline_mode = #tpu.pipeline_mode<synchronous>, transform_indices = @transform_2, window_bounds = array<i64: 128, 1>}, {transform_indices = @transform_3, window_bounds = array<i64: 128, 128>}]} {
    %c0 = arith.constant 0 : index
    %c0_0 = arith.constant 0 : index
    %0 = vector.load %arg1[%c0, %c0_0] : memref<128x128xf32, #tpu.memory_space<vmem>>, vector<128x128xf32>
    %c0_1 = arith.constant 0 : index
    %c0_2 = arith.constant 0 : index
    %1 = vector.load %arg2[%c0_1, %c0_2] : memref<128x1xf32, #tpu.memory_space<vmem>>, vector<128x1xf32>
    %2 = vector.broadcast %1 : vector<128x1xf32> to vector<128x128xf32>
    %3 = arith.mulf %0, %2 : vector<128x128xf32>
    %c0_3 = arith.constant 0 : index
    %c0_4 = arith.constant 0 : index
    %4 = vector.load %arg3[%c0_3, %c0_4] : memref<128x1xf32, #tpu.memory_space<vmem>>, vector<128x1xf32>
    %5 = vector.broadcast %4 : vector<128x1xf32> to vector<128x128xf32>
    %6 = arith.addf %3, %5 : vector<128x128xf32>
    %cst = arith.constant 0.000000e+00 : f32
    %7 = vector.broadcast %cst : f32 to vector<128x128xf32>
    %8 = arith.maximumf %6, %7 : vector<128x128xf32>
    %c0_5 = arith.constant 0 : index
    %c0_6 = arith.constant 0 : index
    %9 = vector.load %arg4[%c0_5, %c0_6] : memref<128x128xf32, #tpu.memory_space<vmem>>, vector<128x128xf32>
    tpu.vector_store %arg4[%c0_5, %c0_6], %8 {strides = array<i32>} : memref<128x128xf32, #tpu.memory_space<vmem>>, vector<128x128xf32>,
    return
  }
  func.func @transform_0(%arg0: i32) -> (i32, i32) {
    %c0_i32 = arith.constant 0 : i32
    %c0_i32_0 = arith.constant 0 : i32
    return %c0_i32, %arg0 : i32, i32
  }
  func.func @transform_1(%arg0: i32) -> (i32, i32) {
    %c0_i32 = arith.constant 0 : i32
    %c0_i32_0 = arith.constant 0 : i32
    %c0_i32_1 = arith.constant 0 : i32
    return %c0_i32, %c0_i32_0 : i32, i32
  }
  func.func @transform_2(%arg0: i32) -> (i32, i32) {
    %c0_i32 = arith.constant 0 : i32
    %c0_i32_0 = arith.constant 0 : i32
    %c0_i32_1 = arith.constant 0 : i32
    return %c0_i32, %c0_i32_0 : i32, i32
  }
  func.func @transform_3(%arg0: i32) -> (i32, i32) {
    %c0_i32 = arith.constant 0 : i32
    %c0_i32_0 = arith.constant 0 : i32
    return %c0_i32, %arg0 : i32, i32
  }
}

module attributes {stable_mosaic.version = 11 : i64} {
  func.func @_inception_kernel(%arg0: i32, %arg1: memref<2x4x66xf32, #tpu.memory_space<vmem>>, %arg2: memref<64x4xf32, #tpu.memory_space<vmem>>, %arg3: memref<32x1xf32, #tpu.memory_space<vmem>>, %arg4: memref<96x1248xf32, #tpu.memory_space<vmem>>, %arg5: memref<128x1xf32, #tpu.memory_space<vmem>>, %arg6: memref<128x128xf32, #tpu.memory_space<vmem>>, %arg7: memref<1x128x2xf32, #tpu.memory_space<vmem>>, %arg8: memref<4x256xf32, #tpu.memory_space<vmem>>, %arg9: memref<32x204xf32, #tpu.memory_space<vmem>>, %arg10: memref<1248x128xf32, #tpu.memory_space<vmem>>) attributes {dimension_semantics = [#tpu.dimension_semantics<parallel>], iteration_bounds = array<i64: 1>, scalar_prefetch = 0 : i64, scratch_operands = 3 : i64, tpu.core_type = #tpu.core_type<tc>, window_params = [{transform_indices = @transform_0, window_bounds = array<i64: 2, 4, 66>}, {pipeline_mode = #tpu.pipeline_mode<synchronous>, transform_indices = @transform_1, window_bounds = array<i64: 64, 4>}, {pipeline_mode = #tpu.pipeline_mode<synchronous>, transform_indices = @transform_2, window_bounds = array<i64: 32, 1>}, {pipeline_mode = #tpu.pipeline_mode<synchronous>, transform_indices = @transform_3, window_bounds = array<i64: 96, 1248>}, {pipeline_mode = #tpu.pipeline_mode<synchronous>, transform_indices = @transform_4, window_bounds = array<i64: 128, 1>}, {transform_indices = @transform_5, window_bounds = array<i64: 128, 128>}, {transform_indices = @transform_6, window_bounds = array<i64: 1, 128, 2>}]} {
    %c0 = arith.constant 0 : index
    %c0_0 = arith.constant 0 : index
    %c0_1 = arith.constant 0 : index
    %0 = vector.load %arg1[%c0, %c0_0, %c0_1] : memref<2x4x66xf32, #tpu.memory_space<vmem>>, vector<1x4x66xf32>
    %1 = vector.shape_cast %0 : vector<1x4x66xf32> to vector<4x66xf32>
    %2 = vector.extract_strided_slice %1 {offsets = [0, 1], sizes = [4, 64], strides = [1, 1]} : vector<4x66xf32> to vector<4x64xf32>
    %c0_2 = arith.constant 0 : index
    %c0_3 = arith.constant 0 : index
    %3 = vector.load %arg8[%c0_2, %c0_3] : memref<4x256xf32, #tpu.memory_space<vmem>>, vector<4x64xf32>
    tpu.vector_store %arg8[%c0_2, %c0_3], %2 {strides = array<i32>} : memref<4x256xf32, #tpu.memory_space<vmem>>, vector<4x64xf32>,
    %4 = vector.extract_strided_slice %1 {offsets = [0, 0], sizes = [4, 64], strides = [1, 1]} : vector<4x66xf32> to vector<4x64xf32>
    %5 = vector.extract_strided_slice %1 {offsets = [0, 1], sizes = [4, 64], strides = [1, 1]} : vector<4x66xf32> to vector<4x64xf32>
    %6 = arith.maximumf %4, %5 : vector<4x64xf32>
    %7 = vector.extract_strided_slice %1 {offsets = [0, 2], sizes = [4, 64], strides = [1, 1]} : vector<4x66xf32> to vector<4x64xf32>
    %8 = arith.maximumf %6, %7 : vector<4x64xf32>
    %c0_4 = arith.constant 0 : index
    %c128 = arith.constant 128 : index
    %9 = vector.load %arg8[%c0_4, %c128] : memref<4x256xf32, #tpu.memory_space<vmem>>, vector<4x64xf32>
    tpu.vector_store %arg8[%c0_4, %c128], %8 {strides = array<i32>} : memref<4x256xf32, #tpu.memory_space<vmem>>, vector<4x64xf32>,
    %c1 = arith.constant 1 : index
    %c0_5 = arith.constant 0 : index
    %c0_6 = arith.constant 0 : index
    %10 = vector.load %arg1[%c1, %c0_5, %c0_6] : memref<2x4x66xf32, #tpu.memory_space<vmem>>, vector<1x4x66xf32>
    %11 = vector.shape_cast %10 : vector<1x4x66xf32> to vector<4x66xf32>
    %12 = vector.extract_strided_slice %11 {offsets = [0, 1], sizes = [4, 64], strides = [1, 1]} : vector<4x66xf32> to vector<4x64xf32>
    %c0_7 = arith.constant 0 : index
    %c64 = arith.constant 64 : index
    %13 = vector.load %arg8[%c0_7, %c64] : memref<4x256xf32, #tpu.memory_space<vmem>>, vector<4x64xf32>
    tpu.vector_store %arg8[%c0_7, %c64], %12 {strides = array<i32>} : memref<4x256xf32, #tpu.memory_space<vmem>>, vector<4x64xf32>,
    %14 = vector.extract_strided_slice %11 {offsets = [0, 0], sizes = [4, 64], strides = [1, 1]} : vector<4x66xf32> to vector<4x64xf32>
    %15 = vector.extract_strided_slice %11 {offsets = [0, 1], sizes = [4, 64], strides = [1, 1]} : vector<4x66xf32> to vector<4x64xf32>
    %16 = arith.maximumf %14, %15 : vector<4x64xf32>
    %17 = vector.extract_strided_slice %11 {offsets = [0, 2], sizes = [4, 64], strides = [1, 1]} : vector<4x66xf32> to vector<4x64xf32>
    %18 = arith.maximumf %16, %17 : vector<4x64xf32>
    %c0_8 = arith.constant 0 : index
    %c192 = arith.constant 192 : index
    %19 = vector.load %arg8[%c0_8, %c192] : memref<4x256xf32, #tpu.memory_space<vmem>>, vector<4x64xf32>
    tpu.vector_store %arg8[%c0_8, %c192], %18 {strides = array<i32>} : memref<4x256xf32, #tpu.memory_space<vmem>>, vector<4x64xf32>,
    %c0_9 = arith.constant 0 : index
    %c0_10 = arith.constant 0 : index
    %20 = vector.load %arg2[%c0_9, %c0_10] : memref<64x4xf32, #tpu.memory_space<vmem>>, vector<64x4xf32>
    %c0_11 = arith.constant 0 : index
    %c0_12 = arith.constant 0 : index
    %21 = vector.load %arg8[%c0_11, %c0_12] : memref<4x256xf32, #tpu.memory_space<vmem>>, vector<4x256xf32>
    %cst = arith.constant dense<0.000000e+00> : vector<64x256xf32>
    %22 = tpu.matmul %20, %21, %cst {dimension_numbers = #tpu.dot_dimension_numbers<[1], [0], [0], [1], [0, 0, 1, 1], [], []>} : vector<64x4xf32>, vector<4x256xf32>, vector<64x256xf32> -> vector<64x256xf32>
    %23 = vector.extract_strided_slice %22 {offsets = [0, 0], sizes = [32, 128], strides = [1, 1]} : vector<64x256xf32> to vector<32x128xf32>
    %c0_13 = arith.constant 0 : index
    %c0_14 = arith.constant 0 : index
    %24 = vector.load %arg3[%c0_13, %c0_14] : memref<32x1xf32, #tpu.memory_space<vmem>>, vector<32x1xf32>
    %25 = vector.broadcast %24 : vector<32x1xf32> to vector<32x128xf32>
    %26 = arith.addf %23, %25 : vector<32x128xf32>
    %27 = vector.extract_strided_slice %22 {offsets = [32, 128], sizes = [32, 128], strides = [1, 1]} : vector<64x256xf32> to vector<32x128xf32>
    %c96 = arith.constant 96 : index
    %c0_15 = arith.constant 0 : index
    %28 = vector.load %arg5[%c96, %c0_15] : memref<128x1xf32, #tpu.memory_space<vmem>>, vector<32x1xf32>
    %29 = vector.broadcast %28 : vector<32x1xf32> to vector<32x128xf32>
    %30 = arith.addf %27, %29 : vector<32x128xf32>
    %cst_16 = arith.constant 0.000000e+00 : f32
    %31 = vector.broadcast %cst_16 : f32 to vector<32x19xf32>
    %c0_17 = arith.constant 0 : index
    %c0_18 = arith.constant 0 : index
    %32 = vector.load %arg9[%c0_17, %c0_18] : memref<32x204xf32, #tpu.memory_space<vmem>>, vector<32x19xf32>
    tpu.vector_store %arg9[%c0_17, %c0_18], %31 {strides = array<i32>} : memref<32x204xf32, #tpu.memory_space<vmem>>, vector<32x19xf32>,
    %33 = vector.extract_strided_slice %26 {offsets = [0, 0], sizes = [32, 64], strides = [1, 1]} : vector<32x128xf32> to vector<32x64xf32>
    %c0_19 = arith.constant 0 : index
    %c19 = arith.constant 19 : index
    %34 = vector.load %arg9[%c0_19, %c19] : memref<32x204xf32, #tpu.memory_space<vmem>>, vector<32x64xf32>
    tpu.vector_store %arg9[%c0_19, %c19], %33 {strides = array<i32>} : memref<32x204xf32, #tpu.memory_space<vmem>>, vector<32x64xf32>,
    %c0_20 = arith.constant 0 : index
    %c83 = arith.constant 83 : index
    %35 = vector.load %arg9[%c0_20, %c83] : memref<32x204xf32, #tpu.memory_space<vmem>>, vector<32x19xf32>
    tpu.vector_store %arg9[%c0_20, %c83], %31 {strides = array<i32>} : memref<32x204xf32, #tpu.memory_space<vmem>>, vector<32x19xf32>,
    %c0_21 = arith.constant 0 : index
    %c102 = arith.constant 102 : index
    %36 = vector.load %arg9[%c0_21, %c102] : memref<32x204xf32, #tpu.memory_space<vmem>>, vector<32x19xf32>
    tpu.vector_store %arg9[%c0_21, %c102], %31 {strides = array<i32>} : memref<32x204xf32, #tpu.memory_space<vmem>>, vector<32x19xf32>,
    %37 = vector.extract_strided_slice %26 {offsets = [0, 64], sizes = [32, 64], strides = [1, 1]} : vector<32x128xf32> to vector<32x64xf32>
    %c0_22 = arith.constant 0 : index
    %c121 = arith.constant 121 : index
    %38 = vector.load %arg9[%c0_22, %c121] : memref<32x204xf32, #tpu.memory_space<vmem>>, vector<32x64xf32>
    tpu.vector_store %arg9[%c0_22, %c121], %37 {strides = array<i32>} : memref<32x204xf32, #tpu.memory_space<vmem>>, vector<32x64xf32>,
    %c0_23 = arith.constant 0 : index
    %c185 = arith.constant 185 : index
    %39 = vector.load %arg9[%c0_23, %c185] : memref<32x204xf32, #tpu.memory_space<vmem>>, vector<32x19xf32>
    tpu.vector_store %arg9[%c0_23, %c185], %31 {strides = array<i32>} : memref<32x204xf32, #tpu.memory_space<vmem>>, vector<32x19xf32>,
    %c0_24 = arith.constant 0 : index
    %c0_25 = arith.constant 0 : index
    %40 = vector.load %arg9[%c0_24, %c0_25] : memref<32x204xf32, #tpu.memory_space<vmem>>, vector<32x64xf32>
    %c0_26 = arith.constant 0 : index
    %c0_27 = arith.constant 0 : index
    %41 = vector.load %arg10[%c0_26, %c0_27] : memref<1248x128xf32, #tpu.memory_space<vmem>>, vector<32x64xf32>
    tpu.vector_store %arg10[%c0_26, %c0_27], %40 {strides = array<i32>} : memref<1248x128xf32, #tpu.memory_space<vmem>>, vector<32x64xf32>,
    %c0_28 = arith.constant 0 : index
    %c102_29 = arith.constant 102 : index
    %42 = vector.load %arg9[%c0_28, %c102_29] : memref<32x204xf32, #tpu.memory_space<vmem>>, vector<32x64xf32>
    %c0_30 = arith.constant 0 : index
    %c64_31 = arith.constant 64 : index
    %43 = vector.load %arg10[%c0_30, %c64_31] : memref<1248x128xf32, #tpu.memory_space<vmem>>, vector<32x64xf32>
    tpu.vector_store %arg10[%c0_30, %c64_31], %42 {strides = array<i32>} : memref<1248x128xf32, #tpu.memory_space<vmem>>, vector<32x64xf32>,
    %c0_32 = arith.constant 0 : index
    %c1_33 = arith.constant 1 : index
    %44 = vector.load %arg9[%c0_32, %c1_33] : memref<32x204xf32, #tpu.memory_space<vmem>>, vector<32x64xf32>
    %c32 = arith.constant 32 : index
    %c0_34 = arith.constant 0 : index
    %45 = vector.load %arg10[%c32, %c0_34] : memref<1248x128xf32, #tpu.memory_space<vmem>>, vector<32x64xf32>
    tpu.vector_store %arg10[%c32, %c0_34], %44 {strides = array<i32>} : memref<1248x128xf32, #tpu.memory_space<vmem>>, vector<32x64xf32>,
    %c0_35 = arith.constant 0 : index
    %c103 = arith.constant 103 : index
    %46 = vector.load %arg9[%c0_35, %c103] : memref<32x204xf32, #tpu.memory_space<vmem>>, vector<32x64xf32>
    %c32_36 = arith.constant 32 : index
    %c64_37 = arith.constant 64 : index
    %47 = vector.load %arg10[%c32_36, %c64_37] : memref<1248x128xf32, #tpu.memory_space<vmem>>, vector<32x64xf32>
    tpu.vector_store %arg10[%c32_36, %c64_37], %46 {strides = array<i32>} : memref<1248x128xf32, #tpu.memory_space<vmem>>, vector<32x64xf32>,
    %c0_38 = arith.constant 0 : index
    %c2 = arith.constant 2 : index
    %48 = vector.load %arg9[%c0_38, %c2] : memref<32x204xf32, #tpu.memory_space<vmem>>, vector<32x64xf32>
    %c64_39 = arith.constant 64 : index
    %c0_40 = arith.constant 0 : index
    %49 = vector.load %arg10[%c64_39, %c0_40] : memref<1248x128xf32, #tpu.memory_space<vmem>>, vector<32x64xf32>
    tpu.vector_store %arg10[%c64_39, %c0_40], %48 {strides = array<i32>} : memref<1248x128xf32, #tpu.memory_space<vmem>>, vector<32x64xf32>,
    %c0_41 = arith.constant 0 : index
    %c104 = arith.constant 104 : index
    %50 = vector.load %arg9[%c0_41, %c104] : memref<32x204xf32, #tpu.memory_space<vmem>>, vector<32x64xf32>
    %c64_42 = arith.constant 64 : index
    %c64_43 = arith.constant 64 : index
    %51 = vector.load %arg10[%c64_42, %c64_43] : memref<1248x128xf32, #tpu.memory_space<vmem>>, vector<32x64xf32>
    tpu.vector_store %arg10[%c64_42, %c64_43], %50 {strides = array<i32>} : memref<1248x128xf32, #tpu.memory_space<vmem>>, vector<32x64xf32>,
    %c0_44 = arith.constant 0 : index
    %c3 = arith.constant 3 : index
    %52 = vector.load %arg9[%c0_44, %c3] : memref<32x204xf32, #tpu.memory_space<vmem>>, vector<32x64xf32>
    %c96_45 = arith.constant 96 : index
    %c0_46 = arith.constant 0 : index
    %53 = vector.load %arg10[%c96_45, %c0_46] : memref<1248x128xf32, #tpu.memory_space<vmem>>, vector<32x64xf32>
    tpu.vector_store %arg10[%c96_45, %c0_46], %52 {strides = array<i32>} : memref<1248x128xf32, #tpu.memory_space<vmem>>, vector<32x64xf32>,
    %c0_47 = arith.constant 0 : index
    %c105 = arith.constant 105 : index
    %54 = vector.load %arg9[%c0_47, %c105] : memref<32x204xf32, #tpu.memory_space<vmem>>, vector<32x64xf32>
    %c96_48 = arith.constant 96 : index
    %c64_49 = arith.constant 64 : index
    %55 = vector.load %arg10[%c96_48, %c64_49] : memref<1248x128xf32, #tpu.memory_space<vmem>>, vector<32x64xf32>
    tpu.vector_store %arg10[%c96_48, %c64_49], %54 {strides = array<i32>} : memref<1248x128xf32, #tpu.memory_space<vmem>>, vector<32x64xf32>,
    %c0_50 = arith.constant 0 : index
    %c4 = arith.constant 4 : index
    %56 = vector.load %arg9[%c0_50, %c4] : memref<32x204xf32, #tpu.memory_space<vmem>>, vector<32x64xf32>
    %c128_51 = arith.constant 128 : index
    %c0_52 = arith.constant 0 : index
    %57 = vector.load %arg10[%c128_51, %c0_52] : memref<1248x128xf32, #tpu.memory_space<vmem>>, vector<32x64xf32>
    tpu.vector_store %arg10[%c128_51, %c0_52], %56 {strides = array<i32>} : memref<1248x128xf32, #tpu.memory_space<vmem>>, vector<32x64xf32>,
    %c0_53 = arith.constant 0 : index
    %c106 = arith.constant 106 : index
    %58 = vector.load %arg9[%c0_53, %c106] : memref<32x204xf32, #tpu.memory_space<vmem>>, vector<32x64xf32>
    %c128_54 = arith.constant 128 : index
    %c64_55 = arith.constant 64 : index
    %59 = vector.load %arg10[%c128_54, %c64_55] : memref<1248x128xf32, #tpu.memory_space<vmem>>, vector<32x64xf32>
    tpu.vector_store %arg10[%c128_54, %c64_55], %58 {strides = array<i32>} : memref<1248x128xf32, #tpu.memory_space<vmem>>, vector<32x64xf32>,
    %c0_56 = arith.constant 0 : index
    %c5 = arith.constant 5 : index
    %60 = vector.load %arg9[%c0_56, %c5] : memref<32x204xf32, #tpu.memory_space<vmem>>, vector<32x64xf32>
    %c160 = arith.constant 160 : index
    %c0_57 = arith.constant 0 : index
    %61 = vector.load %arg10[%c160, %c0_57] : memref<1248x128xf32, #tpu.memory_space<vmem>>, vector<32x64xf32>
    tpu.vector_store %arg10[%c160, %c0_57], %60 {strides = array<i32>} : memref<1248x128xf32, #tpu.memory_space<vmem>>, vector<32x64xf32>,
    %c0_58 = arith.constant 0 : index
    %c107 = arith.constant 107 : index
    %62 = vector.load %arg9[%c0_58, %c107] : memref<32x204xf32, #tpu.memory_space<vmem>>, vector<32x64xf32>
    %c160_59 = arith.constant 160 : index
    %c64_60 = arith.constant 64 : index
    %63 = vector.load %arg10[%c160_59, %c64_60] : memref<1248x128xf32, #tpu.memory_space<vmem>>, vector<32x64xf32>
    tpu.vector_store %arg10[%c160_59, %c64_60], %62 {strides = array<i32>} : memref<1248x128xf32, #tpu.memory_space<vmem>>, vector<32x64xf32>,
    %c0_61 = arith.constant 0 : index
    %c6 = arith.constant 6 : index
    %64 = vector.load %arg9[%c0_61, %c6] : memref<32x204xf32, #tpu.memory_space<vmem>>, vector<32x64xf32>
    %c192_62 = arith.constant 192 : index
    %c0_63 = arith.constant 0 : index
    %65 = vector.load %arg10[%c192_62, %c0_63] : memref<1248x128xf32, #tpu.memory_space<vmem>>, vector<32x64xf32>
    tpu.vector_store %arg10[%c192_62, %c0_63], %64 {strides = array<i32>} : memref<1248x128xf32, #tpu.memory_space<vmem>>, vector<32x64xf32>,
    %c0_64 = arith.constant 0 : index
    %c108 = arith.constant 108 : index
    %66 = vector.load %arg9[%c0_64, %c108] : memref<32x204xf32, #tpu.memory_space<vmem>>, vector<32x64xf32>
    %c192_65 = arith.constant 192 : index
    %c64_66 = arith.constant 64 : index
    %67 = vector.load %arg10[%c192_65, %c64_66] : memref<1248x128xf32, #tpu.memory_space<vmem>>, vector<32x64xf32>
    tpu.vector_store %arg10[%c192_65, %c64_66], %66 {strides = array<i32>} : memref<1248x128xf32, #tpu.memory_space<vmem>>, vector<32x64xf32>,
    %c0_67 = arith.constant 0 : index
    %c7 = arith.constant 7 : index
    %68 = vector.load %arg9[%c0_67, %c7] : memref<32x204xf32, #tpu.memory_space<vmem>>, vector<32x64xf32>
    %c224 = arith.constant 224 : index
    %c0_68 = arith.constant 0 : index
    %69 = vector.load %arg10[%c224, %c0_68] : memref<1248x128xf32, #tpu.memory_space<vmem>>, vector<32x64xf32>
    tpu.vector_store %arg10[%c224, %c0_68], %68 {strides = array<i32>} : memref<1248x128xf32, #tpu.memory_space<vmem>>, vector<32x64xf32>,
    %c0_69 = arith.constant 0 : index
    %c109 = arith.constant 109 : index
    %70 = vector.load %arg9[%c0_69, %c109] : memref<32x204xf32, #tpu.memory_space<vmem>>, vector<32x64xf32>
    %c224_70 = arith.constant 224 : index
    %c64_71 = arith.constant 64 : index
    %71 = vector.load %arg10[%c224_70, %c64_71] : memref<1248x128xf32, #tpu.memory_space<vmem>>, vector<32x64xf32>
    tpu.vector_store %arg10[%c224_70, %c64_71], %70 {strides = array<i32>} : memref<1248x128xf32, #tpu.memory_space<vmem>>, vector<32x64xf32>,
    %c0_72 = arith.constant 0 : index
    %c8 = arith.constant 8 : index
    %72 = vector.load %arg9[%c0_72, %c8] : memref<32x204xf32, #tpu.memory_space<vmem>>, vector<32x64xf32>
    %c256 = arith.constant 256 : index
    %c0_73 = arith.constant 0 : index
    %73 = vector.load %arg10[%c256, %c0_73] : memref<1248x128xf32, #tpu.memory_space<vmem>>, vector<32x64xf32>
    tpu.vector_store %arg10[%c256, %c0_73], %72 {strides = array<i32>} : memref<1248x128xf32, #tpu.memory_space<vmem>>, vector<32x64xf32>,
    %c0_74 = arith.constant 0 : index
    %c110 = arith.constant 110 : index
    %74 = vector.load %arg9[%c0_74, %c110] : memref<32x204xf32, #tpu.memory_space<vmem>>, vector<32x64xf32>
    %c256_75 = arith.constant 256 : index
    %c64_76 = arith.constant 64 : index
    %75 = vector.load %arg10[%c256_75, %c64_76] : memref<1248x128xf32, #tpu.memory_space<vmem>>, vector<32x64xf32>
    tpu.vector_store %arg10[%c256_75, %c64_76], %74 {strides = array<i32>} : memref<1248x128xf32, #tpu.memory_space<vmem>>, vector<32x64xf32>,
    %c0_77 = arith.constant 0 : index
    %c9 = arith.constant 9 : index
    %76 = vector.load %arg9[%c0_77, %c9] : memref<32x204xf32, #tpu.memory_space<vmem>>, vector<32x64xf32>
    %c288 = arith.constant 288 : index
    %c0_78 = arith.constant 0 : index
    %77 = vector.load %arg10[%c288, %c0_78] : memref<1248x128xf32, #tpu.memory_space<vmem>>, vector<32x64xf32>
    tpu.vector_store %arg10[%c288, %c0_78], %76 {strides = array<i32>} : memref<1248x128xf32, #tpu.memory_space<vmem>>, vector<32x64xf32>,
    %c0_79 = arith.constant 0 : index
    %c111 = arith.constant 111 : index
    %78 = vector.load %arg9[%c0_79, %c111] : memref<32x204xf32, #tpu.memory_space<vmem>>, vector<32x64xf32>
    %c288_80 = arith.constant 288 : index
    %c64_81 = arith.constant 64 : index
    %79 = vector.load %arg10[%c288_80, %c64_81] : memref<1248x128xf32, #tpu.memory_space<vmem>>, vector<32x64xf32>
    tpu.vector_store %arg10[%c288_80, %c64_81], %78 {strides = array<i32>} : memref<1248x128xf32, #tpu.memory_space<vmem>>, vector<32x64xf32>,
    %c0_82 = arith.constant 0 : index
    %c10 = arith.constant 10 : index
    %80 = vector.load %arg9[%c0_82, %c10] : memref<32x204xf32, #tpu.memory_space<vmem>>, vector<32x64xf32>
    %c320 = arith.constant 320 : index
    %c0_83 = arith.constant 0 : index
    %81 = vector.load %arg10[%c320, %c0_83] : memref<1248x128xf32, #tpu.memory_space<vmem>>, vector<32x64xf32>
    tpu.vector_store %arg10[%c320, %c0_83], %80 {strides = array<i32>} : memref<1248x128xf32, #tpu.memory_space<vmem>>, vector<32x64xf32>,
    %c0_84 = arith.constant 0 : index
    %c112 = arith.constant 112 : index
    %82 = vector.load %arg9[%c0_84, %c112] : memref<32x204xf32, #tpu.memory_space<vmem>>, vector<32x64xf32>
    %c320_85 = arith.constant 320 : index
    %c64_86 = arith.constant 64 : index
    %83 = vector.load %arg10[%c320_85, %c64_86] : memref<1248x128xf32, #tpu.memory_space<vmem>>, vector<32x64xf32>
    tpu.vector_store %arg10[%c320_85, %c64_86], %82 {strides = array<i32>} : memref<1248x128xf32, #tpu.memory_space<vmem>>, vector<32x64xf32>,
    %c0_87 = arith.constant 0 : index
    %c11 = arith.constant 11 : index
    %84 = vector.load %arg9[%c0_87, %c11] : memref<32x204xf32, #tpu.memory_space<vmem>>, vector<32x64xf32>
    %c352 = arith.constant 352 : index
    %c0_88 = arith.constant 0 : index
    %85 = vector.load %arg10[%c352, %c0_88] : memref<1248x128xf32, #tpu.memory_space<vmem>>, vector<32x64xf32>
    tpu.vector_store %arg10[%c352, %c0_88], %84 {strides = array<i32>} : memref<1248x128xf32, #tpu.memory_space<vmem>>, vector<32x64xf32>,
    %c0_89 = arith.constant 0 : index
    %c113 = arith.constant 113 : index
    %86 = vector.load %arg9[%c0_89, %c113] : memref<32x204xf32, #tpu.memory_space<vmem>>, vector<32x64xf32>
    %c352_90 = arith.constant 352 : index
    %c64_91 = arith.constant 64 : index
    %87 = vector.load %arg10[%c352_90, %c64_91] : memref<1248x128xf32, #tpu.memory_space<vmem>>, vector<32x64xf32>
    tpu.vector_store %arg10[%c352_90, %c64_91], %86 {strides = array<i32>} : memref<1248x128xf32, #tpu.memory_space<vmem>>, vector<32x64xf32>,
    %c0_92 = arith.constant 0 : index
    %c12 = arith.constant 12 : index
    %88 = vector.load %arg9[%c0_92, %c12] : memref<32x204xf32, #tpu.memory_space<vmem>>, vector<32x64xf32>
    %c384 = arith.constant 384 : index
    %c0_93 = arith.constant 0 : index
    %89 = vector.load %arg10[%c384, %c0_93] : memref<1248x128xf32, #tpu.memory_space<vmem>>, vector<32x64xf32>
    tpu.vector_store %arg10[%c384, %c0_93], %88 {strides = array<i32>} : memref<1248x128xf32, #tpu.memory_space<vmem>>, vector<32x64xf32>,
    %c0_94 = arith.constant 0 : index
    %c114 = arith.constant 114 : index
    %90 = vector.load %arg9[%c0_94, %c114] : memref<32x204xf32, #tpu.memory_space<vmem>>, vector<32x64xf32>
    %c384_95 = arith.constant 384 : index
    %c64_96 = arith.constant 64 : index
    %91 = vector.load %arg10[%c384_95, %c64_96] : memref<1248x128xf32, #tpu.memory_space<vmem>>, vector<32x64xf32>
    tpu.vector_store %arg10[%c384_95, %c64_96], %90 {strides = array<i32>} : memref<1248x128xf32, #tpu.memory_space<vmem>>, vector<32x64xf32>,
    %c0_97 = arith.constant 0 : index
    %c13 = arith.constant 13 : index
    %92 = vector.load %arg9[%c0_97, %c13] : memref<32x204xf32, #tpu.memory_space<vmem>>, vector<32x64xf32>
    %c416 = arith.constant 416 : index
    %c0_98 = arith.constant 0 : index
    %93 = vector.load %arg10[%c416, %c0_98] : memref<1248x128xf32, #tpu.memory_space<vmem>>, vector<32x64xf32>
    tpu.vector_store %arg10[%c416, %c0_98], %92 {strides = array<i32>} : memref<1248x128xf32, #tpu.memory_space<vmem>>, vector<32x64xf32>,
    %c0_99 = arith.constant 0 : index
    %c115 = arith.constant 115 : index
    %94 = vector.load %arg9[%c0_99, %c115] : memref<32x204xf32, #tpu.memory_space<vmem>>, vector<32x64xf32>
    %c416_100 = arith.constant 416 : index
    %c64_101 = arith.constant 64 : index
    %95 = vector.load %arg10[%c416_100, %c64_101] : memref<1248x128xf32, #tpu.memory_space<vmem>>, vector<32x64xf32>
    tpu.vector_store %arg10[%c416_100, %c64_101], %94 {strides = array<i32>} : memref<1248x128xf32, #tpu.memory_space<vmem>>, vector<32x64xf32>,
    %c0_102 = arith.constant 0 : index
    %c14 = arith.constant 14 : index
    %96 = vector.load %arg9[%c0_102, %c14] : memref<32x204xf32, #tpu.memory_space<vmem>>, vector<32x64xf32>
    %c448 = arith.constant 448 : index
    %c0_103 = arith.constant 0 : index
    %97 = vector.load %arg10[%c448, %c0_103] : memref<1248x128xf32, #tpu.memory_space<vmem>>, vector<32x64xf32>
    tpu.vector_store %arg10[%c448, %c0_103], %96 {strides = array<i32>} : memref<1248x128xf32, #tpu.memory_space<vmem>>, vector<32x64xf32>,
    %c0_104 = arith.constant 0 : index
    %c116 = arith.constant 116 : index
    %98 = vector.load %arg9[%c0_104, %c116] : memref<32x204xf32, #tpu.memory_space<vmem>>, vector<32x64xf32>
    %c448_105 = arith.constant 448 : index
    %c64_106 = arith.constant 64 : index
    %99 = vector.load %arg10[%c448_105, %c64_106] : memref<1248x128xf32, #tpu.memory_space<vmem>>, vector<32x64xf32>
    tpu.vector_store %arg10[%c448_105, %c64_106], %98 {strides = array<i32>} : memref<1248x128xf32, #tpu.memory_space<vmem>>, vector<32x64xf32>,
    %c0_107 = arith.constant 0 : index
    %c15 = arith.constant 15 : index
    %100 = vector.load %arg9[%c0_107, %c15] : memref<32x204xf32, #tpu.memory_space<vmem>>, vector<32x64xf32>
    %c480 = arith.constant 480 : index
    %c0_108 = arith.constant 0 : index
    %101 = vector.load %arg10[%c480, %c0_108] : memref<1248x128xf32, #tpu.memory_space<vmem>>, vector<32x64xf32>
    tpu.vector_store %arg10[%c480, %c0_108], %100 {strides = array<i32>} : memref<1248x128xf32, #tpu.memory_space<vmem>>, vector<32x64xf32>,
    %c0_109 = arith.constant 0 : index
    %c117 = arith.constant 117 : index
    %102 = vector.load %arg9[%c0_109, %c117] : memref<32x204xf32, #tpu.memory_space<vmem>>, vector<32x64xf32>
    %c480_110 = arith.constant 480 : index
    %c64_111 = arith.constant 64 : index
    %103 = vector.load %arg10[%c480_110, %c64_111] : memref<1248x128xf32, #tpu.memory_space<vmem>>, vector<32x64xf32>
    tpu.vector_store %arg10[%c480_110, %c64_111], %102 {strides = array<i32>} : memref<1248x128xf32, #tpu.memory_space<vmem>>, vector<32x64xf32>,
    %c0_112 = arith.constant 0 : index
    %c16 = arith.constant 16 : index
    %104 = vector.load %arg9[%c0_112, %c16] : memref<32x204xf32, #tpu.memory_space<vmem>>, vector<32x64xf32>
    %c512 = arith.constant 512 : index
    %c0_113 = arith.constant 0 : index
    %105 = vector.load %arg10[%c512, %c0_113] : memref<1248x128xf32, #tpu.memory_space<vmem>>, vector<32x64xf32>
    tpu.vector_store %arg10[%c512, %c0_113], %104 {strides = array<i32>} : memref<1248x128xf32, #tpu.memory_space<vmem>>, vector<32x64xf32>,
    %c0_114 = arith.constant 0 : index
    %c118 = arith.constant 118 : index
    %106 = vector.load %arg9[%c0_114, %c118] : memref<32x204xf32, #tpu.memory_space<vmem>>, vector<32x64xf32>
    %c512_115 = arith.constant 512 : index
    %c64_116 = arith.constant 64 : index
    %107 = vector.load %arg10[%c512_115, %c64_116] : memref<1248x128xf32, #tpu.memory_space<vmem>>, vector<32x64xf32>
    tpu.vector_store %arg10[%c512_115, %c64_116], %106 {strides = array<i32>} : memref<1248x128xf32, #tpu.memory_space<vmem>>, vector<32x64xf32>,
    %c0_117 = arith.constant 0 : index
    %c17 = arith.constant 17 : index
    %108 = vector.load %arg9[%c0_117, %c17] : memref<32x204xf32, #tpu.memory_space<vmem>>, vector<32x64xf32>
    %c544 = arith.constant 544 : index
    %c0_118 = arith.constant 0 : index
    %109 = vector.load %arg10[%c544, %c0_118] : memref<1248x128xf32, #tpu.memory_space<vmem>>, vector<32x64xf32>
    tpu.vector_store %arg10[%c544, %c0_118], %108 {strides = array<i32>} : memref<1248x128xf32, #tpu.memory_space<vmem>>, vector<32x64xf32>,
    %c0_119 = arith.constant 0 : index
    %c119 = arith.constant 119 : index
    %110 = vector.load %arg9[%c0_119, %c119] : memref<32x204xf32, #tpu.memory_space<vmem>>, vector<32x64xf32>
    %c544_120 = arith.constant 544 : index
    %c64_121 = arith.constant 64 : index
    %111 = vector.load %arg10[%c544_120, %c64_121] : memref<1248x128xf32, #tpu.memory_space<vmem>>, vector<32x64xf32>
    tpu.vector_store %arg10[%c544_120, %c64_121], %110 {strides = array<i32>} : memref<1248x128xf32, #tpu.memory_space<vmem>>, vector<32x64xf32>,
    %c0_122 = arith.constant 0 : index
    %c18 = arith.constant 18 : index
    %112 = vector.load %arg9[%c0_122, %c18] : memref<32x204xf32, #tpu.memory_space<vmem>>, vector<32x64xf32>
    %c576 = arith.constant 576 : index
    %c0_123 = arith.constant 0 : index
    %113 = vector.load %arg10[%c576, %c0_123] : memref<1248x128xf32, #tpu.memory_space<vmem>>, vector<32x64xf32>
    tpu.vector_store %arg10[%c576, %c0_123], %112 {strides = array<i32>} : memref<1248x128xf32, #tpu.memory_space<vmem>>, vector<32x64xf32>,
    %c0_124 = arith.constant 0 : index
    %c120 = arith.constant 120 : index
    %114 = vector.load %arg9[%c0_124, %c120] : memref<32x204xf32, #tpu.memory_space<vmem>>, vector<32x64xf32>
    %c576_125 = arith.constant 576 : index
    %c64_126 = arith.constant 64 : index
    %115 = vector.load %arg10[%c576_125, %c64_126] : memref<1248x128xf32, #tpu.memory_space<vmem>>, vector<32x64xf32>
    tpu.vector_store %arg10[%c576_125, %c64_126], %114 {strides = array<i32>} : memref<1248x128xf32, #tpu.memory_space<vmem>>, vector<32x64xf32>,
    %c0_127 = arith.constant 0 : index
    %c19_128 = arith.constant 19 : index
    %116 = vector.load %arg9[%c0_127, %c19_128] : memref<32x204xf32, #tpu.memory_space<vmem>>, vector<32x64xf32>
    %c608 = arith.constant 608 : index
    %c0_129 = arith.constant 0 : index
    %117 = vector.load %arg10[%c608, %c0_129] : memref<1248x128xf32, #tpu.memory_space<vmem>>, vector<32x64xf32>
    tpu.vector_store %arg10[%c608, %c0_129], %116 {strides = array<i32>} : memref<1248x128xf32, #tpu.memory_space<vmem>>, vector<32x64xf32>,
    %c0_130 = arith.constant 0 : index
    %c121_131 = arith.constant 121 : index
    %118 = vector.load %arg9[%c0_130, %c121_131] : memref<32x204xf32, #tpu.memory_space<vmem>>, vector<32x64xf32>
    %c608_132 = arith.constant 608 : index
    %c64_133 = arith.constant 64 : index
    %119 = vector.load %arg10[%c608_132, %c64_133] : memref<1248x128xf32, #tpu.memory_space<vmem>>, vector<32x64xf32>
    tpu.vector_store %arg10[%c608_132, %c64_133], %118 {strides = array<i32>} : memref<1248x128xf32, #tpu.memory_space<vmem>>, vector<32x64xf32>,
    %c0_134 = arith.constant 0 : index
    %c20 = arith.constant 20 : index
    %120 = vector.load %arg9[%c0_134, %c20] : memref<32x204xf32, #tpu.memory_space<vmem>>, vector<32x64xf32>
    %c640 = arith.constant 640 : index
    %c0_135 = arith.constant 0 : index
    %121 = vector.load %arg10[%c640, %c0_135] : memref<1248x128xf32, #tpu.memory_space<vmem>>, vector<32x64xf32>
    tpu.vector_store %arg10[%c640, %c0_135], %120 {strides = array<i32>} : memref<1248x128xf32, #tpu.memory_space<vmem>>, vector<32x64xf32>,
    %c0_136 = arith.constant 0 : index
    %c122 = arith.constant 122 : index
    %122 = vector.load %arg9[%c0_136, %c122] : memref<32x204xf32, #tpu.memory_space<vmem>>, vector<32x64xf32>
    %c640_137 = arith.constant 640 : index
    %c64_138 = arith.constant 64 : index
    %123 = vector.load %arg10[%c640_137, %c64_138] : memref<1248x128xf32, #tpu.memory_space<vmem>>, vector<32x64xf32>
    tpu.vector_store %arg10[%c640_137, %c64_138], %122 {strides = array<i32>} : memref<1248x128xf32, #tpu.memory_space<vmem>>, vector<32x64xf32>,
    %c0_139 = arith.constant 0 : index
    %c21 = arith.constant 21 : index
    %124 = vector.load %arg9[%c0_139, %c21] : memref<32x204xf32, #tpu.memory_space<vmem>>, vector<32x64xf32>
    %c672 = arith.constant 672 : index
    %c0_140 = arith.constant 0 : index
    %125 = vector.load %arg10[%c672, %c0_140] : memref<1248x128xf32, #tpu.memory_space<vmem>>, vector<32x64xf32>
    tpu.vector_store %arg10[%c672, %c0_140], %124 {strides = array<i32>} : memref<1248x128xf32, #tpu.memory_space<vmem>>, vector<32x64xf32>,
    %c0_141 = arith.constant 0 : index
    %c123 = arith.constant 123 : index
    %126 = vector.load %arg9[%c0_141, %c123] : memref<32x204xf32, #tpu.memory_space<vmem>>, vector<32x64xf32>
    %c672_142 = arith.constant 672 : index
    %c64_143 = arith.constant 64 : index
    %127 = vector.load %arg10[%c672_142, %c64_143] : memref<1248x128xf32, #tpu.memory_space<vmem>>, vector<32x64xf32>
    tpu.vector_store %arg10[%c672_142, %c64_143], %126 {strides = array<i32>} : memref<1248x128xf32, #tpu.memory_space<vmem>>, vector<32x64xf32>,
    %c0_144 = arith.constant 0 : index
    %c22 = arith.constant 22 : index
    %128 = vector.load %arg9[%c0_144, %c22] : memref<32x204xf32, #tpu.memory_space<vmem>>, vector<32x64xf32>
    %c704 = arith.constant 704 : index
    %c0_145 = arith.constant 0 : index
    %129 = vector.load %arg10[%c704, %c0_145] : memref<1248x128xf32, #tpu.memory_space<vmem>>, vector<32x64xf32>
    tpu.vector_store %arg10[%c704, %c0_145], %128 {strides = array<i32>} : memref<1248x128xf32, #tpu.memory_space<vmem>>, vector<32x64xf32>,
    %c0_146 = arith.constant 0 : index
    %c124 = arith.constant 124 : index
    %130 = vector.load %arg9[%c0_146, %c124] : memref<32x204xf32, #tpu.memory_space<vmem>>, vector<32x64xf32>
    %c704_147 = arith.constant 704 : index
    %c64_148 = arith.constant 64 : index
    %131 = vector.load %arg10[%c704_147, %c64_148] : memref<1248x128xf32, #tpu.memory_space<vmem>>, vector<32x64xf32>
    tpu.vector_store %arg10[%c704_147, %c64_148], %130 {strides = array<i32>} : memref<1248x128xf32, #tpu.memory_space<vmem>>, vector<32x64xf32>,
    %c0_149 = arith.constant 0 : index
    %c23 = arith.constant 23 : index
    %132 = vector.load %arg9[%c0_149, %c23] : memref<32x204xf32, #tpu.memory_space<vmem>>, vector<32x64xf32>
    %c736 = arith.constant 736 : index
    %c0_150 = arith.constant 0 : index
    %133 = vector.load %arg10[%c736, %c0_150] : memref<1248x128xf32, #tpu.memory_space<vmem>>, vector<32x64xf32>
    tpu.vector_store %arg10[%c736, %c0_150], %132 {strides = array<i32>} : memref<1248x128xf32, #tpu.memory_space<vmem>>, vector<32x64xf32>,
    %c0_151 = arith.constant 0 : index
    %c125 = arith.constant 125 : index
    %134 = vector.load %arg9[%c0_151, %c125] : memref<32x204xf32, #tpu.memory_space<vmem>>, vector<32x64xf32>
    %c736_152 = arith.constant 736 : index
    %c64_153 = arith.constant 64 : index
    %135 = vector.load %arg10[%c736_152, %c64_153] : memref<1248x128xf32, #tpu.memory_space<vmem>>, vector<32x64xf32>
    tpu.vector_store %arg10[%c736_152, %c64_153], %134 {strides = array<i32>} : memref<1248x128xf32, #tpu.memory_space<vmem>>, vector<32x64xf32>,
    %c0_154 = arith.constant 0 : index
    %c24 = arith.constant 24 : index
    %136 = vector.load %arg9[%c0_154, %c24] : memref<32x204xf32, #tpu.memory_space<vmem>>, vector<32x64xf32>
    %c768 = arith.constant 768 : index
    %c0_155 = arith.constant 0 : index
    %137 = vector.load %arg10[%c768, %c0_155] : memref<1248x128xf32, #tpu.memory_space<vmem>>, vector<32x64xf32>
    tpu.vector_store %arg10[%c768, %c0_155], %136 {strides = array<i32>} : memref<1248x128xf32, #tpu.memory_space<vmem>>, vector<32x64xf32>,
    %c0_156 = arith.constant 0 : index
    %c126 = arith.constant 126 : index
    %138 = vector.load %arg9[%c0_156, %c126] : memref<32x204xf32, #tpu.memory_space<vmem>>, vector<32x64xf32>
    %c768_157 = arith.constant 768 : index
    %c64_158 = arith.constant 64 : index
    %139 = vector.load %arg10[%c768_157, %c64_158] : memref<1248x128xf32, #tpu.memory_space<vmem>>, vector<32x64xf32>
    tpu.vector_store %arg10[%c768_157, %c64_158], %138 {strides = array<i32>} : memref<1248x128xf32, #tpu.memory_space<vmem>>, vector<32x64xf32>,
    %c0_159 = arith.constant 0 : index
    %c25 = arith.constant 25 : index
    %140 = vector.load %arg9[%c0_159, %c25] : memref<32x204xf32, #tpu.memory_space<vmem>>, vector<32x64xf32>
    %c800 = arith.constant 800 : index
    %c0_160 = arith.constant 0 : index
    %141 = vector.load %arg10[%c800, %c0_160] : memref<1248x128xf32, #tpu.memory_space<vmem>>, vector<32x64xf32>
    tpu.vector_store %arg10[%c800, %c0_160], %140 {strides = array<i32>} : memref<1248x128xf32, #tpu.memory_space<vmem>>, vector<32x64xf32>,
    %c0_161 = arith.constant 0 : index
    %c127 = arith.constant 127 : index
    %142 = vector.load %arg9[%c0_161, %c127] : memref<32x204xf32, #tpu.memory_space<vmem>>, vector<32x64xf32>
    %c800_162 = arith.constant 800 : index
    %c64_163 = arith.constant 64 : index
    %143 = vector.load %arg10[%c800_162, %c64_163] : memref<1248x128xf32, #tpu.memory_space<vmem>>, vector<32x64xf32>
    tpu.vector_store %arg10[%c800_162, %c64_163], %142 {strides = array<i32>} : memref<1248x128xf32, #tpu.memory_space<vmem>>, vector<32x64xf32>,
    %c0_164 = arith.constant 0 : index
    %c26 = arith.constant 26 : index
    %144 = vector.load %arg9[%c0_164, %c26] : memref<32x204xf32, #tpu.memory_space<vmem>>, vector<32x64xf32>
    %c832 = arith.constant 832 : index
    %c0_165 = arith.constant 0 : index
    %145 = vector.load %arg10[%c832, %c0_165] : memref<1248x128xf32, #tpu.memory_space<vmem>>, vector<32x64xf32>
    tpu.vector_store %arg10[%c832, %c0_165], %144 {strides = array<i32>} : memref<1248x128xf32, #tpu.memory_space<vmem>>, vector<32x64xf32>,
    %c0_166 = arith.constant 0 : index
    %c128_167 = arith.constant 128 : index
    %146 = vector.load %arg9[%c0_166, %c128_167] : memref<32x204xf32, #tpu.memory_space<vmem>>, vector<32x64xf32>
    %c832_168 = arith.constant 832 : index
    %c64_169 = arith.constant 64 : index
    %147 = vector.load %arg10[%c832_168, %c64_169] : memref<1248x128xf32, #tpu.memory_space<vmem>>, vector<32x64xf32>
    tpu.vector_store %arg10[%c832_168, %c64_169], %146 {strides = array<i32>} : memref<1248x128xf32, #tpu.memory_space<vmem>>, vector<32x64xf32>,
    %c0_170 = arith.constant 0 : index
    %c27 = arith.constant 27 : index
    %148 = vector.load %arg9[%c0_170, %c27] : memref<32x204xf32, #tpu.memory_space<vmem>>, vector<32x64xf32>
    %c864 = arith.constant 864 : index
    %c0_171 = arith.constant 0 : index
    %149 = vector.load %arg10[%c864, %c0_171] : memref<1248x128xf32, #tpu.memory_space<vmem>>, vector<32x64xf32>
    tpu.vector_store %arg10[%c864, %c0_171], %148 {strides = array<i32>} : memref<1248x128xf32, #tpu.memory_space<vmem>>, vector<32x64xf32>,
    %c0_172 = arith.constant 0 : index
    %c129 = arith.constant 129 : index
    %150 = vector.load %arg9[%c0_172, %c129] : memref<32x204xf32, #tpu.memory_space<vmem>>, vector<32x64xf32>
    %c864_173 = arith.constant 864 : index
    %c64_174 = arith.constant 64 : index
    %151 = vector.load %arg10[%c864_173, %c64_174] : memref<1248x128xf32, #tpu.memory_space<vmem>>, vector<32x64xf32>
    tpu.vector_store %arg10[%c864_173, %c64_174], %150 {strides = array<i32>} : memref<1248x128xf32, #tpu.memory_space<vmem>>, vector<32x64xf32>,
    %c0_175 = arith.constant 0 : index
    %c28 = arith.constant 28 : index
    %152 = vector.load %arg9[%c0_175, %c28] : memref<32x204xf32, #tpu.memory_space<vmem>>, vector<32x64xf32>
    %c896 = arith.constant 896 : index
    %c0_176 = arith.constant 0 : index
    %153 = vector.load %arg10[%c896, %c0_176] : memref<1248x128xf32, #tpu.memory_space<vmem>>, vector<32x64xf32>
    tpu.vector_store %arg10[%c896, %c0_176], %152 {strides = array<i32>} : memref<1248x128xf32, #tpu.memory_space<vmem>>, vector<32x64xf32>,
    %c0_177 = arith.constant 0 : index
    %c130 = arith.constant 130 : index
    %154 = vector.load %arg9[%c0_177, %c130] : memref<32x204xf32, #tpu.memory_space<vmem>>, vector<32x64xf32>
    %c896_178 = arith.constant 896 : index
    %c64_179 = arith.constant 64 : index
    %155 = vector.load %arg10[%c896_178, %c64_179] : memref<1248x128xf32, #tpu.memory_space<vmem>>, vector<32x64xf32>
    tpu.vector_store %arg10[%c896_178, %c64_179], %154 {strides = array<i32>} : memref<1248x128xf32, #tpu.memory_space<vmem>>, vector<32x64xf32>,
    %c0_180 = arith.constant 0 : index
    %c29 = arith.constant 29 : index
    %156 = vector.load %arg9[%c0_180, %c29] : memref<32x204xf32, #tpu.memory_space<vmem>>, vector<32x64xf32>
    %c928 = arith.constant 928 : index
    %c0_181 = arith.constant 0 : index
    %157 = vector.load %arg10[%c928, %c0_181] : memref<1248x128xf32, #tpu.memory_space<vmem>>, vector<32x64xf32>
    tpu.vector_store %arg10[%c928, %c0_181], %156 {strides = array<i32>} : memref<1248x128xf32, #tpu.memory_space<vmem>>, vector<32x64xf32>,
    %c0_182 = arith.constant 0 : index
    %c131 = arith.constant 131 : index
    %158 = vector.load %arg9[%c0_182, %c131] : memref<32x204xf32, #tpu.memory_space<vmem>>, vector<32x64xf32>
    %c928_183 = arith.constant 928 : index
    %c64_184 = arith.constant 64 : index
    %159 = vector.load %arg10[%c928_183, %c64_184] : memref<1248x128xf32, #tpu.memory_space<vmem>>, vector<32x64xf32>
    tpu.vector_store %arg10[%c928_183, %c64_184], %158 {strides = array<i32>} : memref<1248x128xf32, #tpu.memory_space<vmem>>, vector<32x64xf32>,
    %c0_185 = arith.constant 0 : index
    %c30 = arith.constant 30 : index
    %160 = vector.load %arg9[%c0_185, %c30] : memref<32x204xf32, #tpu.memory_space<vmem>>, vector<32x64xf32>
    %c960 = arith.constant 960 : index
    %c0_186 = arith.constant 0 : index
    %161 = vector.load %arg10[%c960, %c0_186] : memref<1248x128xf32, #tpu.memory_space<vmem>>, vector<32x64xf32>
    tpu.vector_store %arg10[%c960, %c0_186], %160 {strides = array<i32>} : memref<1248x128xf32, #tpu.memory_space<vmem>>, vector<32x64xf32>,
    %c0_187 = arith.constant 0 : index
    %c132 = arith.constant 132 : index
    %162 = vector.load %arg9[%c0_187, %c132] : memref<32x204xf32, #tpu.memory_space<vmem>>, vector<32x64xf32>
    %c960_188 = arith.constant 960 : index
    %c64_189 = arith.constant 64 : index
    %163 = vector.load %arg10[%c960_188, %c64_189] : memref<1248x128xf32, #tpu.memory_space<vmem>>, vector<32x64xf32>
    tpu.vector_store %arg10[%c960_188, %c64_189], %162 {strides = array<i32>} : memref<1248x128xf32, #tpu.memory_space<vmem>>, vector<32x64xf32>,
    %c0_190 = arith.constant 0 : index
    %c31 = arith.constant 31 : index
    %164 = vector.load %arg9[%c0_190, %c31] : memref<32x204xf32, #tpu.memory_space<vmem>>, vector<32x64xf32>
    %c992 = arith.constant 992 : index
    %c0_191 = arith.constant 0 : index
    %165 = vector.load %arg10[%c992, %c0_191] : memref<1248x128xf32, #tpu.memory_space<vmem>>, vector<32x64xf32>
    tpu.vector_store %arg10[%c992, %c0_191], %164 {strides = array<i32>} : memref<1248x128xf32, #tpu.memory_space<vmem>>, vector<32x64xf32>,
    %c0_192 = arith.constant 0 : index
    %c133 = arith.constant 133 : index
    %166 = vector.load %arg9[%c0_192, %c133] : memref<32x204xf32, #tpu.memory_space<vmem>>, vector<32x64xf32>
    %c992_193 = arith.constant 992 : index
    %c64_194 = arith.constant 64 : index
    %167 = vector.load %arg10[%c992_193, %c64_194] : memref<1248x128xf32, #tpu.memory_space<vmem>>, vector<32x64xf32>
    tpu.vector_store %arg10[%c992_193, %c64_194], %166 {strides = array<i32>} : memref<1248x128xf32, #tpu.memory_space<vmem>>, vector<32x64xf32>,
    %c0_195 = arith.constant 0 : index
    %c32_196 = arith.constant 32 : index
    %168 = vector.load %arg9[%c0_195, %c32_196] : memref<32x204xf32, #tpu.memory_space<vmem>>, vector<32x64xf32>
    %c1024 = arith.constant 1024 : index
    %c0_197 = arith.constant 0 : index
    %169 = vector.load %arg10[%c1024, %c0_197] : memref<1248x128xf32, #tpu.memory_space<vmem>>, vector<32x64xf32>
    tpu.vector_store %arg10[%c1024, %c0_197], %168 {strides = array<i32>} : memref<1248x128xf32, #tpu.memory_space<vmem>>, vector<32x64xf32>,
    %c0_198 = arith.constant 0 : index
    %c134 = arith.constant 134 : index
    %170 = vector.load %arg9[%c0_198, %c134] : memref<32x204xf32, #tpu.memory_space<vmem>>, vector<32x64xf32>
    %c1024_199 = arith.constant 1024 : index
    %c64_200 = arith.constant 64 : index
    %171 = vector.load %arg10[%c1024_199, %c64_200] : memref<1248x128xf32, #tpu.memory_space<vmem>>, vector<32x64xf32>
    tpu.vector_store %arg10[%c1024_199, %c64_200], %170 {strides = array<i32>} : memref<1248x128xf32, #tpu.memory_space<vmem>>, vector<32x64xf32>,
    %c0_201 = arith.constant 0 : index
    %c33 = arith.constant 33 : index
    %172 = vector.load %arg9[%c0_201, %c33] : memref<32x204xf32, #tpu.memory_space<vmem>>, vector<32x64xf32>
    %c1056 = arith.constant 1056 : index
    %c0_202 = arith.constant 0 : index
    %173 = vector.load %arg10[%c1056, %c0_202] : memref<1248x128xf32, #tpu.memory_space<vmem>>, vector<32x64xf32>
    tpu.vector_store %arg10[%c1056, %c0_202], %172 {strides = array<i32>} : memref<1248x128xf32, #tpu.memory_space<vmem>>, vector<32x64xf32>,
    %c0_203 = arith.constant 0 : index
    %c135 = arith.constant 135 : index
    %174 = vector.load %arg9[%c0_203, %c135] : memref<32x204xf32, #tpu.memory_space<vmem>>, vector<32x64xf32>
    %c1056_204 = arith.constant 1056 : index
    %c64_205 = arith.constant 64 : index
    %175 = vector.load %arg10[%c1056_204, %c64_205] : memref<1248x128xf32, #tpu.memory_space<vmem>>, vector<32x64xf32>
    tpu.vector_store %arg10[%c1056_204, %c64_205], %174 {strides = array<i32>} : memref<1248x128xf32, #tpu.memory_space<vmem>>, vector<32x64xf32>,
    %c0_206 = arith.constant 0 : index
    %c34 = arith.constant 34 : index
    %176 = vector.load %arg9[%c0_206, %c34] : memref<32x204xf32, #tpu.memory_space<vmem>>, vector<32x64xf32>
    %c1088 = arith.constant 1088 : index
    %c0_207 = arith.constant 0 : index
    %177 = vector.load %arg10[%c1088, %c0_207] : memref<1248x128xf32, #tpu.memory_space<vmem>>, vector<32x64xf32>
    tpu.vector_store %arg10[%c1088, %c0_207], %176 {strides = array<i32>} : memref<1248x128xf32, #tpu.memory_space<vmem>>, vector<32x64xf32>,
    %c0_208 = arith.constant 0 : index
    %c136 = arith.constant 136 : index
    %178 = vector.load %arg9[%c0_208, %c136] : memref<32x204xf32, #tpu.memory_space<vmem>>, vector<32x64xf32>
    %c1088_209 = arith.constant 1088 : index
    %c64_210 = arith.constant 64 : index
    %179 = vector.load %arg10[%c1088_209, %c64_210] : memref<1248x128xf32, #tpu.memory_space<vmem>>, vector<32x64xf32>
    tpu.vector_store %arg10[%c1088_209, %c64_210], %178 {strides = array<i32>} : memref<1248x128xf32, #tpu.memory_space<vmem>>, vector<32x64xf32>,
    %c0_211 = arith.constant 0 : index
    %c35 = arith.constant 35 : index
    %180 = vector.load %arg9[%c0_211, %c35] : memref<32x204xf32, #tpu.memory_space<vmem>>, vector<32x64xf32>
    %c1120 = arith.constant 1120 : index
    %c0_212 = arith.constant 0 : index
    %181 = vector.load %arg10[%c1120, %c0_212] : memref<1248x128xf32, #tpu.memory_space<vmem>>, vector<32x64xf32>
    tpu.vector_store %arg10[%c1120, %c0_212], %180 {strides = array<i32>} : memref<1248x128xf32, #tpu.memory_space<vmem>>, vector<32x64xf32>,
    %c0_213 = arith.constant 0 : index
    %c137 = arith.constant 137 : index
    %182 = vector.load %arg9[%c0_213, %c137] : memref<32x204xf32, #tpu.memory_space<vmem>>, vector<32x64xf32>
    %c1120_214 = arith.constant 1120 : index
    %c64_215 = arith.constant 64 : index
    %183 = vector.load %arg10[%c1120_214, %c64_215] : memref<1248x128xf32, #tpu.memory_space<vmem>>, vector<32x64xf32>
    tpu.vector_store %arg10[%c1120_214, %c64_215], %182 {strides = array<i32>} : memref<1248x128xf32, #tpu.memory_space<vmem>>, vector<32x64xf32>,
    %c0_216 = arith.constant 0 : index
    %c36 = arith.constant 36 : index
    %184 = vector.load %arg9[%c0_216, %c36] : memref<32x204xf32, #tpu.memory_space<vmem>>, vector<32x64xf32>
    %c1152 = arith.constant 1152 : index
    %c0_217 = arith.constant 0 : index
    %185 = vector.load %arg10[%c1152, %c0_217] : memref<1248x128xf32, #tpu.memory_space<vmem>>, vector<32x64xf32>
    tpu.vector_store %arg10[%c1152, %c0_217], %184 {strides = array<i32>} : memref<1248x128xf32, #tpu.memory_space<vmem>>, vector<32x64xf32>,
    %c0_218 = arith.constant 0 : index
    %c138 = arith.constant 138 : index
    %186 = vector.load %arg9[%c0_218, %c138] : memref<32x204xf32, #tpu.memory_space<vmem>>, vector<32x64xf32>
    %c1152_219 = arith.constant 1152 : index
    %c64_220 = arith.constant 64 : index
    %187 = vector.load %arg10[%c1152_219, %c64_220] : memref<1248x128xf32, #tpu.memory_space<vmem>>, vector<32x64xf32>
    tpu.vector_store %arg10[%c1152_219, %c64_220], %186 {strides = array<i32>} : memref<1248x128xf32, #tpu.memory_space<vmem>>, vector<32x64xf32>,
    %c0_221 = arith.constant 0 : index
    %c37 = arith.constant 37 : index
    %188 = vector.load %arg9[%c0_221, %c37] : memref<32x204xf32, #tpu.memory_space<vmem>>, vector<32x64xf32>
    %c1184 = arith.constant 1184 : index
    %c0_222 = arith.constant 0 : index
    %189 = vector.load %arg10[%c1184, %c0_222] : memref<1248x128xf32, #tpu.memory_space<vmem>>, vector<32x64xf32>
    tpu.vector_store %arg10[%c1184, %c0_222], %188 {strides = array<i32>} : memref<1248x128xf32, #tpu.memory_space<vmem>>, vector<32x64xf32>,
    %c0_223 = arith.constant 0 : index
    %c139 = arith.constant 139 : index
    %190 = vector.load %arg9[%c0_223, %c139] : memref<32x204xf32, #tpu.memory_space<vmem>>, vector<32x64xf32>
    %c1184_224 = arith.constant 1184 : index
    %c64_225 = arith.constant 64 : index
    %191 = vector.load %arg10[%c1184_224, %c64_225] : memref<1248x128xf32, #tpu.memory_space<vmem>>, vector<32x64xf32>
    tpu.vector_store %arg10[%c1184_224, %c64_225], %190 {strides = array<i32>} : memref<1248x128xf32, #tpu.memory_space<vmem>>, vector<32x64xf32>,
    %c0_226 = arith.constant 0 : index
    %c38 = arith.constant 38 : index
    %192 = vector.load %arg9[%c0_226, %c38] : memref<32x204xf32, #tpu.memory_space<vmem>>, vector<32x64xf32>
    %c1216 = arith.constant 1216 : index
    %c0_227 = arith.constant 0 : index
    %193 = vector.load %arg10[%c1216, %c0_227] : memref<1248x128xf32, #tpu.memory_space<vmem>>, vector<32x64xf32>
    tpu.vector_store %arg10[%c1216, %c0_227], %192 {strides = array<i32>} : memref<1248x128xf32, #tpu.memory_space<vmem>>, vector<32x64xf32>,
    %c0_228 = arith.constant 0 : index
    %c140 = arith.constant 140 : index
    %194 = vector.load %arg9[%c0_228, %c140] : memref<32x204xf32, #tpu.memory_space<vmem>>, vector<32x64xf32>
    %c1216_229 = arith.constant 1216 : index
    %c64_230 = arith.constant 64 : index
    %195 = vector.load %arg10[%c1216_229, %c64_230] : memref<1248x128xf32, #tpu.memory_space<vmem>>, vector<32x64xf32>
    tpu.vector_store %arg10[%c1216_229, %c64_230], %194 {strides = array<i32>} : memref<1248x128xf32, #tpu.memory_space<vmem>>, vector<32x64xf32>,
    %c0_231 = arith.constant 0 : index
    %c0_232 = arith.constant 0 : index
    %196 = vector.load %arg4[%c0_231, %c0_232] : memref<96x1248xf32, #tpu.memory_space<vmem>>, vector<96x1248xf32>
    %c0_233 = arith.constant 0 : index
    %c0_234 = arith.constant 0 : index
    %197 = vector.load %arg10[%c0_233, %c0_234] : memref<1248x128xf32, #tpu.memory_space<vmem>>, vector<1248x128xf32>
    %cst_235 = arith.constant dense<0.000000e+00> : vector<96x128xf32>
    %198 = tpu.matmul %196, %197, %cst_235 {dimension_numbers = #tpu.dot_dimension_numbers<[1], [0], [0], [1], [0, 0, 1, 1], [], []>} : vector<96x1248xf32>, vector<1248x128xf32>, vector<96x128xf32> -> vector<96x128xf32>
    %c0_236 = arith.constant 0 : index
    %c0_237 = arith.constant 0 : index
    %199 = vector.load %arg5[%c0_236, %c0_237] : memref<128x1xf32, #tpu.memory_space<vmem>>, vector<96x1xf32>
    %200 = vector.broadcast %199 : vector<96x1xf32> to vector<96x128xf32>
    %201 = arith.addf %198, %200 : vector<96x128xf32>
    %c0_238 = arith.constant 0 : index
    %c0_239 = arith.constant 0 : index
    %202 = vector.load %arg6[%c0_238, %c0_239] : memref<128x128xf32, #tpu.memory_space<vmem>>, vector<96x128xf32>
    tpu.vector_store %arg6[%c0_238, %c0_239], %201 {strides = array<i32>} : memref<128x128xf32, #tpu.memory_space<vmem>>, vector<96x128xf32>,
    %c96_240 = arith.constant 96 : index
    %c0_241 = arith.constant 0 : index
    %203 = vector.load %arg6[%c96_240, %c0_241] : memref<128x128xf32, #tpu.memory_space<vmem>>, vector<32x128xf32>
    tpu.vector_store %arg6[%c96_240, %c0_241], %30 {strides = array<i32>} : memref<128x128xf32, #tpu.memory_space<vmem>>, vector<32x128xf32>,
    %cst_242 = arith.constant dense<0.000000e+00> : vector<96xf32>
    %204 = vector.multi_reduction <add>, %201, %cst_242 [1] : vector<96x128xf32> to vector<96xf32>
    %205 = vector.shape_cast %204 : vector<96xf32> to vector<96x1xf32>
    %c0_243 = arith.constant 0 : index
    %c0_244 = arith.constant 0 : index
    %c0_245 = arith.constant 0 : index
    %206 = vector.load %arg7[%c0_243, %c0_244, %c0_245] : memref<1x128x2xf32, #tpu.memory_space<vmem>>, vector<1x96x1xf32>
    %207 = vector.shape_cast %206 : vector<1x96x1xf32> to vector<96x1xf32>
    %208 = vector.shape_cast %205 : vector<96x1xf32> to vector<1x96x1xf32>
    tpu.vector_store %arg7[%c0_243, %c0_244, %c0_245], %208 {strides = array<i32>} : memref<1x128x2xf32, #tpu.memory_space<vmem>>, vector<1x96x1xf32>,
    %209 = arith.mulf %201, %201 : vector<96x128xf32>
    %cst_246 = arith.constant dense<0.000000e+00> : vector<96xf32>
    %210 = vector.multi_reduction <add>, %209, %cst_246 [1] : vector<96x128xf32> to vector<96xf32>
    %211 = vector.shape_cast %210 : vector<96xf32> to vector<96x1xf32>
    %c0_247 = arith.constant 0 : index
    %c0_248 = arith.constant 0 : index
    %c1_249 = arith.constant 1 : index
    %212 = vector.load %arg7[%c0_247, %c0_248, %c1_249] : memref<1x128x2xf32, #tpu.memory_space<vmem>>, vector<1x96x1xf32>
    %213 = vector.shape_cast %212 : vector<1x96x1xf32> to vector<96x1xf32>
    %214 = vector.shape_cast %211 : vector<96x1xf32> to vector<1x96x1xf32>
    tpu.vector_store %arg7[%c0_247, %c0_248, %c1_249], %214 {strides = array<i32>} : memref<1x128x2xf32, #tpu.memory_space<vmem>>, vector<1x96x1xf32>,
    %cst_250 = arith.constant dense<0.000000e+00> : vector<32xf32>
    %215 = vector.multi_reduction <add>, %30, %cst_250 [1] : vector<32x128xf32> to vector<32xf32>
    %216 = vector.shape_cast %215 : vector<32xf32> to vector<32x1xf32>
    %c0_251 = arith.constant 0 : index
    %c96_252 = arith.constant 96 : index
    %c0_253 = arith.constant 0 : index
    %217 = vector.load %arg7[%c0_251, %c96_252, %c0_253] : memref<1x128x2xf32, #tpu.memory_space<vmem>>, vector<1x32x1xf32>
    %218 = vector.shape_cast %217 : vector<1x32x1xf32> to vector<32x1xf32>
    %219 = vector.shape_cast %216 : vector<32x1xf32> to vector<1x32x1xf32>
    tpu.vector_store %arg7[%c0_251, %c96_252, %c0_253], %219 {strides = array<i32>} : memref<1x128x2xf32, #tpu.memory_space<vmem>>, vector<1x32x1xf32>,
    %220 = arith.mulf %30, %30 : vector<32x128xf32>
    %cst_254 = arith.constant dense<0.000000e+00> : vector<32xf32>
    %221 = vector.multi_reduction <add>, %220, %cst_254 [1] : vector<32x128xf32> to vector<32xf32>
    %222 = vector.shape_cast %221 : vector<32xf32> to vector<32x1xf32>
    %c0_255 = arith.constant 0 : index
    %c96_256 = arith.constant 96 : index
    %c1_257 = arith.constant 1 : index
    %223 = vector.load %arg7[%c0_255, %c96_256, %c1_257] : memref<1x128x2xf32, #tpu.memory_space<vmem>>, vector<1x32x1xf32>
    %224 = vector.shape_cast %223 : vector<1x32x1xf32> to vector<32x1xf32>
    %225 = vector.shape_cast %222 : vector<32x1xf32> to vector<1x32x1xf32>
    tpu.vector_store %arg7[%c0_255, %c96_256, %c1_257], %225 {strides = array<i32>} : memref<1x128x2xf32, #tpu.memory_space<vmem>>, vector<1x32x1xf32>,
    return
  }
  func.func @transform_0(%arg0: i32) -> (i32, i32, i32) {
    %c0_i32 = arith.constant 0 : i32
    %c0_i32_0 = arith.constant 0 : i32
    %c0_i32_1 = arith.constant 0 : i32
    return %arg0, %c0_i32, %c0_i32_0 : i32, i32, i32
  }
  func.func @transform_1(%arg0: i32) -> (i32, i32) {
    %c0_i32 = arith.constant 0 : i32
    %c0_i32_0 = arith.constant 0 : i32
    %c0_i32_1 = arith.constant 0 : i32
    return %c0_i32, %c0_i32_0 : i32, i32
  }
  func.func @transform_2(%arg0: i32) -> (i32, i32) {
    %c0_i32 = arith.constant 0 : i32
    %c0_i32_0 = arith.constant 0 : i32
    %c0_i32_1 = arith.constant 0 : i32
    return %c0_i32, %c0_i32_0 : i32, i32
  }
  func.func @transform_3(%arg0: i32) -> (i32, i32) {
    %c0_i32 = arith.constant 0 : i32
    %c0_i32_0 = arith.constant 0 : i32
    %c0_i32_1 = arith.constant 0 : i32
    return %c0_i32, %c0_i32_0 : i32, i32
  }
  func.func @transform_4(%arg0: i32) -> (i32, i32) {
    %c0_i32 = arith.constant 0 : i32
    %c0_i32_0 = arith.constant 0 : i32
    %c0_i32_1 = arith.constant 0 : i32
    return %c0_i32, %c0_i32_0 : i32, i32
  }
  func.func @transform_5(%arg0: i32) -> (i32, i32) {
    %c0_i32 = arith.constant 0 : i32
    %c0_i32_0 = arith.constant 0 : i32
    return %c0_i32, %arg0 : i32, i32
  }
  func.func @transform_6(%arg0: i32) -> (i32, i32, i32) {
    %c0_i32 = arith.constant 0 : i32
    %c0_i32_0 = arith.constant 0 : i32
    %c0_i32_1 = arith.constant 0 : i32
    return %arg0, %c0_i32, %c0_i32_0 : i32, i32, i32
  }
}

</mosaic_0001>

<llo_original>
// kernel: inception_layer.3
$region0: #{inception_layer.3}
  #allocation0 [shape = 'u32[]', space=smem, size = 0x4, offset = 0x4, fixed_abs, tag = 'smem constant byte address 0x4 - core index']
  #allocation1 [shape = 'u32[72,128]{1,0:T(1,128)}', space=vmem, size = 0x9000, scoped, tag = 'internal scratch']
  %s0 = inlined_call_operand.vmem [shape: f32[128,128], index: 0, kind: input, shape index: {}]
  %s1 = inlined_call_operand.vmem [shape: f32[128,1], index: 1, kind: input, shape index: {}]
  %s2 = inlined_call_operand.vmem [shape: f32[128,1], index: 2, kind: input, shape index: {}]
  %s3 = inlined_call_operand.vmem [shape: f32[128,128], index: 3, kind: output, shape index: {}]
  %s4 = sld [smem:[#allocation0]]
  $region22: #{inception_layer.3} parent=0
    _
  %s6 = ssub.s32 1, %s4
  %s7 = scalar_select 0, %s6, %s4
  // Predicated region
  $region2: #{inception_layer.3} parent=0 // pred_check
    _
  $region3: #{inception_layer.3} parent=0 // pred_check_branch
    %9 = sbr.rel (0) target = $region5
  $region4: #{inception_layer.3} parent=0 // pred_region
    _
  $region5: #{inception_layer.3} parent=0 // pred_fallthru
    _
  // Predicated region
  $region6: #{inception_layer.3} parent=0 // pred_check
    _
  $region7: #{inception_layer.3} parent=0 // pred_check_branch
    %11 = sbr.rel (0) target = $region9
  $region8: #{inception_layer.3} parent=0 // pred_region
    _
  $region9: #{inception_layer.3} parent=0 // pred_fallthru
    _
  // Predicated region
  $region10: #{inception_layer.3} parent=0 // pred_check
    _
  $region11: #{inception_layer.3} parent=0 // pred_check_branch
    %13 = sbr.rel (0) target = $region13
  $region12: #{inception_layer.3} parent=0 // pred_region
    _
  $region13: #{inception_layer.3} parent=0 // pred_fallthru
    _
  %v14 = vld [vmem:[%s0] sm:$0xff]
  %v15 = vld [vmem:[%s0 + $0x8] sm:$0xff]
  %v16 = vld [vmem:[%s0 + $0x10] sm:$0xff]
  %v17 = vld [vmem:[%s0 + $0x18] sm:$0xff]
  %v18 = vld [vmem:[%s0 + $0x20] sm:$0xff]
  %v19 = vld [vmem:[%s0 + $0x28] sm:$0xff]
  %v20 = vld [vmem:[%s0 + $0x30] sm:$0xff]
  %v21 = vld [vmem:[%s0 + $0x38] sm:$0xff]
  %v22 = vld [vmem:[%s0 + $0x40] sm:$0xff]
  %v23 = vld [vmem:[%s0 + $0x48] sm:$0xff]
  %v24 = vld [vmem:[%s0 + $0x50] sm:$0xff]
  %v25 = vld [vmem:[%s0 + $0x58] sm:$0xff]
  %v26 = vld [vmem:[%s0 + $0x60] sm:$0xff]
  %v27 = vld [vmem:[%s0 + $0x68] sm:$0xff]
  %v28 = vld [vmem:[%s0 + $0x70] sm:$0xff]
  %v29 = vld [vmem:[%s0 + $0x78] sm:$0xff]
  %v30 = vld [vmem:[%s1] sm:$0xff]
  %v31 = vld [vmem:[%s1 + $0x8] sm:$0xff]
  %v32 = vld [vmem:[%s1 + $0x10] sm:$0xff]
  %v33 = vld [vmem:[%s1 + $0x18] sm:$0xff]
  %v34 = vld [vmem:[%s1 + $0x20] sm:$0xff]
  %v35 = vld [vmem:[%s1 + $0x28] sm:$0xff]
  %v36 = vld [vmem:[%s1 + $0x30] sm:$0xff]
  %v37 = vld [vmem:[%s1 + $0x38] sm:$0xff]
  %v38 = vld [vmem:[%s1 + $0x40] sm:$0xff]
  %v39 = vld [vmem:[%s1 + $0x48] sm:$0xff]
  %v40 = vld [vmem:[%s1 + $0x50] sm:$0xff]
  %v41 = vld [vmem:[%s1 + $0x58] sm:$0xff]
  %v42 = vld [vmem:[%s1 + $0x60] sm:$0xff]
  %v43 = vld [vmem:[%s1 + $0x68] sm:$0xff]
  %v44 = vld [vmem:[%s1 + $0x70] sm:$0xff]
  %v45 = vld [vmem:[%s1 + $0x78] sm:$0xff]
  %47 = vset.pattern.permute.xlu0 0
  %48 = vperm.xlu0 %47, %v30
  %v49 = vpop.permute.xlu0 %48
  %52 = vset.pattern.permute.xlu0 0
  %53 = vperm.xlu0 %52, %v31
  %v54 = vpop.permute.xlu0 %53
  %57 = vset.pattern.permute.xlu0 0
  %58 = vperm.xlu0 %57, %v32
  %v59 = vpop.permute.xlu0 %58
  %62 = vset.pattern.permute.xlu0 0
  %63 = vperm.xlu0 %62, %v33
  %v64 = vpop.permute.xlu0 %63
  %67 = vset.pattern.permute.xlu0 0
  %68 = vperm.xlu0 %67, %v34
  %v69 = vpop.permute.xlu0 %68
  %72 = vset.pattern.permute.xlu0 0
  %73 = vperm.xlu0 %72, %v35
  %v74 = vpop.permute.xlu0 %73
  %77 = vset.pattern.permute.xlu0 0
  %78 = vperm.xlu0 %77, %v36
  %v79 = vpop.permute.xlu0 %78
  %82 = vset.pattern.permute.xlu0 0
  %83 = vperm.xlu0 %82, %v37
  %v84 = vpop.permute.xlu0 %83
  %87 = vset.pattern.permute.xlu0 0
  %88 = vperm.xlu0 %87, %v38
  %v89 = vpop.permute.xlu0 %88
  %92 = vset.pattern.permute.xlu0 0
  %93 = vperm.xlu0 %92, %v39
  %v94 = vpop.permute.xlu0 %93
  %97 = vset.pattern.permute.xlu0 0
  %98 = vperm.xlu0 %97, %v40
  %v99 = vpop.permute.xlu0 %98
  %102 = vset.pattern.permute.xlu0 0
  %103 = vperm.xlu0 %102, %v41
  %v104 = vpop.permute.xlu0 %103
  %107 = vset.pattern.permute.xlu0 0
  %108 = vperm.xlu0 %107, %v42
  %v109 = vpop.permute.xlu0 %108
  %112 = vset.pattern.permute.xlu0 0
  %113 = vperm.xlu0 %112, %v43
  %v114 = vpop.permute.xlu0 %113
  %117 = vset.pattern.permute.xlu0 0
  %118 = vperm.xlu0 %117, %v44
  %v119 = vpop.permute.xlu0 %118
  %122 = vset.pattern.permute.xlu0 0
  %123 = vperm.xlu0 %122, %v45
  %v124 = vpop.permute.xlu0 %123
  %v126 = vmul.f32 %v14, %v49
  %v127 = vmul.f32 %v15, %v54
  %v128 = vmul.f32 %v16, %v59
  %v129 = vmul.f32 %v17, %v64
  %v130 = vmul.f32 %v18, %v69
  %v131 = vmul.f32 %v19, %v74
  %v132 = vmul.f32 %v20, %v79
  %v133 = vmul.f32 %v21, %v84
  %v134 = vmul.f32 %v22, %v89
  %v135 = vmul.f32 %v23, %v94
  %v136 = vmul.f32 %v24, %v99
  %v137 = vmul.f32 %v25, %v104
  %v138 = vmul.f32 %v26, %v109
  %v139 = vmul.f32 %v27, %v114
  %v140 = vmul.f32 %v28, %v119
  %v141 = vmul.f32 %v29, %v124
  %v142 = vld [vmem:[%s2] sm:$0xff]
  %v143 = vld [vmem:[%s2 + $0x8] sm:$0xff]
  %v144 = vld [vmem:[%s2 + $0x10] sm:$0xff]
  %v145 = vld [vmem:[%s2 + $0x18] sm:$0xff]
  %v146 = vld [vmem:[%s2 + $0x20] sm:$0xff]
  %v147 = vld [vmem:[%s2 + $0x28] sm:$0xff]
  %v148 = vld [vmem:[%s2 + $0x30] sm:$0xff]
  %v149 = vld [vmem:[%s2 + $0x38] sm:$0xff]
  %v150 = vld [vmem:[%s2 + $0x40] sm:$0xff]
  %v151 = vld [vmem:[%s2 + $0x48] sm:$0xff]
  %v152 = vld [vmem:[%s2 + $0x50] sm:$0xff]
  %v153 = vld [vmem:[%s2 + $0x58] sm:$0xff]
  %v154 = vld [vmem:[%s2 + $0x60] sm:$0xff]
  %v155 = vld [vmem:[%s2 + $0x68] sm:$0xff]
  %v156 = vld [vmem:[%s2 + $0x70] sm:$0xff]
  %v157 = vld [vmem:[%s2 + $0x78] sm:$0xff]
  %159 = vset.pattern.permute.xlu0 0
  %160 = vperm.xlu0 %159, %v142
  %v161 = vpop.permute.xlu0 %160
  %164 = vset.pattern.permute.xlu0 0
  %165 = vperm.xlu0 %164, %v143
  %v166 = vpop.permute.xlu0 %165
  %169 = vset.pattern.permute.xlu0 0
  %170 = vperm.xlu0 %169, %v144
  %v171 = vpop.permute.xlu0 %170
  %174 = vset.pattern.permute.xlu0 0
  %175 = vperm.xlu0 %174, %v145
  %v176 = vpop.permute.xlu0 %175
  %179 = vset.pattern.permute.xlu0 0
  %180 = vperm.xlu0 %179, %v146
  %v181 = vpop.permute.xlu0 %180
  %184 = vset.pattern.permute.xlu0 0
  %185 = vperm.xlu0 %184, %v147
  %v186 = vpop.permute.xlu0 %185
  %189 = vset.pattern.permute.xlu0 0
  %190 = vperm.xlu0 %189, %v148
  %v191 = vpop.permute.xlu0 %190
  %194 = vset.pattern.permute.xlu0 0
  %195 = vperm.xlu0 %194, %v149
  %v196 = vpop.permute.xlu0 %195
  %199 = vset.pattern.permute.xlu0 0
  %200 = vperm.xlu0 %199, %v150
  %v201 = vpop.permute.xlu0 %200
  %204 = vset.pattern.permute.xlu0 0
  %205 = vperm.xlu0 %204, %v151
  %v206 = vpop.permute.xlu0 %205
  %209 = vset.pattern.permute.xlu0 0
  %210 = vperm.xlu0 %209, %v152
  %v211 = vpop.permute.xlu0 %210
  %214 = vset.pattern.permute.xlu0 0
  %215 = vperm.xlu0 %214, %v153
  %v216 = vpop.permute.xlu0 %215
  %219 = vset.pattern.permute.xlu0 0
  %220 = vperm.xlu0 %219, %v154
  %v221 = vpop.permute.xlu0 %220
  %224 = vset.pattern.permute.xlu0 0
  %225 = vperm.xlu0 %224, %v155
  %v226 = vpop.permute.xlu0 %225
  %229 = vset.pattern.permute.xlu0 0
  %230 = vperm.xlu0 %229, %v156
  %v231 = vpop.permute.xlu0 %230
  %234 = vset.pattern.permute.xlu0 0
  %235 = vperm.xlu0 %234, %v157
  %v236 = vpop.permute.xlu0 %235
  %v238 = vadd.f32 %v126, %v161
  %v239 = vadd.f32 %v127, %v166
  %v240 = vadd.f32 %v128, %v171
  %v241 = vadd.f32 %v129, %v176
  %v242 = vadd.f32 %v130, %v181
  %v243 = vadd.f32 %v131, %v186
  %v244 = vadd.f32 %v132, %v191
  %v245 = vadd.f32 %v133, %v196
  %v246 = vadd.f32 %v134, %v201
  %v247 = vadd.f32 %v135, %v206
  %v248 = vadd.f32 %v136, %v211
  %v249 = vadd.f32 %v137, %v216
  %v250 = vadd.f32 %v138, %v221
  %v251 = vadd.f32 %v139, %v226
  %v252 = vadd.f32 %v140, %v231
  %v253 = vadd.f32 %v141, %v236
  %v254 = vmax.f32 %v238, 0.0
  %v255 = vmax.f32 %v239, 0.0
  %v256 = vmax.f32 %v240, 0.0
  %v257 = vmax.f32 %v241, 0.0
  %v258 = vmax.f32 %v242, 0.0
  %v259 = vmax.f32 %v243, 0.0
  %v260 = vmax.f32 %v244, 0.0
  %v261 = vmax.f32 %v245, 0.0
  %v262 = vmax.f32 %v246, 0.0
  %v263 = vmax.f32 %v247, 0.0
  %v264 = vmax.f32 %v248, 0.0
  %v265 = vmax.f32 %v249, 0.0
  %v266 = vmax.f32 %v250, 0.0
  %v267 = vmax.f32 %v251, 0.0
  %v268 = vmax.f32 %v252, 0.0
  %v269 = vmax.f32 %v253, 0.0
  %270 = vst [vmem:[%s3] sm:$0xff] %v254
  %271 = vst [vmem:[%s3 + $0x8] sm:$0xff] %v255
  %272 = vst [vmem:[%s3 + $0x10] sm:$0xff] %v256
  %273 = vst [vmem:[%s3 + $0x18] sm:$0xff] %v257
  %274 = vst [vmem:[%s3 + $0x20] sm:$0xff] %v258
  %275 = vst [vmem:[%s3 + $0x28] sm:$0xff] %v259
  %276 = vst [vmem:[%s3 + $0x30] sm:$0xff] %v260
  %277 = vst [vmem:[%s3 + $0x38] sm:$0xff] %v261
  %278 = vst [vmem:[%s3 + $0x40] sm:$0xff] %v262
  %279 = vst [vmem:[%s3 + $0x48] sm:$0xff] %v263
  %280 = vst [vmem:[%s3 + $0x50] sm:$0xff] %v264
  %281 = vst [vmem:[%s3 + $0x58] sm:$0xff] %v265
  %282 = vst [vmem:[%s3 + $0x60] sm:$0xff] %v266
  %283 = vst [vmem:[%s3 + $0x68] sm:$0xff] %v267
  %284 = vst [vmem:[%s3 + $0x70] sm:$0xff] %v268
  %285 = vst [vmem:[%s3 + $0x78] sm:$0xff] %v269
  // Predicated region
  $region14: #{inception_layer.3} parent=0 // pred_check
    _
  $region15: #{inception_layer.3} parent=0 // pred_check_branch
    %287 = sbr.rel (0) target = $region17
  $region16: #{inception_layer.3} parent=0 // pred_region
    _
  $region17: #{inception_layer.3} parent=0 // pred_fallthru
    _
  // Predicated region
  $region18: #{inception_layer.3} parent=0 // pred_check
    _
  $region19: #{inception_layer.3} parent=0 // pred_check_branch
    %289 = sbr.rel (0) target = $region21
  $region20: #{inception_layer.3} parent=0 // pred_region
    _
  $region21: #{inception_layer.3} parent=0 // pred_fallthru
    _

// kernel: inception_layer.2
$region0: #{inception_layer.2}
  #allocation0 [shape = 'u32[]', space=smem, size = 0x4, offset = 0x4, fixed_abs, tag = 'smem constant byte address 0x4 - core index']
  #allocation1 [shape = 'u32[72,128]{1,0:T(1,128)}', space=vmem, size = 0x9000, scoped, tag = 'internal scratch']
  #allocation2 [shape = 'f32[4,256]{1,0:T(4,128)}', space=vmem, size = 0x1000, scoped, tag = 'scratch operand']
  #allocation3 [shape = 'f32[32,204]{1,0:T(8,128)}', space=vmem, size = 0x8000, scoped, tag = 'scratch operand']
  #allocation4 [shape = 'f32[1248,128]{1,0:T(8,128)}', space=vmem, size = 0x9c000, scoped, tag = 'scratch operand']
  %s0 = inlined_call_operand.vmem [shape: f32[2,4,66], index: 0, kind: input, shape index: {}]
  %s1 = inlined_call_operand.vmem [shape: f32[64,4], index: 1, kind: input, shape index: {}]
  %s2 = inlined_call_operand.vmem [shape: f32[32,1], index: 2, kind: input, shape index: {}]
  %s3 = inlined_call_operand.vmem [shape: f32[96,1248], index: 3, kind: input, shape index: {}]
  %s4 = inlined_call_operand.vmem [shape: f32[128,1], index: 4, kind: input, shape index: {}]
  %s5 = inlined_call_operand.vmem [shape: f32[128,128], index: 5, kind: output, shape index: {0}]
  %s6 = inlined_call_operand.vmem [shape: f32[1,128,2], index: 6, kind: output, shape index: {1}]
  %7 = xla_tuple %s5, %s6
  %s8 = sld [smem:[#allocation0]]
  $region38: #{inception_layer.2} parent=0
    _
  %s10 = ssub.s32 1, %s8
  %s11 = scalar_select 0, %s10, %s8
  // Predicated region
  $region2: #{inception_layer.2} parent=0 // pred_check
    _
  $region3: #{inception_layer.2} parent=0 // pred_check_branch
    %13 = sbr.rel (0) target = $region5
  $region4: #{inception_layer.2} parent=0 // pred_region
    _
  $region5: #{inception_layer.2} parent=0 // pred_fallthru
    _
  // Predicated region
  $region6: #{inception_layer.2} parent=0 // pred_check
    _
  $region7: #{inception_layer.2} parent=0 // pred_check_branch
    %15 = sbr.rel (0) target = $region9
  $region8: #{inception_layer.2} parent=0 // pred_region
    _
  $region9: #{inception_layer.2} parent=0 // pred_fallthru
    _
  // Predicated region
  $region10: #{inception_layer.2} parent=0 // pred_check
    _
  $region11: #{inception_layer.2} parent=0 // pred_check_branch
    %17 = sbr.rel (0) target = $region13
  $region12: #{inception_layer.2} parent=0 // pred_region
    _
  $region13: #{inception_layer.2} parent=0 // pred_fallthru
    _
  // Predicated region
  $region14: #{inception_layer.2} parent=0 // pred_check
    _
  $region15: #{inception_layer.2} parent=0 // pred_check_branch
    %19 = sbr.rel (0) target = $region17
  $region16: #{inception_layer.2} parent=0 // pred_region
    _
  $region17: #{inception_layer.2} parent=0 // pred_fallthru
    _
  // Predicated region
  $region18: #{inception_layer.2} parent=0 // pred_check
    _
  $region19: #{inception_layer.2} parent=0 // pred_check_branch
    %21 = sbr.rel (0) target = $region21
  $region20: #{inception_layer.2} parent=0 // pred_region
    _
  $region21: #{inception_layer.2} parent=0 // pred_fallthru
    _
  %v22 = vld [vmem:[%s0] sm:$0xf]
  %24 = vrot.lane.b32.xlu0 %v22, 127
  %v25 = vpop.permute.xlu0 %24
  %vm27 = vcmask 519168
  %28 = vst.msk [vmem:[#allocation2] sm:$0xf] %vm27, %v25
  %v29 = vmax.f32 %v22, %v25
  %30 = vrot.lane.b32.xlu0 %v22, 126
  %v31 = vpop.permute.xlu0 %30
  %v33 = vmax.f32 %v29, %v31
  %34 = vst.msk [vmem:[#allocation2 + $0x4] sm:$0xf] %vm27, %v33
  %s35 = scalar_lea.vmem %s0, 4
  %v36 = vld [vmem:[%s35] sm:$0xf]
  %38 = vrot.lane.b32.xlu0 %v36, 63
  %v39 = vpop.permute.xlu0 %38
  %vm41 = vcmask 1043968
  %42 = vst.msk [vmem:[#allocation2] sm:$0xf] %vm41, %v39
  %43 = vrot.lane.b32.xlu0 %v36, 127
  %v44 = vpop.permute.xlu0 %43
  %v46 = vmax.f32 %v36, %v44
  %47 = vrot.lane.b32.xlu0 %v36, 126
  %v48 = vpop.permute.xlu0 %47
  %v50 = vmax.f32 %v46, %v48
  %52 = vrot.lane.b32.xlu0 %v50, 64
  %v53 = vpop.permute.xlu0 %52
  %55 = vst.msk [vmem:[#allocation2 + $0x4] sm:$0xf] %vm41, %v53
  %v56 = vld [vmem:[%s1] sm:$0xff]
  %v57 = vld [vmem:[%s1 + $0x8] sm:$0xff]
  %v58 = vld [vmem:[%s1 + $0x10] sm:$0xff]
  %v59 = vld [vmem:[%s1 + $0x18] sm:$0xff]
  %v60 = vld [vmem:[%s1 + $0x20] sm:$0xff]
  %v61 = vld [vmem:[%s1 + $0x28] sm:$0xff]
  %v62 = vld [vmem:[%s1 + $0x30] sm:$0xff]
  %v63 = vld [vmem:[%s1 + $0x38] sm:$0xff]
  %v64 = vld [vmem:[#allocation2] sm:$0xff]
  %66 = vst [vmem:[#allocation1] ss:$2 sm:$0xff] %v64
  %v67 = vld.sshfl [vmem:[#allocation1] sm:$0xff pattern:$0x75316420]
  %v68 = vld.sshfl [vmem:[#allocation1 + $0x8] sm:$0xff pattern:$0x75316420]
  %vm69 = vcmask 31744
  %v71 = vsel %vm69, %v56, 0
  %v74 = vsel %vm69, %v57, 0
  %v77 = vsel %vm69, %v58, 0
  %v80 = vsel %vm69, %v59, 0
  %v83 = vsel %vm69, %v60, 0
  %v86 = vsel %vm69, %v61, 0
  %v89 = vsel %vm69, %v62, 0
  %v92 = vsel %vm69, %v63, 0
  %vm94 = vcmask 1043456
  %v95 = vsel %vm94, %v67, 0
  %v97 = vsel %vm94, %v68, 0
  %99 = vmatpush.msra.mxu0 0.0
  %100 = vmatpush.msra.mxu0 0.0
  %101 = vmatpush.msra.mxu0 0.0
  %102 = vmatpush.msra.mxu0 0.0
  %103 = vmatpush.msra.mxu0 0.0
  %104 = vmatpush.msra.mxu0 0.0
  %105 = vmatpush.msra.mxu0 0.0
  %106 = vmatpush.msra.mxu0 0.0
  %107 = vmatpush.msra.mxu0 0.0
  %108 = vmatpush.msra.mxu0 0.0
  %109 = vmatpush.msra.mxu0 0.0
  %110 = vmatpush.msra.mxu0 0.0
  %111 = vmatpush.msra.mxu0 0.0
  %112 = vmatpush.msra.mxu0 0.0
  %113 = vmatpush.msra.mxu0 0.0
  %114 = vmatpush.msra.mxu0 %v95
  %115 = vmatmul.f32.gmra.mxu0 %v71
  %v116 = vpop.f32.mrf.mxu0
  %v117 = vadd.f32 0.0, %v116
  %118 = vmatmul.f32.gmra.mxu0 %v74
  %v119 = vpop.f32.mrf.mxu0
  %v120 = vadd.f32 0.0, %v119
  %121 = vmatmul.f32.gmra.mxu0 %v77
  %v122 = vpop.f32.mrf.mxu0
  %v123 = vadd.f32 0.0, %v122
  %124 = vmatmul.f32.gmra.mxu0 %v80
  %v125 = vpop.f32.mrf.mxu0
  %v126 = vadd.f32 0.0, %v125
  %127 = vmatmul.f32.gmra.mxu0 %v83
  %v128 = vpop.f32.mrf.mxu0
  %129 = vmatmul.f32.gmra.mxu0 %v86
  %v130 = vpop.f32.mrf.mxu0
  %131 = vmatmul.f32.gmra.mxu0 %v89
  %v132 = vpop.f32.mrf.mxu0
  %133 = vmatmul.f32.gmra.mxu0 %v92
  %v134 = vpop.f32.mrf.mxu0
  %135 = vdwg.mxu0
  %136 = vmatpush.msra.mxu0 0.0
  %137 = vmatpush.msra.mxu0 0.0
  %138 = vmatpush.msra.mxu0 0.0
  %139 = vmatpush.msra.mxu0 0.0
  %140 = vmatpush.msra.mxu0 0.0
  %141 = vmatpush.msra.mxu0 0.0
  %142 = vmatpush.msra.mxu0 0.0
  %143 = vmatpush.msra.mxu0 0.0
  %144 = vmatpush.msra.mxu0 0.0
  %145 = vmatpush.msra.mxu0 0.0
  %146 = vmatpush.msra.mxu0 0.0
  %147 = vmatpush.msra.mxu0 0.0
  %148 = vmatpush.msra.mxu0 0.0
  %149 = vmatpush.msra.mxu0 0.0
  %150 = vmatpush.msra.mxu0 0.0
  %151 = vmatpush.msra.mxu0 %v97
  %152 = vmatmul.f32.gmra.mxu0 %v71
  %v153 = vpop.f32.mrf.mxu0
  %154 = vmatmul.f32.gmra.mxu0 %v74
  %v155 = vpop.f32.mrf.mxu0
  %156 = vmatmul.f32.gmra.mxu0 %v77
  %v157 = vpop.f32.mrf.mxu0
  %158 = vmatmul.f32.gmra.mxu0 %v80
  %v159 = vpop.f32.mrf.mxu0
  %160 = vmatmul.f32.gmra.mxu0 %v83
  %v161 = vpop.f32.mrf.mxu0
  %v162 = vadd.f32 0.0, %v161
  %163 = vmatmul.f32.gmra.mxu0 %v86
  %v164 = vpop.f32.mrf.mxu0
  %v165 = vadd.f32 0.0, %v164
  %166 = vmatmul.f32.gmra.mxu0 %v89
  %v167 = vpop.f32.mrf.mxu0
  %v168 = vadd.f32 0.0, %v167
  %169 = vmatmul.f32.gmra.mxu0 %v92
  %v170 = vpop.f32.mrf.mxu0
  %v171 = vadd.f32 0.0, %v170
  %172 = vdwg.mxu0
  %v173 = vld [vmem:[%s2] sm:$0xff]
  %v174 = vld [vmem:[%s2 + $0x8] sm:$0xff]
  %v175 = vld [vmem:[%s2 + $0x10] sm:$0xff]
  %v176 = vld [vmem:[%s2 + $0x18] sm:$0xff]
  %178 = vset.pattern.permute.xlu0 0
  %179 = vperm.xlu0 %178, %v173
  %v180 = vpop.permute.xlu0 %179
  %183 = vset.pattern.permute.xlu0 0
  %184 = vperm.xlu0 %183, %v174
  %v185 = vpop.permute.xlu0 %184
  %188 = vset.pattern.permute.xlu0 0
  %189 = vperm.xlu0 %188, %v175
  %v190 = vpop.permute.xlu0 %189
  %193 = vset.pattern.permute.xlu0 0
  %194 = vperm.xlu0 %193, %v176
  %v195 = vpop.permute.xlu0 %194
  %v197 = vadd.f32 %v117, %v180
  %v198 = vadd.f32 %v120, %v185
  %v199 = vadd.f32 %v123, %v190
  %v200 = vadd.f32 %v126, %v195
  %v201 = vld [vmem:[%s4 + $0x60] sm:$0xff]
  %v202 = vld [vmem:[%s4 + $0x68] sm:$0xff]
  %v203 = vld [vmem:[%s4 + $0x70] sm:$0xff]
  %v204 = vld [vmem:[%s4 + $0x78] sm:$0xff]
  %206 = vset.pattern.permute.xlu0 0
  %207 = vperm.xlu0 %206, %v201
  %v208 = vpop.permute.xlu0 %207
  %211 = vset.pattern.permute.xlu0 0
  %212 = vperm.xlu0 %211, %v202
  %v213 = vpop.permute.xlu0 %212
  %216 = vset.pattern.permute.xlu0 0
  %217 = vperm.xlu0 %216, %v203
  %v218 = vpop.permute.xlu0 %217
  %221 = vset.pattern.permute.xlu0 0
  %222 = vperm.xlu0 %221, %v204
  %v223 = vpop.permute.xlu0 %222
  %v225 = vadd.f32 %v162, %v208
  %v226 = vadd.f32 %v165, %v213
  %v227 = vadd.f32 %v168, %v218
  %v228 = vadd.f32 %v171, %v223
  %vm229 = vcmask 154624
  %230 = vst.msk [vmem:[#allocation3] sm:$0xff] %vm229, 0.0
  %231 = vst.msk [vmem:[#allocation3 + $0x10] sm:$0xff] %vm229, 0.0
  %232 = vst.msk [vmem:[#allocation3 + $0x20] sm:$0xff] %vm229, 0.0
  %233 = vst.msk [vmem:[#allocation3 + $0x30] sm:$0xff] %vm229, 0.0
  %238 = vrot.lane.b32.xlu0 %v197, 19
  %v239 = vpop.permute.xlu0 %238
  %240 = vrot.lane.b32.xlu0 %v198, 19
  %v241 = vpop.permute.xlu0 %240
  %242 = vrot.lane.b32.xlu0 %v199, 19
  %v243 = vpop.permute.xlu0 %242
  %244 = vrot.lane.b32.xlu0 %v200, 19
  %v245 = vpop.permute.xlu0 %244
  %vm250 = vcmask 679064
  %251 = vst.msk [vmem:[#allocation3] sm:$0xff] %vm250, %v239
  %252 = vst.msk [vmem:[#allocation3 + $0x10] sm:$0xff] %vm250, %v241
  %253 = vst.msk [vmem:[#allocation3 + $0x20] sm:$0xff] %vm250, %v243
  %254 = vst.msk [vmem:[#allocation3 + $0x30] sm:$0xff] %vm250, %v245
  %vm255 = vcmask 835224
  %256 = vst.msk [vmem:[#allocation3] sm:$0xff] %vm255, 0.0
  %257 = vst.msk [vmem:[#allocation3 + $0x10] sm:$0xff] %vm255, 0.0
  %258 = vst.msk [vmem:[#allocation3 + $0x20] sm:$0xff] %vm255, 0.0
  %259 = vst.msk [vmem:[#allocation3 + $0x30] sm:$0xff] %vm255, 0.0
  %vm260 = vcmask 991024
  %261 = vst.msk [vmem:[#allocation3] sm:$0xff] %vm260, 0.0
  %262 = vst.msk [vmem:[#allocation3 + $0x10] sm:$0xff] %vm260, 0.0
  %263 = vst.msk [vmem:[#allocation3 + $0x20] sm:$0xff] %vm260, 0.0
  %264 = vst.msk [vmem:[#allocation3 + $0x30] sm:$0xff] %vm260, 0.0
  %265 = vrot.lane.b32.xlu0 %v197, 57
  %v266 = vpop.permute.xlu0 %265
  %267 = vrot.lane.b32.xlu0 %v198, 57
  %v268 = vpop.permute.xlu0 %267
  %269 = vrot.lane.b32.xlu0 %v199, 57
  %v270 = vpop.permute.xlu0 %269
  %271 = vrot.lane.b32.xlu0 %v200, 57
  %v272 = vpop.permute.xlu0 %271
  %vm277 = vcmask 1048520
  %278 = vst.msk [vmem:[#allocation3] sm:$0xff] %vm277, %v266
  %vm279 = vcmask 465920
  %280 = vst.msk [vmem:[#allocation3 + $0x8] sm:$0xff] %vm279, %v266
  %281 = vst.msk [vmem:[#allocation3 + $0x10] sm:$0xff] %vm277, %v268
  %282 = vst.msk [vmem:[#allocation3 + $0x18] sm:$0xff] %vm279, %v268
  %283 = vst.msk [vmem:[#allocation3 + $0x20] sm:$0xff] %vm277, %v270
  %284 = vst.msk [vmem:[#allocation3 + $0x28] sm:$0xff] %vm279, %v270
  %285 = vst.msk [vmem:[#allocation3 + $0x30] sm:$0xff] %vm277, %v272
  %286 = vst.msk [vmem:[#allocation3 + $0x38] sm:$0xff] %vm279, %v272
  %vm287 = vcmask 622024
  %288 = vst.msk [vmem:[#allocation3 + $0x8] sm:$0xff] %vm287, 0.0
  %289 = vst.msk [vmem:[#allocation3 + $0x18] sm:$0xff] %vm287, 0.0
  %290 = vst.msk [vmem:[#allocation3 + $0x28] sm:$0xff] %vm287, 0.0
  %291 = vst.msk [vmem:[#allocation3 + $0x38] sm:$0xff] %vm287, 0.0
  %v292 = vld [vmem:[#allocation3] sm:$0xff]
  %v293 = vld [vmem:[#allocation3 + $0x10] sm:$0xff]
  %v294 = vld [vmem:[#allocation3 + $0x20] sm:$0xff]
  %v295 = vld [vmem:[#allocation3 + $0x30] sm:$0xff]
  %vm296 = vcmask 523264
  %297 = vst.msk [vmem:[#allocation4] sm:$0xff] %vm296, %v292
  %298 = vst.msk [vmem:[#allocation4 + $0x8] sm:$0xff] %vm296, %v293
  %299 = vst.msk [vmem:[#allocation4 + $0x10] sm:$0xff] %vm296, %v294
  %300 = vst.msk [vmem:[#allocation4 + $0x18] sm:$0xff] %vm296, %v295
  %v301 = vld [vmem:[#allocation3] sm:$0xff]
  %v302 = vld [vmem:[#allocation3 + $0x8] sm:$0xff]
  %v303 = vld [vmem:[#allocation3 + $0x10] sm:$0xff]
  %v304 = vld [vmem:[#allocation3 + $0x18] sm:$0xff]
  %v305 = vld [vmem:[#allocation3 + $0x20] sm:$0xff]
  %v306 = vld [vmem:[#allocation3 + $0x28] sm:$0xff]
  %v307 = vld [vmem:[#allocation3 + $0x30] sm:$0xff]
  %v308 = vld [vmem:[#allocation3 + $0x38] sm:$0xff]
  %317 = vrot.lane.b32.xlu0 %v301, 90
  %v318 = vpop.permute.xlu0 %317
  %319 = vrot.lane.b32.xlu0 %v302, 90
  %v320 = vpop.permute.xlu0 %319
  %321 = vrot.lane.b32.xlu0 %v303, 90
  %v322 = vpop.permute.xlu0 %321
  %323 = vrot.lane.b32.xlu0 %v304, 90
  %v324 = vpop.permute.xlu0 %323
  %325 = vrot.lane.b32.xlu0 %v305, 90
  %v326 = vpop.permute.xlu0 %325
  %327 = vrot.lane.b32.xlu0 %v306, 90
  %v328 = vpop.permute.xlu0 %327
  %329 = vrot.lane.b32.xlu0 %v307, 90
  %v330 = vpop.permute.xlu0 %329
  %331 = vrot.lane.b32.xlu0 %v308, 90
  %v332 = vpop.permute.xlu0 %331
  %vm333 = vcmask 736256
  %v334 = vsel %vm333, %v318, %v320
  %v335 = vsel %vm333, %v322, %v324
  %v336 = vsel %vm333, %v326, %v328
  %v337 = vsel %vm333, %v330, %v332
  %vm342 = vcmask 1048064
  %343 = vst.msk [vmem:[#allocation4] sm:$0xff] %vm342, %v334
  %344 = vst.msk [vmem:[#allocation4 + $0x8] sm:$0xff] %vm342, %v335
  %345 = vst.msk [vmem:[#allocation4 + $0x10] sm:$0xff] %vm342, %v336
  %346 = vst.msk [vmem:[#allocation4 + $0x18] sm:$0xff] %vm342, %v337
  %v347 = vld [vmem:[#allocation3] sm:$0xff]
  %v348 = vld [vmem:[#allocation3 + $0x10] sm:$0xff]
  %v349 = vld [vmem:[#allocation3 + $0x20] sm:$0xff]
  %v350 = vld [vmem:[#allocation3 + $0x30] sm:$0xff]
  %355 = vrot.lane.b32.xlu0 %v347, 127
  %v356 = vpop.permute.xlu0 %355
  %357 = vrot.lane.b32.xlu0 %v348, 127
  %v358 = vpop.permute.xlu0 %357
  %359 = vrot.lane.b32.xlu0 %v349, 127
  %v360 = vpop.permute.xlu0 %359
  %361 = vrot.lane.b32.xlu0 %v350, 127
  %v362 = vpop.permute.xlu0 %361
  %367 = vst.msk [vmem:[#allocation4 + $0x20] sm:$0xff] %vm296, %v356
  %368 = vst.msk [vmem:[#allocation4 + $0x28] sm:$0xff] %vm296, %v358
  %369 = vst.msk [vmem:[#allocation4 + $0x30] sm:$0xff] %vm296, %v360
  %370 = vst.msk [vmem:[#allocation4 + $0x38] sm:$0xff] %vm296, %v362
  %v371 = vld [vmem:[#allocation3] sm:$0xff]
  %v372 = vld [vmem:[#allocation3 + $0x8] sm:$0xff]
  %v373 = vld [vmem:[#allocation3 + $0x10] sm:$0xff]
  %v374 = vld [vmem:[#allocation3 + $0x18] sm:$0xff]
  %v375 = vld [vmem:[#allocation3 + $0x20] sm:$0xff]
  %v376 = vld [vmem:[#allocation3 + $0x28] sm:$0xff]
  %v377 = vld [vmem:[#allocation3 + $0x30] sm:$0xff]
  %v378 = vld [vmem:[#allocation3 + $0x38] sm:$0xff]
  %387 = vrot.lane.b32.xlu0 %v371, 89
  %v388 = vpop.permute.xlu0 %387
  %389 = vrot.lane.b32.xlu0 %v372, 89
  %v390 = vpop.permute.xlu0 %389
  %391 = vrot.lane.b32.xlu0 %v373, 89
  %v392 = vpop.permute.xlu0 %391
  %393 = vrot.lane.b32.xlu0 %v374, 89
  %v394 = vpop.permute.xlu0 %393
  %395 = vrot.lane.b32.xlu0 %v375, 89
  %v396 = vpop.permute.xlu0 %395
  %397 = vrot.lane.b32.xlu0 %v376, 89
  %v398 = vpop.permute.xlu0 %397
  %399 = vrot.lane.b32.xlu0 %v377, 89
  %v400 = vpop.permute.xlu0 %399
  %401 = vrot.lane.b32.xlu0 %v378, 89
  %v402 = vpop.permute.xlu0 %401
  %vm403 = vcmask 728064
  %v404 = vsel %vm403, %v388, %v390
  %v405 = vsel %vm403, %v392, %v394
  %v406 = vsel %vm403, %v396, %v398
  %v407 = vsel %vm403, %v400, %v402
  %412 = vst.msk [vmem:[#allocation4 + $0x20] sm:$0xff] %vm342, %v404
  %413 = vst.msk [vmem:[#allocation4 + $0x28] sm:$0xff] %vm342, %v405
  %414 = vst.msk [vmem:[#allocation4 + $0x30] sm:$0xff] %vm342, %v406
  %415 = vst.msk [vmem:[#allocation4 + $0x38] sm:$0xff] %vm342, %v407
  %v416 = vld [vmem:[#allocation3] sm:$0xff]
  %v417 = vld [vmem:[#allocation3 + $0x10] sm:$0xff]
  %v418 = vld [vmem:[#allocation3 + $0x20] sm:$0xff]
  %v419 = vld [vmem:[#allocation3 + $0x30] sm:$0xff]
  %424 = vrot.lane.b32.xlu0 %v416, 126
  %v425 = vpop.permute.xlu0 %424
  %426 = vrot.lane.b32.xlu0 %v417, 126
  %v427 = vpop.permute.xlu0 %426
  %428 = vrot.lane.b32.xlu0 %v418, 126
  %v429 = vpop.permute.xlu0 %428
  %430 = vrot.lane.b32.xlu0 %v419, 126
  %v431 = vpop.permute.xlu0 %430
  %436 = vst.msk [vmem:[#allocation4 + $0x40] sm:$0xff] %vm296, %v425
  %437 = vst.msk [vmem:[#allocation4 + $0x48] sm:$0xff] %vm296, %v427
  %438 = vst.msk [vmem:[#allocation4 + $0x50] sm:$0xff] %vm296, %v429
  %439 = vst.msk [vmem:[#allocation4 + $0x58] sm:$0xff] %vm296, %v431
  %v440 = vld [vmem:[#allocation3] sm:$0xff]
  %v441 = vld [vmem:[#allocation3 + $0x8] sm:$0xff]
  %v442 = vld [vmem:[#allocation3 + $0x10] sm:$0xff]
  %v443 = vld [vmem:[#allocation3 + $0x18] sm:$0xff]
  %v444 = vld [vmem:[#allocation3 + $0x20] sm:$0xff]
  %v445 = vld [vmem:[#allocation3 + $0x28] sm:$0xff]
  %v446 = vld [vmem:[#allocation3 + $0x30] sm:$0xff]
  %v447 = vld [vmem:[#allocation3 + $0x38] sm:$0xff]
  %456 = vrot.lane.b32.xlu0 %v440, 88
  %v457 = vpop.permute.xlu0 %456
  %458 = vrot.lane.b32.xlu0 %v441, 88
  %v459 = vpop.permute.xlu0 %458
  %460 = vrot.lane.b32.xlu0 %v442, 88
  %v461 = vpop.permute.xlu0 %460
  %462 = vrot.lane.b32.xlu0 %v443, 88
  %v463 = vpop.permute.xlu0 %462
  %464 = vrot.lane.b32.xlu0 %v444, 88
  %v465 = vpop.permute.xlu0 %464
  %466 = vrot.lane.b32.xlu0 %v445, 88
  %v467 = vpop.permute.xlu0 %466
  %468 = vrot.lane.b32.xlu0 %v446, 88
  %v469 = vpop.permute.xlu0 %468
  %470 = vrot.lane.b32.xlu0 %v447, 88
  %v471 = vpop.permute.xlu0 %470
  %vm472 = vcmask 719872
  %v473 = vsel %vm472, %v457, %v459
  %v474 = vsel %vm472, %v461, %v463
  %v475 = vsel %vm472, %v465, %v467
  %v476 = vsel %vm472, %v469, %v471
  %481 = vst.msk [vmem:[#allocation4 + $0x40] sm:$0xff] %vm342, %v473
  %482 = vst.msk [vmem:[#allocation4 + $0x48] sm:$0xff] %vm342, %v474
  %483 = vst.msk [vmem:[#allocation4 + $0x50] sm:$0xff] %vm342, %v475
  %484 = vst.msk [vmem:[#allocation4 + $0x58] sm:$0xff] %vm342, %v476
  %v485 = vld [vmem:[#allocation3] sm:$0xff]
  %v486 = vld [vmem:[#allocation3 + $0x10] sm:$0xff]
  %v487 = vld [vmem:[#allocation3 + $0x20] sm:$0xff]
  %v488 = vld [vmem:[#allocation3 + $0x30] sm:$0xff]
  %493 = vrot.lane.b32.xlu0 %v485, 125
  %v494 = vpop.permute.xlu0 %493
  %495 = vrot.lane.b32.xlu0 %v486, 125
  %v496 = vpop.permute.xlu0 %495
  %497 = vrot.lane.b32.xlu0 %v487, 125
  %v498 = vpop.permute.xlu0 %497
  %499 = vrot.lane.b32.xlu0 %v488, 125
  %v500 = vpop.permute.xlu0 %499
  %505 = vst.msk [vmem:[#allocation4 + $0x60] sm:$0xff] %vm296, %v494
  %506 = vst.msk [vmem:[#allocation4 + $0x68] sm:$0xff] %vm296, %v496
  %507 = vst.msk [vmem:[#allocation4 + $0x70] sm:$0xff] %vm296, %v498
  %508 = vst.msk [vmem:[#allocation4 + $0x78] sm:$0xff] %vm296, %v500
  %v509 = vld [vmem:[#allocation3] sm:$0xff]
  %v510 = vld [vmem:[#allocation3 + $0x8] sm:$0xff]
  %v511 = vld [vmem:[#allocation3 + $0x10] sm:$0xff]
  %v512 = vld [vmem:[#allocation3 + $0x18] sm:$0xff]
  %v513 = vld [vmem:[#allocation3 + $0x20] sm:$0xff]
  %v514 = vld [vmem:[#allocation3 + $0x28] sm:$0xff]
  %v515 = vld [vmem:[#allocation3 + $0x30] sm:$0xff]
  %v516 = vld [vmem:[#allocation3 + $0x38] sm:$0xff]
  %525 = vrot.lane.b32.xlu0 %v509, 87
  %v526 = vpop.permute.xlu0 %525
  %527 = vrot.lane.b32.xlu0 %v510, 87
  %v528 = vpop.permute.xlu0 %527
  %529 = vrot.lane.b32.xlu0 %v511, 87
  %v530 = vpop.permute.xlu0 %529
  %531 = vrot.lane.b32.xlu0 %v512, 87
  %v532 = vpop.permute.xlu0 %531
  %533 = vrot.lane.b32.xlu0 %v513, 87
  %v534 = vpop.permute.xlu0 %533
  %535 = vrot.lane.b32.xlu0 %v514, 87
  %v536 = vpop.permute.xlu0 %535
  %537 = vrot.lane.b32.xlu0 %v515, 87
  %v538 = vpop.permute.xlu0 %537
  %539 = vrot.lane.b32.xlu0 %v516, 87
  %v540 = vpop.permute.xlu0 %539
  %vm541 = vcmask 711680
  %v542 = vsel %vm541, %v526, %v528
  %v543 = vsel %vm541, %v530, %v532
  %v544 = vsel %vm541, %v534, %v536
  %v545 = vsel %vm541, %v538, %v540
  %550 = vst.msk [vmem:[#allocation4 + $0x60] sm:$0xff] %vm342, %v542
  %551 = vst.msk [vmem:[#allocation4 + $0x68] sm:$0xff] %vm342, %v543
  %552 = vst.msk [vmem:[#allocation4 + $0x70] sm:$0xff] %vm342, %v544
  %553 = vst.msk [vmem:[#allocation4 + $0x78] sm:$0xff] %vm342, %v545
  %v554 = vld [vmem:[#allocation3] sm:$0xff]
  %v555 = vld [vmem:[#allocation3 + $0x10] sm:$0xff]
  %v556 = vld [vmem:[#allocation3 + $0x20] sm:$0xff]
  %v557 = vld [vmem:[#allocation3 + $0x30] sm:$0xff]
  %562 = vrot.lane.b32.xlu0 %v554, 124
  %v563 = vpop.permute.xlu0 %562
  %564 = vrot.lane.b32.xlu0 %v555, 124
  %v565 = vpop.permute.xlu0 %564
  %566 = vrot.lane.b32.xlu0 %v556, 124
  %v567 = vpop.permute.xlu0 %566
  %568 = vrot.lane.b32.xlu0 %v557, 124
  %v569 = vpop.permute.xlu0 %568
  %574 = vst.msk [vmem:[#allocation4 + $0x80] sm:$0xff] %vm296, %v563
  %575 = vst.msk [vmem:[#allocation4 + $0x88] sm:$0xff] %vm296, %v565
  %576 = vst.msk [vmem:[#allocation4 + $0x90] sm:$0xff] %vm296, %v567
  %577 = vst.msk [vmem:[#allocation4 + $0x98] sm:$0xff] %vm296, %v569
  %v578 = vld [vmem:[#allocation3] sm:$0xff]
  %v579 = vld [vmem:[#allocation3 + $0x8] sm:$0xff]
  %v580 = vld [vmem:[#allocation3 + $0x10] sm:$0xff]
  %v581 = vld [vmem:[#allocation3 + $0x18] sm:$0xff]
  %v582 = vld [vmem:[#allocation3 + $0x20] sm:$0xff]
  %v583 = vld [vmem:[#allocation3 + $0x28] sm:$0xff]
  %v584 = vld [vmem:[#allocation3 + $0x30] sm:$0xff]
  %v585 = vld [vmem:[#allocation3 + $0x38] sm:$0xff]
  %594 = vrot.lane.b32.xlu0 %v578, 86
  %v595 = vpop.permute.xlu0 %594
  %596 = vrot.lane.b32.xlu0 %v579, 86
  %v597 = vpop.permute.xlu0 %596
  %598 = vrot.lane.b32.xlu0 %v580, 86
  %v599 = vpop.permute.xlu0 %598
  %600 = vrot.lane.b32.xlu0 %v581, 86
  %v601 = vpop.permute.xlu0 %600
  %602 = vrot.lane.b32.xlu0 %v582, 86
  %v603 = vpop.permute.xlu0 %602
  %604 = vrot.lane.b32.xlu0 %v583, 86
  %v605 = vpop.permute.xlu0 %604
  %606 = vrot.lane.b32.xlu0 %v584, 86
  %v607 = vpop.permute.xlu0 %606
  %608 = vrot.lane.b32.xlu0 %v585, 86
  %v609 = vpop.permute.xlu0 %608
  %vm610 = vcmask 703488
  %v611 = vsel %vm610, %v595, %v597
  %v612 = vsel %vm610, %v599, %v601
  %v613 = vsel %vm610, %v603, %v605
  %v614 = vsel %vm610, %v607, %v609
  %619 = vst.msk [vmem:[#allocation4 + $0x80] sm:$0xff] %vm342, %v611
  %620 = vst.msk [vmem:[#allocation4 + $0x88] sm:$0xff] %vm342, %v612
  %621 = vst.msk [vmem:[#allocation4 + $0x90] sm:$0xff] %vm342, %v613
  %622 = vst.msk [vmem:[#allocation4 + $0x98] sm:$0xff] %vm342, %v614
  %v623 = vld [vmem:[#allocation3] sm:$0xff]
  %v624 = vld [vmem:[#allocation3 + $0x10] sm:$0xff]
  %v625 = vld [vmem:[#allocation3 + $0x20] sm:$0xff]
  %v626 = vld [vmem:[#allocation3 + $0x30] sm:$0xff]
  %631 = vrot.lane.b32.xlu0 %v623, 123
  %v632 = vpop.permute.xlu0 %631
  %633 = vrot.lane.b32.xlu0 %v624, 123
  %v634 = vpop.permute.xlu0 %633
  %635 = vrot.lane.b32.xlu0 %v625, 123
  %v636 = vpop.permute.xlu0 %635
  %637 = vrot.lane.b32.xlu0 %v626, 123
  %v638 = vpop.permute.xlu0 %637
  %643 = vst.msk [vmem:[#allocation4 + $0xa0] sm:$0xff] %vm296, %v632
  %644 = vst.msk [vmem:[#allocation4 + $0xa8] sm:$0xff] %vm296, %v634
  %645 = vst.msk [vmem:[#allocation4 + $0xb0] sm:$0xff] %vm296, %v636
  %646 = vst.msk [vmem:[#allocation4 + $0xb8] sm:$0xff] %vm296, %v638
  %v647 = vld [vmem:[#allocation3] sm:$0xff]
  %v648 = vld [vmem:[#allocation3 + $0x8] sm:$0xff]
  %v649 = vld [vmem:[#allocation3 + $0x10] sm:$0xff]
  %v650 = vld [vmem:[#allocation3 + $0x18] sm:$0xff]
  %v651 = vld [vmem:[#allocation3 + $0x20] sm:$0xff]
  %v652 = vld [vmem:[#allocation3 + $0x28] sm:$0xff]
  %v653 = vld [vmem:[#allocation3 + $0x30] sm:$0xff]
  %v654 = vld [vmem:[#allocation3 + $0x38] sm:$0xff]
  %663 = vrot.lane.b32.xlu0 %v647, 85
  %v664 = vpop.permute.xlu0 %663
  %665 = vrot.lane.b32.xlu0 %v648, 85
  %v666 = vpop.permute.xlu0 %665
  %667 = vrot.lane.b32.xlu0 %v649, 85
  %v668 = vpop.permute.xlu0 %667
  %669 = vrot.lane.b32.xlu0 %v650, 85
  %v670 = vpop.permute.xlu0 %669
  %671 = vrot.lane.b32.xlu0 %v651, 85
  %v672 = vpop.permute.xlu0 %671
  %673 = vrot.lane.b32.xlu0 %v652, 85
  %v674 = vpop.permute.xlu0 %673
  %675 = vrot.lane.b32.xlu0 %v653, 85
  %v676 = vpop.permute.xlu0 %675
  %677 = vrot.lane.b32.xlu0 %v654, 85
  %v678 = vpop.permute.xlu0 %677
  %vm679 = vcmask 695296
  %v680 = vsel %vm679, %v664, %v666
  %v681 = vsel %vm679, %v668, %v670
  %v682 = vsel %vm679, %v672, %v674
  %v683 = vsel %vm679, %v676, %v678
  %688 = vst.msk [vmem:[#allocation4 + $0xa0] sm:$0xff] %vm342, %v680
  %689 = vst.msk [vmem:[#allocation4 + $0xa8] sm:$0xff] %vm342, %v681
  %690 = vst.msk [vmem:[#allocation4 + $0xb0] sm:$0xff] %vm342, %v682
  %691 = vst.msk [vmem:[#allocation4 + $0xb8] sm:$0xff] %vm342, %v683
  %v692 = vld [vmem:[#allocation3] sm:$0xff]
  %v693 = vld [vmem:[#allocation3 + $0x10] sm:$0xff]
  %v694 = vld [vmem:[#allocation3 + $0x20] sm:$0xff]
  %v695 = vld [vmem:[#allocation3 + $0x30] sm:$0xff]
  %700 = vrot.lane.b32.xlu0 %v692, 122
  %v701 = vpop.permute.xlu0 %700
  %702 = vrot.lane.b32.xlu0 %v693, 122
  %v703 = vpop.permute.xlu0 %702
  %704 = vrot.lane.b32.xlu0 %v694, 122
  %v705 = vpop.permute.xlu0 %704
  %706 = vrot.lane.b32.xlu0 %v695, 122
  %v707 = vpop.permute.xlu0 %706
  %712 = vst.msk [vmem:[#allocation4 + $0xc0] sm:$0xff] %vm296, %v701
  %713 = vst.msk [vmem:[#allocation4 + $0xc8] sm:$0xff] %vm296, %v703
  %714 = vst.msk [vmem:[#allocation4 + $0xd0] sm:$0xff] %vm296, %v705
  %715 = vst.msk [vmem:[#allocation4 + $0xd8] sm:$0xff] %vm296, %v707
  %v716 = vld [vmem:[#allocation3] sm:$0xff]
  %v717 = vld [vmem:[#allocation3 + $0x8] sm:$0xff]
  %v718 = vld [vmem:[#allocation3 + $0x10] sm:$0xff]
  %v719 = vld [vmem:[#allocation3 + $0x18] sm:$0xff]
  %v720 = vld [vmem:[#allocation3 + $0x20] sm:$0xff]
  %v721 = vld [vmem:[#allocation3 + $0x28] sm:$0xff]
  %v722 = vld [vmem:[#allocation3 + $0x30] sm:$0xff]
  %v723 = vld [vmem:[#allocation3 + $0x38] sm:$0xff]
  %732 = vrot.lane.b32.xlu0 %v716, 84
  %v733 = vpop.permute.xlu0 %732
  %734 = vrot.lane.b32.xlu0 %v717, 84
  %v735 = vpop.permute.xlu0 %734
  %736 = vrot.lane.b32.xlu0 %v718, 84
  %v737 = vpop.permute.xlu0 %736
  %738 = vrot.lane.b32.xlu0 %v719, 84
  %v739 = vpop.permute.xlu0 %738
  %740 = vrot.lane.b32.xlu0 %v720, 84
  %v741 = vpop.permute.xlu0 %740
  %742 = vrot.lane.b32.xlu0 %v721, 84
  %v743 = vpop.permute.xlu0 %742
  %744 = vrot.lane.b32.xlu0 %v722, 84
  %v745 = vpop.permute.xlu0 %744
  %746 = vrot.lane.b32.xlu0 %v723, 84
  %v747 = vpop.permute.xlu0 %746
  %vm748 = vcmask 687104
  %v749 = vsel %vm748, %v733, %v735
  %v750 = vsel %vm748, %v737, %v739
  %v751 = vsel %vm748, %v741, %v743
  %v752 = vsel %vm748, %v745, %v747
  %757 = vst.msk [vmem:[#allocation4 + $0xc0] sm:$0xff] %vm342, %v749
  %758 = vst.msk [vmem:[#allocation4 + $0xc8] sm:$0xff] %vm342, %v750
  %759 = vst.msk [vmem:[#allocation4 + $0xd0] sm:$0xff] %vm342, %v751
  %760 = vst.msk [vmem:[#allocation4 + $0xd8] sm:$0xff] %vm342, %v752
  %v761 = vld [vmem:[#allocation3] sm:$0xff]
  %v762 = vld [vmem:[#allocation3 + $0x10] sm:$0xff]
  %v763 = vld [vmem:[#allocation3 + $0x20] sm:$0xff]
  %v764 = vld [vmem:[#allocation3 + $0x30] sm:$0xff]
  %769 = vrot.lane.b32.xlu0 %v761, 121
  %v770 = vpop.permute.xlu0 %769
  %771 = vrot.lane.b32.xlu0 %v762, 121
  %v772 = vpop.permute.xlu0 %771
  %773 = vrot.lane.b32.xlu0 %v763, 121
  %v774 = vpop.permute.xlu0 %773
  %775 = vrot.lane.b32.xlu0 %v764, 121
  %v776 = vpop.permute.xlu0 %775
  %781 = vst.msk [vmem:[#allocation4 + $0xe0] sm:$0xff] %vm296, %v770
  %782 = vst.msk [vmem:[#allocation4 + $0xe8] sm:$0xff] %vm296, %v772
  %783 = vst.msk [vmem:[#allocation4 + $0xf0] sm:$0xff] %vm296, %v774
  %784 = vst.msk [vmem:[#allocation4 + $0xf8] sm:$0xff] %vm296, %v776
  %v785 = vld [vmem:[#allocation3] sm:$0xff]
  %v786 = vld [vmem:[#allocation3 + $0x8] sm:$0xff]
  %v787 = vld [vmem:[#allocation3 + $0x10] sm:$0xff]
  %v788 = vld [vmem:[#allocation3 + $0x18] sm:$0xff]
  %v789 = vld [vmem:[#allocation3 + $0x20] sm:$0xff]
  %v790 = vld [vmem:[#allocation3 + $0x28] sm:$0xff]
  %v791 = vld [vmem:[#allocation3 + $0x30] sm:$0xff]
  %v792 = vld [vmem:[#allocation3 + $0x38] sm:$0xff]
  %801 = vrot.lane.b32.xlu0 %v785, 83
  %v802 = vpop.permute.xlu0 %801
  %803 = vrot.lane.b32.xlu0 %v786, 83
  %v804 = vpop.permute.xlu0 %803
  %805 = vrot.lane.b32.xlu0 %v787, 83
  %v806 = vpop.permute.xlu0 %805
  %807 = vrot.lane.b32.xlu0 %v788, 83
  %v808 = vpop.permute.xlu0 %807
  %809 = vrot.lane.b32.xlu0 %v789, 83
  %v810 = vpop.permute.xlu0 %809
  %811 = vrot.lane.b32.xlu0 %v790, 83
  %v812 = vpop.permute.xlu0 %811
  %813 = vrot.lane.b32.xlu0 %v791, 83
  %v814 = vpop.permute.xlu0 %813
  %815 = vrot.lane.b32.xlu0 %v792, 83
  %v816 = vpop.permute.xlu0 %815
  %vm817 = vcmask 678912
  %v818 = vsel %vm817, %v802, %v804
  %v819 = vsel %vm817, %v806, %v808
  %v820 = vsel %vm817, %v810, %v812
  %v821 = vsel %vm817, %v814, %v816
  %826 = vst.msk [vmem:[#allocation4 + $0xe0] sm:$0xff] %vm342, %v818
  %827 = vst.msk [vmem:[#allocation4 + $0xe8] sm:$0xff] %vm342, %v819
  %828 = vst.msk [vmem:[#allocation4 + $0xf0] sm:$0xff] %vm342, %v820
  %829 = vst.msk [vmem:[#allocation4 + $0xf8] sm:$0xff] %vm342, %v821
  %v830 = vld [vmem:[#allocation3] sm:$0xff]
  %v831 = vld [vmem:[#allocation3 + $0x10] sm:$0xff]
  %v832 = vld [vmem:[#allocation3 + $0x20] sm:$0xff]
  %v833 = vld [vmem:[#allocation3 + $0x30] sm:$0xff]
  %838 = vrot.lane.b32.xlu0 %v830, 120
  %v839 = vpop.permute.xlu0 %838
  %840 = vrot.lane.b32.xlu0 %v831, 120
  %v841 = vpop.permute.xlu0 %840
  %842 = vrot.lane.b32.xlu0 %v832, 120
  %v843 = vpop.permute.xlu0 %842
  %844 = vrot.lane.b32.xlu0 %v833, 120
  %v845 = vpop.permute.xlu0 %844
  %850 = vst.msk [vmem:[#allocation4 + $0x100] sm:$0xff] %vm296, %v839
  %851 = vst.msk [vmem:[#allocation4 + $0x108] sm:$0xff] %vm296, %v841
  %852 = vst.msk [vmem:[#allocation4 + $0x110] sm:$0xff] %vm296, %v843
  %853 = vst.msk [vmem:[#allocation4 + $0x118] sm:$0xff] %vm296, %v845
  %v854 = vld [vmem:[#allocation3] sm:$0xff]
  %v855 = vld [vmem:[#allocation3 + $0x8] sm:$0xff]
  %v856 = vld [vmem:[#allocation3 + $0x10] sm:$0xff]
  %v857 = vld [vmem:[#allocation3 + $0x18] sm:$0xff]
  %v858 = vld [vmem:[#allocation3 + $0x20] sm:$0xff]
  %v859 = vld [vmem:[#allocation3 + $0x28] sm:$0xff]
  %v860 = vld [vmem:[#allocation3 + $0x30] sm:$0xff]
  %v861 = vld [vmem:[#allocation3 + $0x38] sm:$0xff]
  %870 = vrot.lane.b32.xlu0 %v854, 82
  %v871 = vpop.permute.xlu0 %870
  %872 = vrot.lane.b32.xlu0 %v855, 82
  %v873 = vpop.permute.xlu0 %872
  %874 = vrot.lane.b32.xlu0 %v856, 82
  %v875 = vpop.permute.xlu0 %874
  %876 = vrot.lane.b32.xlu0 %v857, 82
  %v877 = vpop.permute.xlu0 %876
  %878 = vrot.lane.b32.xlu0 %v858, 82
  %v879 = vpop.permute.xlu0 %878
  %880 = vrot.lane.b32.xlu0 %v859, 82
  %v881 = vpop.permute.xlu0 %880
  %882 = vrot.lane.b32.xlu0 %v860, 82
  %v883 = vpop.permute.xlu0 %882
  %884 = vrot.lane.b32.xlu0 %v861, 82
  %v885 = vpop.permute.xlu0 %884
  %vm886 = vcmask 670720
  %v887 = vsel %vm886, %v871, %v873
  %v888 = vsel %vm886, %v875, %v877
  %v889 = vsel %vm886, %v879, %v881
  %v890 = vsel %vm886, %v883, %v885
  %895 = vst.msk [vmem:[#allocation4 + $0x100] sm:$0xff] %vm342, %v887
  %896 = vst.msk [vmem:[#allocation4 + $0x108] sm:$0xff] %vm342, %v888
  %897 = vst.msk [vmem:[#allocation4 + $0x110] sm:$0xff] %vm342, %v889
  %898 = vst.msk [vmem:[#allocation4 + $0x118] sm:$0xff] %vm342, %v890
  %v899 = vld [vmem:[#allocation3] sm:$0xff]
  %v900 = vld [vmem:[#allocation3 + $0x10] sm:$0xff]
  %v901 = vld [vmem:[#allocation3 + $0x20] sm:$0xff]
  %v902 = vld [vmem:[#allocation3 + $0x30] sm:$0xff]
  %907 = vrot.lane.b32.xlu0 %v899, 119
  %v908 = vpop.permute.xlu0 %907
  %909 = vrot.lane.b32.xlu0 %v900, 119
  %v910 = vpop.permute.xlu0 %909
  %911 = vrot.lane.b32.xlu0 %v901, 119
  %v912 = vpop.permute.xlu0 %911
  %913 = vrot.lane.b32.xlu0 %v902, 119
  %v914 = vpop.permute.xlu0 %913
  %919 = vst.msk [vmem:[#allocation4 + $0x120] sm:$0xff] %vm296, %v908
  %920 = vst.msk [vmem:[#allocation4 + $0x128] sm:$0xff] %vm296, %v910
  %921 = vst.msk [vmem:[#allocation4 + $0x130] sm:$0xff] %vm296, %v912
  %922 = vst.msk [vmem:[#allocation4 + $0x138] sm:$0xff] %vm296, %v914
  %v923 = vld [vmem:[#allocation3] sm:$0xff]
  %v924 = vld [vmem:[#allocation3 + $0x8] sm:$0xff]
  %v925 = vld [vmem:[#allocation3 + $0x10] sm:$0xff]
  %v926 = vld [vmem:[#allocation3 + $0x18] sm:$0xff]
  %v927 = vld [vmem:[#allocation3 + $0x20] sm:$0xff]
  %v928 = vld [vmem:[#allocation3 + $0x28] sm:$0xff]
  %v929 = vld [vmem:[#allocation3 + $0x30] sm:$0xff]
  %v930 = vld [vmem:[#allocation3 + $0x38] sm:$0xff]
  %939 = vrot.lane.b32.xlu0 %v923, 81
  %v940 = vpop.permute.xlu0 %939
  %941 = vrot.lane.b32.xlu0 %v924, 81
  %v942 = vpop.permute.xlu0 %941
  %943 = vrot.lane.b32.xlu0 %v925, 81
  %v944 = vpop.permute.xlu0 %943
  %945 = vrot.lane.b32.xlu0 %v926, 81
  %v946 = vpop.permute.xlu0 %945
  %947 = vrot.lane.b32.xlu0 %v927, 81
  %v948 = vpop.permute.xlu0 %947
  %949 = vrot.lane.b32.xlu0 %v928, 81
  %v950 = vpop.permute.xlu0 %949
  %951 = vrot.lane.b32.xlu0 %v929, 81
  %v952 = vpop.permute.xlu0 %951
  %953 = vrot.lane.b32.xlu0 %v930, 81
  %v954 = vpop.permute.xlu0 %953
  %vm955 = vcmask 662528
  %v956 = vsel %vm955, %v940, %v942
  %v957 = vsel %vm955, %v944, %v946
  %v958 = vsel %vm955, %v948, %v950
  %v959 = vsel %vm955, %v952, %v954
  %964 = vst.msk [vmem:[#allocation4 + $0x120] sm:$0xff] %vm342, %v956
  %965 = vst.msk [vmem:[#allocation4 + $0x128] sm:$0xff] %vm342, %v957
  %966 = vst.msk [vmem:[#allocation4 + $0x130] sm:$0xff] %vm342, %v958
  %967 = vst.msk [vmem:[#allocation4 + $0x138] sm:$0xff] %vm342, %v959
  %v968 = vld [vmem:[#allocation3] sm:$0xff]
  %v969 = vld [vmem:[#allocation3 + $0x10] sm:$0xff]
  %v970 = vld [vmem:[#allocation3 + $0x20] sm:$0xff]
  %v971 = vld [vmem:[#allocation3 + $0x30] sm:$0xff]
  %976 = vrot.lane.b32.xlu0 %v968, 118
  %v977 = vpop.permute.xlu0 %976
  %978 = vrot.lane.b32.xlu0 %v969, 118
  %v979 = vpop.permute.xlu0 %978
  %980 = vrot.lane.b32.xlu0 %v970, 118
  %v981 = vpop.permute.xlu0 %980
  %982 = vrot.lane.b32.xlu0 %v971, 118
  %v983 = vpop.permute.xlu0 %982
  %988 = vst.msk [vmem:[#allocation4 + $0x140] sm:$0xff] %vm296, %v977
  %989 = vst.msk [vmem:[#allocation4 + $0x148] sm:$0xff] %vm296, %v979
  %990 = vst.msk [vmem:[#allocation4 + $0x150] sm:$0xff] %vm296, %v981
  %991 = vst.msk [vmem:[#allocation4 + $0x158] sm:$0xff] %vm296, %v983
  %v992 = vld [vmem:[#allocation3] sm:$0xff]
  %v993 = vld [vmem:[#allocation3 + $0x8] sm:$0xff]
  %v994 = vld [vmem:[#allocation3 + $0x10] sm:$0xff]
  %v995 = vld [vmem:[#allocation3 + $0x18] sm:$0xff]
  %v996 = vld [vmem:[#allocation3 + $0x20] sm:$0xff]
  %v997 = vld [vmem:[#allocation3 + $0x28] sm:$0xff]
  %v998 = vld [vmem:[#allocation3 + $0x30] sm:$0xff]
  %v999 = vld [vmem:[#allocation3 + $0x38] sm:$0xff]
  %1008 = vrot.lane.b32.xlu0 %v992, 80
  %v1009 = vpop.permute.xlu0 %1008
  %1010 = vrot.lane.b32.xlu0 %v993, 80
  %v1011 = vpop.permute.xlu0 %1010
  %1012 = vrot.lane.b32.xlu0 %v994, 80
  %v1013 = vpop.permute.xlu0 %1012
  %1014 = vrot.lane.b32.xlu0 %v995, 80
  %v1015 = vpop.permute.xlu0 %1014
  %1016 = vrot.lane.b32.xlu0 %v996, 80
  %v1017 = vpop.permute.xlu0 %1016
  %1018 = vrot.lane.b32.xlu0 %v997, 80
  %v1019 = vpop.permute.xlu0 %1018
  %1020 = vrot.lane.b32.xlu0 %v998, 80
  %v1021 = vpop.permute.xlu0 %1020
  %1022 = vrot.lane.b32.xlu0 %v999, 80
  %v1023 = vpop.permute.xlu0 %1022
  %vm1024 = vcmask 654336
  %v1025 = vsel %vm1024, %v1009, %v1011
  %v1026 = vsel %vm1024, %v1013, %v1015
  %v1027 = vsel %vm1024, %v1017, %v1019
  %v1028 = vsel %vm1024, %v1021, %v1023
  %1033 = vst.msk [vmem:[#allocation4 + $0x140] sm:$0xff] %vm342, %v1025
  %1034 = vst.msk [vmem:[#allocation4 + $0x148] sm:$0xff] %vm342, %v1026
  %1035 = vst.msk [vmem:[#allocation4 + $0x150] sm:$0xff] %vm342, %v1027
  %1036 = vst.msk [vmem:[#allocation4 + $0x158] sm:$0xff] %vm342, %v1028
  %v1037 = vld [vmem:[#allocation3] sm:$0xff]
  %v1038 = vld [vmem:[#allocation3 + $0x10] sm:$0xff]
  %v1039 = vld [vmem:[#allocation3 + $0x20] sm:$0xff]
  %v1040 = vld [vmem:[#allocation3 + $0x30] sm:$0xff]
  %1045 = vrot.lane.b32.xlu0 %v1037, 117
  %v1046 = vpop.permute.xlu0 %1045
  %1047 = vrot.lane.b32.xlu0 %v1038, 117
  %v1048 = vpop.permute.xlu0 %1047
  %1049 = vrot.lane.b32.xlu0 %v1039, 117
  %v1050 = vpop.permute.xlu0 %1049
  %1051 = vrot.lane.b32.xlu0 %v1040, 117
  %v1052 = vpop.permute.xlu0 %1051
  %1057 = vst.msk [vmem:[#allocation4 + $0x160] sm:$0xff] %vm296, %v1046
  %1058 = vst.msk [vmem:[#allocation4 + $0x168] sm:$0xff] %vm296, %v1048
  %1059 = vst.msk [vmem:[#allocation4 + $0x170] sm:$0xff] %vm296, %v1050
  %1060 = vst.msk [vmem:[#allocation4 + $0x178] sm:$0xff] %vm296, %v1052
  %v1061 = vld [vmem:[#allocation3] sm:$0xff]
  %v1062 = vld [vmem:[#allocation3 + $0x8] sm:$0xff]
  %v1063 = vld [vmem:[#allocation3 + $0x10] sm:$0xff]
  %v1064 = vld [vmem:[#allocation3 + $0x18] sm:$0xff]
  %v1065 = vld [vmem:[#allocation3 + $0x20] sm:$0xff]
  %v1066 = vld [vmem:[#allocation3 + $0x28] sm:$0xff]
  %v1067 = vld [vmem:[#allocation3 + $0x30] sm:$0xff]
  %v1068 = vld [vmem:[#allocation3 + $0x38] sm:$0xff]
  %1077 = vrot.lane.b32.xlu0 %v1061, 79
  %v1078 = vpop.permute.xlu0 %1077
  %1079 = vrot.lane.b32.xlu0 %v1062, 79
  %v1080 = vpop.permute.xlu0 %1079
  %1081 = vrot.lane.b32.xlu0 %v1063, 79
  %v1082 = vpop.permute.xlu0 %1081
  %1083 = vrot.lane.b32.xlu0 %v1064, 79
  %v1084 = vpop.permute.xlu0 %1083
  %1085 = vrot.lane.b32.xlu0 %v1065, 79
  %v1086 = vpop.permute.xlu0 %1085
  %1087 = vrot.lane.b32.xlu0 %v1066, 79
  %v1088 = vpop.permute.xlu0 %1087
  %1089 = vrot.lane.b32.xlu0 %v1067, 79
  %v1090 = vpop.permute.xlu0 %1089
  %1091 = vrot.lane.b32.xlu0 %v1068, 79
  %v1092 = vpop.permute.xlu0 %1091
  %vm1093 = vcmask 646144
  %v1094 = vsel %vm1093, %v1078, %v1080
  %v1095 = vsel %vm1093, %v1082, %v1084
  %v1096 = vsel %vm1093, %v1086, %v1088
  %v1097 = vsel %vm1093, %v1090, %v1092
  %1102 = vst.msk [vmem:[#allocation4 + $0x160] sm:$0xff] %vm342, %v1094
  %1103 = vst.msk [vmem:[#allocation4 + $0x168] sm:$0xff] %vm342, %v1095
  %1104 = vst.msk [vmem:[#allocation4 + $0x170] sm:$0xff] %vm342, %v1096
  %1105 = vst.msk [vmem:[#allocation4 + $0x178] sm:$0xff] %vm342, %v1097
  %v1106 = vld [vmem:[#allocation3] sm:$0xff]
  %v1107 = vld [vmem:[#allocation3 + $0x10] sm:$0xff]
  %v1108 = vld [vmem:[#allocation3 + $0x20] sm:$0xff]
  %v1109 = vld [vmem:[#allocation3 + $0x30] sm:$0xff]
  %1114 = vrot.lane.b32.xlu0 %v1106, 116
  %v1115 = vpop.permute.xlu0 %1114
  %1116 = vrot.lane.b32.xlu0 %v1107, 116
  %v1117 = vpop.permute.xlu0 %1116
  %1118 = vrot.lane.b32.xlu0 %v1108, 116
  %v1119 = vpop.permute.xlu0 %1118
  %1120 = vrot.lane.b32.xlu0 %v1109, 116
  %v1121 = vpop.permute.xlu0 %1120
  %1126 = vst.msk [vmem:[#allocation4 + $0x180] sm:$0xff] %vm296, %v1115
  %1127 = vst.msk [vmem:[#allocation4 + $0x188] sm:$0xff] %vm296, %v1117
  %1128 = vst.msk [vmem:[#allocation4 + $0x190] sm:$0xff] %vm296, %v1119
  %1129 = vst.msk [vmem:[#allocation4 + $0x198] sm:$0xff] %vm296, %v1121
  %v1130 = vld [vmem:[#allocation3] sm:$0xff]
  %v1131 = vld [vmem:[#allocation3 + $0x8] sm:$0xff]
  %v1132 = vld [vmem:[#allocation3 + $0x10] sm:$0xff]
  %v1133 = vld [vmem:[#allocation3 + $0x18] sm:$0xff]
  %v1134 = vld [vmem:[#allocation3 + $0x20] sm:$0xff]
  %v1135 = vld [vmem:[#allocation3 + $0x28] sm:$0xff]
  %v1136 = vld [vmem:[#allocation3 + $0x30] sm:$0xff]
  %v1137 = vld [vmem:[#allocation3 + $0x38] sm:$0xff]
  %1146 = vrot.lane.b32.xlu0 %v1130, 78
  %v1147 = vpop.permute.xlu0 %1146
  %1148 = vrot.lane.b32.xlu0 %v1131, 78
  %v1149 = vpop.permute.xlu0 %1148
  %1150 = vrot.lane.b32.xlu0 %v1132, 78
  %v1151 = vpop.permute.xlu0 %1150
  %1152 = vrot.lane.b32.xlu0 %v1133, 78
  %v1153 = vpop.permute.xlu0 %1152
  %1154 = vrot.lane.b32.xlu0 %v1134, 78
  %v1155 = vpop.permute.xlu0 %1154
  %1156 = vrot.lane.b32.xlu0 %v1135, 78
  %v1157 = vpop.permute.xlu0 %1156
  %1158 = vrot.lane.b32.xlu0 %v1136, 78
  %v1159 = vpop.permute.xlu0 %1158
  %1160 = vrot.lane.b32.xlu0 %v1137, 78
  %v1161 = vpop.permute.xlu0 %1160
  %vm1162 = vcmask 637952
  %v1163 = vsel %vm1162, %v1147, %v1149
  %v1164 = vsel %vm1162, %v1151, %v1153
  %v1165 = vsel %vm1162, %v1155, %v1157
  %v1166 = vsel %vm1162, %v1159, %v1161
  %1171 = vst.msk [vmem:[#allocation4 + $0x180] sm:$0xff] %vm342, %v1163
  %1172 = vst.msk [vmem:[#allocation4 + $0x188] sm:$0xff] %vm342, %v1164
  %1173 = vst.msk [vmem:[#allocation4 + $0x190] sm:$0xff] %vm342, %v1165
  %1174 = vst.msk [vmem:[#allocation4 + $0x198] sm:$0xff] %vm342, %v1166
  %v1175 = vld [vmem:[#allocation3] sm:$0xff]
  %v1176 = vld [vmem:[#allocation3 + $0x10] sm:$0xff]
  %v1177 = vld [vmem:[#allocation3 + $0x20] sm:$0xff]
  %v1178 = vld [vmem:[#allocation3 + $0x30] sm:$0xff]
  %1183 = vrot.lane.b32.xlu0 %v1175, 115
  %v1184 = vpop.permute.xlu0 %1183
  %1185 = vrot.lane.b32.xlu0 %v1176, 115
  %v1186 = vpop.permute.xlu0 %1185
  %1187 = vrot.lane.b32.xlu0 %v1177, 115
  %v1188 = vpop.permute.xlu0 %1187
  %1189 = vrot.lane.b32.xlu0 %v1178, 115
  %v1190 = vpop.permute.xlu0 %1189
  %1195 = vst.msk [vmem:[#allocation4 + $0x1a0] sm:$0xff] %vm296, %v1184
  %1196 = vst.msk [vmem:[#allocation4 + $0x1a8] sm:$0xff] %vm296, %v1186
  %1197 = vst.msk [vmem:[#allocation4 + $0x1b0] sm:$0xff] %vm296, %v1188
  %1198 = vst.msk [vmem:[#allocation4 + $0x1b8] sm:$0xff] %vm296, %v1190
  %v1199 = vld [vmem:[#allocation3] sm:$0xff]
  %v1200 = vld [vmem:[#allocation3 + $0x8] sm:$0xff]
  %v1201 = vld [vmem:[#allocation3 + $0x10] sm:$0xff]
  %v1202 = vld [vmem:[#allocation3 + $0x18] sm:$0xff]
  %v1203 = vld [vmem:[#allocation3 + $0x20] sm:$0xff]
  %v1204 = vld [vmem:[#allocation3 + $0x28] sm:$0xff]
  %v1205 = vld [vmem:[#allocation3 + $0x30] sm:$0xff]
  %v1206 = vld [vmem:[#allocation3 + $0x38] sm:$0xff]
  %1215 = vrot.lane.b32.xlu0 %v1199, 77
  %v1216 = vpop.permute.xlu0 %1215
  %1217 = vrot.lane.b32.xlu0 %v1200, 77
  %v1218 = vpop.permute.xlu0 %1217
  %1219 = vrot.lane.b32.xlu0 %v1201, 77
  %v1220 = vpop.permute.xlu0 %1219
  %1221 = vrot.lane.b32.xlu0 %v1202, 77
  %v1222 = vpop.permute.xlu0 %1221
  %1223 = vrot.lane.b32.xlu0 %v1203, 77
  %v1224 = vpop.permute.xlu0 %1223
  %1225 = vrot.lane.b32.xlu0 %v1204, 77
  %v1226 = vpop.permute.xlu0 %1225
  %1227 = vrot.lane.b32.xlu0 %v1205, 77
  %v1228 = vpop.permute.xlu0 %1227
  %1229 = vrot.lane.b32.xlu0 %v1206, 77
  %v1230 = vpop.permute.xlu0 %1229
  %vm1231 = vcmask 629760
  %v1232 = vsel %vm1231, %v1216, %v1218
  %v1233 = vsel %vm1231, %v1220, %v1222
  %v1234 = vsel %vm1231, %v1224, %v1226
  %v1235 = vsel %vm1231, %v1228, %v1230
  %1240 = vst.msk [vmem:[#allocation4 + $0x1a0] sm:$0xff] %vm342, %v1232
  %1241 = vst.msk [vmem:[#allocation4 + $0x1a8] sm:$0xff] %vm342, %v1233
  %1242 = vst.msk [vmem:[#allocation4 + $0x1b0] sm:$0xff] %vm342, %v1234
  %1243 = vst.msk [vmem:[#allocation4 + $0x1b8] sm:$0xff] %vm342, %v1235
  %v1244 = vld [vmem:[#allocation3] sm:$0xff]
  %v1245 = vld [vmem:[#allocation3 + $0x10] sm:$0xff]
  %v1246 = vld [vmem:[#allocation3 + $0x20] sm:$0xff]
  %v1247 = vld [vmem:[#allocation3 + $0x30] sm:$0xff]
  %1252 = vrot.lane.b32.xlu0 %v1244, 114
  %v1253 = vpop.permute.xlu0 %1252
  %1254 = vrot.lane.b32.xlu0 %v1245, 114
  %v1255 = vpop.permute.xlu0 %1254
  %1256 = vrot.lane.b32.xlu0 %v1246, 114
  %v1257 = vpop.permute.xlu0 %1256
  %1258 = vrot.lane.b32.xlu0 %v1247, 114
  %v1259 = vpop.permute.xlu0 %1258
  %1264 = vst.msk [vmem:[#allocation4 + $0x1c0] sm:$0xff] %vm296, %v1253
  %1265 = vst.msk [vmem:[#allocation4 + $0x1c8] sm:$0xff] %vm296, %v1255
  %1266 = vst.msk [vmem:[#allocation4 + $0x1d0] sm:$0xff] %vm296, %v1257
  %1267 = vst.msk [vmem:[#allocation4 + $0x1d8] sm:$0xff] %vm296, %v1259
  %v1268 = vld [vmem:[#allocation3] sm:$0xff]
  %v1269 = vld [vmem:[#allocation3 + $0x8] sm:$0xff]
  %v1270 = vld [vmem:[#allocation3 + $0x10] sm:$0xff]
  %v1271 = vld [vmem:[#allocation3 + $0x18] sm:$0xff]
  %v1272 = vld [vmem:[#allocation3 + $0x20] sm:$0xff]
  %v1273 = vld [vmem:[#allocation3 + $0x28] sm:$0xff]
  %v1274 = vld [vmem:[#allocation3 + $0x30] sm:$0xff]
  %v1275 = vld [vmem:[#allocation3 + $0x38] sm:$0xff]
  %1284 = vrot.lane.b32.xlu0 %v1268, 76
  %v1285 = vpop.permute.xlu0 %1284
  %1286 = vrot.lane.b32.xlu0 %v1269, 76
  %v1287 = vpop.permute.xlu0 %1286
  %1288 = vrot.lane.b32.xlu0 %v1270, 76
  %v1289 = vpop.permute.xlu0 %1288
  %1290 = vrot.lane.b32.xlu0 %v1271, 76
  %v1291 = vpop.permute.xlu0 %1290
  %1292 = vrot.lane.b32.xlu0 %v1272, 76
  %v1293 = vpop.permute.xlu0 %1292
  %1294 = vrot.lane.b32.xlu0 %v1273, 76
  %v1295 = vpop.permute.xlu0 %1294
  %1296 = vrot.lane.b32.xlu0 %v1274, 76
  %v1297 = vpop.permute.xlu0 %1296
  %1298 = vrot.lane.b32.xlu0 %v1275, 76
  %v1299 = vpop.permute.xlu0 %1298
  %vm1300 = vcmask 621568
  %v1301 = vsel %vm1300, %v1285, %v1287
  %v1302 = vsel %vm1300, %v1289, %v1291
  %v1303 = vsel %vm1300, %v1293, %v1295
  %v1304 = vsel %vm1300, %v1297, %v1299
  %1309 = vst.msk [vmem:[#allocation4 + $0x1c0] sm:$0xff] %vm342, %v1301
  %1310 = vst.msk [vmem:[#allocation4 + $0x1c8] sm:$0xff] %vm342, %v1302
  %1311 = vst.msk [vmem:[#allocation4 + $0x1d0] sm:$0xff] %vm342, %v1303
  %1312 = vst.msk [vmem:[#allocation4 + $0x1d8] sm:$0xff] %vm342, %v1304
  %v1313 = vld [vmem:[#allocation3] sm:$0xff]
  %v1314 = vld [vmem:[#allocation3 + $0x10] sm:$0xff]
  %v1315 = vld [vmem:[#allocation3 + $0x20] sm:$0xff]
  %v1316 = vld [vmem:[#allocation3 + $0x30] sm:$0xff]
  %1321 = vrot.lane.b32.xlu0 %v1313, 113
  %v1322 = vpop.permute.xlu0 %1321
  %1323 = vrot.lane.b32.xlu0 %v1314, 113
  %v1324 = vpop.permute.xlu0 %1323
  %1325 = vrot.lane.b32.xlu0 %v1315, 113
  %v1326 = vpop.permute.xlu0 %1325
  %1327 = vrot.lane.b32.xlu0 %v1316, 113
  %v1328 = vpop.permute.xlu0 %1327
  %1333 = vst.msk [vmem:[#allocation4 + $0x1e0] sm:$0xff] %vm296, %v1322
  %1334 = vst.msk [vmem:[#allocation4 + $0x1e8] sm:$0xff] %vm296, %v1324
  %1335 = vst.msk [vmem:[#allocation4 + $0x1f0] sm:$0xff] %vm296, %v1326
  %1336 = vst.msk [vmem:[#allocation4 + $0x1f8] sm:$0xff] %vm296, %v1328
  %v1337 = vld [vmem:[#allocation3] sm:$0xff]
  %v1338 = vld [vmem:[#allocation3 + $0x8] sm:$0xff]
  %v1339 = vld [vmem:[#allocation3 + $0x10] sm:$0xff]
  %v1340 = vld [vmem:[#allocation3 + $0x18] sm:$0xff]
  %v1341 = vld [vmem:[#allocation3 + $0x20] sm:$0xff]
  %v1342 = vld [vmem:[#allocation3 + $0x28] sm:$0xff]
  %v1343 = vld [vmem:[#allocation3 + $0x30] sm:$0xff]
  %v1344 = vld [vmem:[#allocation3 + $0x38] sm:$0xff]
  %1353 = vrot.lane.b32.xlu0 %v1337, 75
  %v1354 = vpop.permute.xlu0 %1353
  %1355 = vrot.lane.b32.xlu0 %v1338, 75
  %v1356 = vpop.permute.xlu0 %1355
  %1357 = vrot.lane.b32.xlu0 %v1339, 75
  %v1358 = vpop.permute.xlu0 %1357
  %1359 = vrot.lane.b32.xlu0 %v1340, 75
  %v1360 = vpop.permute.xlu0 %1359
  %1361 = vrot.lane.b32.xlu0 %v1341, 75
  %v1362 = vpop.permute.xlu0 %1361
  %1363 = vrot.lane.b32.xlu0 %v1342, 75
  %v1364 = vpop.permute.xlu0 %1363
  %1365 = vrot.lane.b32.xlu0 %v1343, 75
  %v1366 = vpop.permute.xlu0 %1365
  %1367 = vrot.lane.b32.xlu0 %v1344, 75
  %v1368 = vpop.permute.xlu0 %1367
  %vm1369 = vcmask 613376
  %v1370 = vsel %vm1369, %v1354, %v1356
  %v1371 = vsel %vm1369, %v1358, %v1360
  %v1372 = vsel %vm1369, %v1362, %v1364
  %v1373 = vsel %vm1369, %v1366, %v1368
  %1378 = vst.msk [vmem:[#allocation4 + $0x1e0] sm:$0xff] %vm342, %v1370
  %1379 = vst.msk [vmem:[#allocation4 + $0x1e8] sm:$0xff] %vm342, %v1371
  %1380 = vst.msk [vmem:[#allocation4 + $0x1f0] sm:$0xff] %vm342, %v1372
  %1381 = vst.msk [vmem:[#allocation4 + $0x1f8] sm:$0xff] %vm342, %v1373
  %v1382 = vld [vmem:[#allocation3] sm:$0xff]
  %v1383 = vld [vmem:[#allocation3 + $0x10] sm:$0xff]
  %v1384 = vld [vmem:[#allocation3 + $0x20] sm:$0xff]
  %v1385 = vld [vmem:[#allocation3 + $0x30] sm:$0xff]
  %1390 = vrot.lane.b32.xlu0 %v1382, 112
  %v1391 = vpop.permute.xlu0 %1390
  %1392 = vrot.lane.b32.xlu0 %v1383, 112
  %v1393 = vpop.permute.xlu0 %1392
  %1394 = vrot.lane.b32.xlu0 %v1384, 112
  %v1395 = vpop.permute.xlu0 %1394
  %1396 = vrot.lane.b32.xlu0 %v1385, 112
  %v1397 = vpop.permute.xlu0 %1396
  %1402 = vst.msk [vmem:[#allocation4 + $0x200] sm:$0xff] %vm296, %v1391
  %1403 = vst.msk [vmem:[#allocation4 + $0x208] sm:$0xff] %vm296, %v1393
  %1404 = vst.msk [vmem:[#allocation4 + $0x210] sm:$0xff] %vm296, %v1395
  %1405 = vst.msk [vmem:[#allocation4 + $0x218] sm:$0xff] %vm296, %v1397
  %v1406 = vld [vmem:[#allocation3] sm:$0xff]
  %v1407 = vld [vmem:[#allocation3 + $0x8] sm:$0xff]
  %v1408 = vld [vmem:[#allocation3 + $0x10] sm:$0xff]
  %v1409 = vld [vmem:[#allocation3 + $0x18] sm:$0xff]
  %v1410 = vld [vmem:[#allocation3 + $0x20] sm:$0xff]
  %v1411 = vld [vmem:[#allocation3 + $0x28] sm:$0xff]
  %v1412 = vld [vmem:[#allocation3 + $0x30] sm:$0xff]
  %v1413 = vld [vmem:[#allocation3 + $0x38] sm:$0xff]
  %1422 = vrot.lane.b32.xlu0 %v1406, 74
  %v1423 = vpop.permute.xlu0 %1422
  %1424 = vrot.lane.b32.xlu0 %v1407, 74
  %v1425 = vpop.permute.xlu0 %1424
  %1426 = vrot.lane.b32.xlu0 %v1408, 74
  %v1427 = vpop.permute.xlu0 %1426
  %1428 = vrot.lane.b32.xlu0 %v1409, 74
  %v1429 = vpop.permute.xlu0 %1428
  %1430 = vrot.lane.b32.xlu0 %v1410, 74
  %v1431 = vpop.permute.xlu0 %1430
  %1432 = vrot.lane.b32.xlu0 %v1411, 74
  %v1433 = vpop.permute.xlu0 %1432
  %1434 = vrot.lane.b32.xlu0 %v1412, 74
  %v1435 = vpop.permute.xlu0 %1434
  %1436 = vrot.lane.b32.xlu0 %v1413, 74
  %v1437 = vpop.permute.xlu0 %1436
  %vm1438 = vcmask 605184
  %v1439 = vsel %vm1438, %v1423, %v1425
  %v1440 = vsel %vm1438, %v1427, %v1429
  %v1441 = vsel %vm1438, %v1431, %v1433
  %v1442 = vsel %vm1438, %v1435, %v1437
  %1447 = vst.msk [vmem:[#allocation4 + $0x200] sm:$0xff] %vm342, %v1439
  %1448 = vst.msk [vmem:[#allocation4 + $0x208] sm:$0xff] %vm342, %v1440
  %1449 = vst.msk [vmem:[#allocation4 + $0x210] sm:$0xff] %vm342, %v1441
  %1450 = vst.msk [vmem:[#allocation4 + $0x218] sm:$0xff] %vm342, %v1442
  %v1451 = vld [vmem:[#allocation3] sm:$0xff]
  %v1452 = vld [vmem:[#allocation3 + $0x10] sm:$0xff]
  %v1453 = vld [vmem:[#allocation3 + $0x20] sm:$0xff]
  %v1454 = vld [vmem:[#allocation3 + $0x30] sm:$0xff]
  %1459 = vrot.lane.b32.xlu0 %v1451, 111
  %v1460 = vpop.permute.xlu0 %1459
  %1461 = vrot.lane.b32.xlu0 %v1452, 111
  %v1462 = vpop.permute.xlu0 %1461
  %1463 = vrot.lane.b32.xlu0 %v1453, 111
  %v1464 = vpop.permute.xlu0 %1463
  %1465 = vrot.lane.b32.xlu0 %v1454, 111
  %v1466 = vpop.permute.xlu0 %1465
  %1471 = vst.msk [vmem:[#allocation4 + $0x220] sm:$0xff] %vm296, %v1460
  %1472 = vst.msk [vmem:[#allocation4 + $0x228] sm:$0xff] %vm296, %v1462
  %1473 = vst.msk [vmem:[#allocation4 + $0x230] sm:$0xff] %vm296, %v1464
  %1474 = vst.msk [vmem:[#allocation4 + $0x238] sm:$0xff] %vm296, %v1466
  %v1475 = vld [vmem:[#allocation3] sm:$0xff]
  %v1476 = vld [vmem:[#allocation3 + $0x8] sm:$0xff]
  %v1477 = vld [vmem:[#allocation3 + $0x10] sm:$0xff]
  %v1478 = vld [vmem:[#allocation3 + $0x18] sm:$0xff]
  %v1479 = vld [vmem:[#allocation3 + $0x20] sm:$0xff]
  %v1480 = vld [vmem:[#allocation3 + $0x28] sm:$0xff]
  %v1481 = vld [vmem:[#allocation3 + $0x30] sm:$0xff]
  %v1482 = vld [vmem:[#allocation3 + $0x38] sm:$0xff]
  %1491 = vrot.lane.b32.xlu0 %v1475, 73
  %v1492 = vpop.permute.xlu0 %1491
  %1493 = vrot.lane.b32.xlu0 %v1476, 73
  %v1494 = vpop.permute.xlu0 %1493
  %1495 = vrot.lane.b32.xlu0 %v1477, 73
  %v1496 = vpop.permute.xlu0 %1495
  %1497 = vrot.lane.b32.xlu0 %v1478, 73
  %v1498 = vpop.permute.xlu0 %1497
  %1499 = vrot.lane.b32.xlu0 %v1479, 73
  %v1500 = vpop.permute.xlu0 %1499
  %1501 = vrot.lane.b32.xlu0 %v1480, 73
  %v1502 = vpop.permute.xlu0 %1501
  %1503 = vrot.lane.b32.xlu0 %v1481, 73
  %v1504 = vpop.permute.xlu0 %1503
  %1505 = vrot.lane.b32.xlu0 %v1482, 73
  %v1506 = vpop.permute.xlu0 %1505
  %vm1507 = vcmask 596992
  %v1508 = vsel %vm1507, %v1492, %v1494
  %v1509 = vsel %vm1507, %v1496, %v1498
  %v1510 = vsel %vm1507, %v1500, %v1502
  %v1511 = vsel %vm1507, %v1504, %v1506
  %1516 = vst.msk [vmem:[#allocation4 + $0x220] sm:$0xff] %vm342, %v1508
  %1517 = vst.msk [vmem:[#allocation4 + $0x228] sm:$0xff] %vm342, %v1509
  %1518 = vst.msk [vmem:[#allocation4 + $0x230] sm:$0xff] %vm342, %v1510
  %1519 = vst.msk [vmem:[#allocation4 + $0x238] sm:$0xff] %vm342, %v1511
  %v1520 = vld [vmem:[#allocation3] sm:$0xff]
  %v1521 = vld [vmem:[#allocation3 + $0x10] sm:$0xff]
  %v1522 = vld [vmem:[#allocation3 + $0x20] sm:$0xff]
  %v1523 = vld [vmem:[#allocation3 + $0x30] sm:$0xff]
  %1528 = vrot.lane.b32.xlu0 %v1520, 110
  %v1529 = vpop.permute.xlu0 %1528
  %1530 = vrot.lane.b32.xlu0 %v1521, 110
  %v1531 = vpop.permute.xlu0 %1530
  %1532 = vrot.lane.b32.xlu0 %v1522, 110
  %v1533 = vpop.permute.xlu0 %1532
  %1534 = vrot.lane.b32.xlu0 %v1523, 110
  %v1535 = vpop.permute.xlu0 %1534
  %1540 = vst.msk [vmem:[#allocation4 + $0x240] sm:$0xff] %vm296, %v1529
  %1541 = vst.msk [vmem:[#allocation4 + $0x248] sm:$0xff] %vm296, %v1531
  %1542 = vst.msk [vmem:[#allocation4 + $0x250] sm:$0xff] %vm296, %v1533
  %1543 = vst.msk [vmem:[#allocation4 + $0x258] sm:$0xff] %vm296, %v1535
  %v1544 = vld [vmem:[#allocation3] sm:$0xff]
  %v1545 = vld [vmem:[#allocation3 + $0x8] sm:$0xff]
  %v1546 = vld [vmem:[#allocation3 + $0x10] sm:$0xff]
  %v1547 = vld [vmem:[#allocation3 + $0x18] sm:$0xff]
  %v1548 = vld [vmem:[#allocation3 + $0x20] sm:$0xff]
  %v1549 = vld [vmem:[#allocation3 + $0x28] sm:$0xff]
  %v1550 = vld [vmem:[#allocation3 + $0x30] sm:$0xff]
  %v1551 = vld [vmem:[#allocation3 + $0x38] sm:$0xff]
  %1560 = vrot.lane.b32.xlu0 %v1544, 72
  %v1561 = vpop.permute.xlu0 %1560
  %1562 = vrot.lane.b32.xlu0 %v1545, 72
  %v1563 = vpop.permute.xlu0 %1562
  %1564 = vrot.lane.b32.xlu0 %v1546, 72
  %v1565 = vpop.permute.xlu0 %1564
  %1566 = vrot.lane.b32.xlu0 %v1547, 72
  %v1567 = vpop.permute.xlu0 %1566
  %1568 = vrot.lane.b32.xlu0 %v1548, 72
  %v1569 = vpop.permute.xlu0 %1568
  %1570 = vrot.lane.b32.xlu0 %v1549, 72
  %v1571 = vpop.permute.xlu0 %1570
  %1572 = vrot.lane.b32.xlu0 %v1550, 72
  %v1573 = vpop.permute.xlu0 %1572
  %1574 = vrot.lane.b32.xlu0 %v1551, 72
  %v1575 = vpop.permute.xlu0 %1574
  %vm1576 = vcmask 588800
  %v1577 = vsel %vm1576, %v1561, %v1563
  %v1578 = vsel %vm1576, %v1565, %v1567
  %v1579 = vsel %vm1576, %v1569, %v1571
  %v1580 = vsel %vm1576, %v1573, %v1575
  %1585 = vst.msk [vmem:[#allocation4 + $0x240] sm:$0xff] %vm342, %v1577
  %1586 = vst.msk [vmem:[#allocation4 + $0x248] sm:$0xff] %vm342, %v1578
  %1587 = vst.msk [vmem:[#allocation4 + $0x250] sm:$0xff] %vm342, %v1579
  %1588 = vst.msk [vmem:[#allocation4 + $0x258] sm:$0xff] %vm342, %v1580
  %v1589 = vld [vmem:[#allocation3] sm:$0xff]
  %v1590 = vld [vmem:[#allocation3 + $0x10] sm:$0xff]
  %v1591 = vld [vmem:[#allocation3 + $0x20] sm:$0xff]
  %v1592 = vld [vmem:[#allocation3 + $0x30] sm:$0xff]
  %1597 = vrot.lane.b32.xlu0 %v1589, 109
  %v1598 = vpop.permute.xlu0 %1597
  %1599 = vrot.lane.b32.xlu0 %v1590, 109
  %v1600 = vpop.permute.xlu0 %1599
  %1601 = vrot.lane.b32.xlu0 %v1591, 109
  %v1602 = vpop.permute.xlu0 %1601
  %1603 = vrot.lane.b32.xlu0 %v1592, 109
  %v1604 = vpop.permute.xlu0 %1603
  %1609 = vst.msk [vmem:[#allocation4 + $0x260] sm:$0xff] %vm296, %v1598
  %1610 = vst.msk [vmem:[#allocation4 + $0x268] sm:$0xff] %vm296, %v1600
  %1611 = vst.msk [vmem:[#allocation4 + $0x270] sm:$0xff] %vm296, %v1602
  %1612 = vst.msk [vmem:[#allocation4 + $0x278] sm:$0xff] %vm296, %v1604
  %v1613 = vld [vmem:[#allocation3] sm:$0xff]
  %v1614 = vld [vmem:[#allocation3 + $0x8] sm:$0xff]
  %v1615 = vld [vmem:[#allocation3 + $0x10] sm:$0xff]
  %v1616 = vld [vmem:[#allocation3 + $0x18] sm:$0xff]
  %v1617 = vld [vmem:[#allocation3 + $0x20] sm:$0xff]
  %v1618 = vld [vmem:[#allocation3 + $0x28] sm:$0xff]
  %v1619 = vld [vmem:[#allocation3 + $0x30] sm:$0xff]
  %v1620 = vld [vmem:[#allocation3 + $0x38] sm:$0xff]
  %1629 = vrot.lane.b32.xlu0 %v1613, 71
  %v1630 = vpop.permute.xlu0 %1629
  %1631 = vrot.lane.b32.xlu0 %v1614, 71
  %v1632 = vpop.permute.xlu0 %1631
  %1633 = vrot.lane.b32.xlu0 %v1615, 71
  %v1634 = vpop.permute.xlu0 %1633
  %1635 = vrot.lane.b32.xlu0 %v1616, 71
  %v1636 = vpop.permute.xlu0 %1635
  %1637 = vrot.lane.b32.xlu0 %v1617, 71
  %v1638 = vpop.permute.xlu0 %1637
  %1639 = vrot.lane.b32.xlu0 %v1618, 71
  %v1640 = vpop.permute.xlu0 %1639
  %1641 = vrot.lane.b32.xlu0 %v1619, 71
  %v1642 = vpop.permute.xlu0 %1641
  %1643 = vrot.lane.b32.xlu0 %v1620, 71
  %v1644 = vpop.permute.xlu0 %1643
  %vm1645 = vcmask 580608
  %v1646 = vsel %vm1645, %v1630, %v1632
  %v1647 = vsel %vm1645, %v1634, %v1636
  %v1648 = vsel %vm1645, %v1638, %v1640
  %v1649 = vsel %vm1645, %v1642, %v1644
  %1654 = vst.msk [vmem:[#allocation4 + $0x260] sm:$0xff] %vm342, %v1646
  %1655 = vst.msk [vmem:[#allocation4 + $0x268] sm:$0xff] %vm342, %v1647
  %1656 = vst.msk [vmem:[#allocation4 + $0x270] sm:$0xff] %vm342, %v1648
  %1657 = vst.msk [vmem:[#allocation4 + $0x278] sm:$0xff] %vm342, %v1649
  %v1658 = vld [vmem:[#allocation3] sm:$0xff]
  %v1659 = vld [vmem:[#allocation3 + $0x10] sm:$0xff]
  %v1660 = vld [vmem:[#allocation3 + $0x20] sm:$0xff]
  %v1661 = vld [vmem:[#allocation3 + $0x30] sm:$0xff]
  %1666 = vrot.lane.b32.xlu0 %v1658, 108
  %v1667 = vpop.permute.xlu0 %1666
  %1668 = vrot.lane.b32.xlu0 %v1659, 108
  %v1669 = vpop.permute.xlu0 %1668
  %1670 = vrot.lane.b32.xlu0 %v1660, 108
  %v1671 = vpop.permute.xlu0 %1670
  %1672 = vrot.lane.b32.xlu0 %v1661, 108
  %v1673 = vpop.permute.xlu0 %1672
  %1678 = vst.msk [vmem:[#allocation4 + $0x280] sm:$0xff] %vm296, %v1667
  %1679 = vst.msk [vmem:[#allocation4 + $0x288] sm:$0xff] %vm296, %v1669
  %1680 = vst.msk [vmem:[#allocation4 + $0x290] sm:$0xff] %vm296, %v1671
  %1681 = vst.msk [vmem:[#allocation4 + $0x298] sm:$0xff] %vm296, %v1673
  %v1682 = vld [vmem:[#allocation3] sm:$0xff]
  %v1683 = vld [vmem:[#allocation3 + $0x8] sm:$0xff]
  %v1684 = vld [vmem:[#allocation3 + $0x10] sm:$0xff]
  %v1685 = vld [vmem:[#allocation3 + $0x18] sm:$0xff]
  %v1686 = vld [vmem:[#allocation3 + $0x20] sm:$0xff]
  %v1687 = vld [vmem:[#allocation3 + $0x28] sm:$0xff]
  %v1688 = vld [vmem:[#allocation3 + $0x30] sm:$0xff]
  %v1689 = vld [vmem:[#allocation3 + $0x38] sm:$0xff]
  %1698 = vrot.lane.b32.xlu0 %v1682, 70
  %v1699 = vpop.permute.xlu0 %1698
  %1700 = vrot.lane.b32.xlu0 %v1683, 70
  %v1701 = vpop.permute.xlu0 %1700
  %1702 = vrot.lane.b32.xlu0 %v1684, 70
  %v1703 = vpop.permute.xlu0 %1702
  %1704 = vrot.lane.b32.xlu0 %v1685, 70
  %v1705 = vpop.permute.xlu0 %1704
  %1706 = vrot.lane.b32.xlu0 %v1686, 70
  %v1707 = vpop.permute.xlu0 %1706
  %1708 = vrot.lane.b32.xlu0 %v1687, 70
  %v1709 = vpop.permute.xlu0 %1708
  %1710 = vrot.lane.b32.xlu0 %v1688, 70
  %v1711 = vpop.permute.xlu0 %1710
  %1712 = vrot.lane.b32.xlu0 %v1689, 70
  %v1713 = vpop.permute.xlu0 %1712
  %vm1714 = vcmask 572416
  %v1715 = vsel %vm1714, %v1699, %v1701
  %v1716 = vsel %vm1714, %v1703, %v1705
  %v1717 = vsel %vm1714, %v1707, %v1709
  %v1718 = vsel %vm1714, %v1711, %v1713
  %1723 = vst.msk [vmem:[#allocation4 + $0x280] sm:$0xff] %vm342, %v1715
  %1724 = vst.msk [vmem:[#allocation4 + $0x288] sm:$0xff] %vm342, %v1716
  %1725 = vst.msk [vmem:[#allocation4 + $0x290] sm:$0xff] %vm342, %v1717
  %1726 = vst.msk [vmem:[#allocation4 + $0x298] sm:$0xff] %vm342, %v1718
  %v1727 = vld [vmem:[#allocation3] sm:$0xff]
  %v1728 = vld [vmem:[#allocation3 + $0x10] sm:$0xff]
  %v1729 = vld [vmem:[#allocation3 + $0x20] sm:$0xff]
  %v1730 = vld [vmem:[#allocation3 + $0x30] sm:$0xff]
  %1735 = vrot.lane.b32.xlu0 %v1727, 107
  %v1736 = vpop.permute.xlu0 %1735
  %1737 = vrot.lane.b32.xlu0 %v1728, 107
  %v1738 = vpop.permute.xlu0 %1737
  %1739 = vrot.lane.b32.xlu0 %v1729, 107
  %v1740 = vpop.permute.xlu0 %1739
  %1741 = vrot.lane.b32.xlu0 %v1730, 107
  %v1742 = vpop.permute.xlu0 %1741
  %1747 = vst.msk [vmem:[#allocation4 + $0x2a0] sm:$0xff] %vm296, %v1736
  %1748 = vst.msk [vmem:[#allocation4 + $0x2a8] sm:$0xff] %vm296, %v1738
  %1749 = vst.msk [vmem:[#allocation4 + $0x2b0] sm:$0xff] %vm296, %v1740
  %1750 = vst.msk [vmem:[#allocation4 + $0x2b8] sm:$0xff] %vm296, %v1742
  %v1751 = vld [vmem:[#allocation3] sm:$0xff]
  %v1752 = vld [vmem:[#allocation3 + $0x8] sm:$0xff]
  %v1753 = vld [vmem:[#allocation3 + $0x10] sm:$0xff]
  %v1754 = vld [vmem:[#allocation3 + $0x18] sm:$0xff]
  %v1755 = vld [vmem:[#allocation3 + $0x20] sm:$0xff]
  %v1756 = vld [vmem:[#allocation3 + $0x28] sm:$0xff]
  %v1757 = vld [vmem:[#allocation3 + $0x30] sm:$0xff]
  %v1758 = vld [vmem:[#allocation3 + $0x38] sm:$0xff]
  %1767 = vrot.lane.b32.xlu0 %v1751, 69
  %v1768 = vpop.permute.xlu0 %1767
  %1769 = vrot.lane.b32.xlu0 %v1752, 69
  %v1770 = vpop.permute.xlu0 %1769
  %1771 = vrot.lane.b32.xlu0 %v1753, 69
  %v1772 = vpop.permute.xlu0 %1771
  %1773 = vrot.lane.b32.xlu0 %v1754, 69
  %v1774 = vpop.permute.xlu0 %1773
  %1775 = vrot.lane.b32.xlu0 %v1755, 69
  %v1776 = vpop.permute.xlu0 %1775
  %1777 = vrot.lane.b32.xlu0 %v1756, 69
  %v1778 = vpop.permute.xlu0 %1777
  %1779 = vrot.lane.b32.xlu0 %v1757, 69
  %v1780 = vpop.permute.xlu0 %1779
  %1781 = vrot.lane.b32.xlu0 %v1758, 69
  %v1782 = vpop.permute.xlu0 %1781
  %vm1783 = vcmask 564224
  %v1784 = vsel %vm1783, %v1768, %v1770
  %v1785 = vsel %vm1783, %v1772, %v1774
  %v1786 = vsel %vm1783, %v1776, %v1778
  %v1787 = vsel %vm1783, %v1780, %v1782
  %1792 = vst.msk [vmem:[#allocation4 + $0x2a0] sm:$0xff] %vm342, %v1784
  %1793 = vst.msk [vmem:[#allocation4 + $0x2a8] sm:$0xff] %vm342, %v1785
  %1794 = vst.msk [vmem:[#allocation4 + $0x2b0] sm:$0xff] %vm342, %v1786
  %1795 = vst.msk [vmem:[#allocation4 + $0x2b8] sm:$0xff] %vm342, %v1787
  %v1796 = vld [vmem:[#allocation3] sm:$0xff]
  %v1797 = vld [vmem:[#allocation3 + $0x10] sm:$0xff]
  %v1798 = vld [vmem:[#allocation3 + $0x20] sm:$0xff]
  %v1799 = vld [vmem:[#allocation3 + $0x30] sm:$0xff]
  %1804 = vrot.lane.b32.xlu0 %v1796, 106
  %v1805 = vpop.permute.xlu0 %1804
  %1806 = vrot.lane.b32.xlu0 %v1797, 106
  %v1807 = vpop.permute.xlu0 %1806
  %1808 = vrot.lane.b32.xlu0 %v1798, 106
  %v1809 = vpop.permute.xlu0 %1808
  %1810 = vrot.lane.b32.xlu0 %v1799, 106
  %v1811 = vpop.permute.xlu0 %1810
  %1816 = vst.msk [vmem:[#allocation4 + $0x2c0] sm:$0xff] %vm296, %v1805
  %1817 = vst.msk [vmem:[#allocation4 + $0x2c8] sm:$0xff] %vm296, %v1807
  %1818 = vst.msk [vmem:[#allocation4 + $0x2d0] sm:$0xff] %vm296, %v1809
  %1819 = vst.msk [vmem:[#allocation4 + $0x2d8] sm:$0xff] %vm296, %v1811
  %v1820 = vld [vmem:[#allocation3] sm:$0xff]
  %v1821 = vld [vmem:[#allocation3 + $0x8] sm:$0xff]
  %v1822 = vld [vmem:[#allocation3 + $0x10] sm:$0xff]
  %v1823 = vld [vmem:[#allocation3 + $0x18] sm:$0xff]
  %v1824 = vld [vmem:[#allocation3 + $0x20] sm:$0xff]
  %v1825 = vld [vmem:[#allocation3 + $0x28] sm:$0xff]
  %v1826 = vld [vmem:[#allocation3 + $0x30] sm:$0xff]
  %v1827 = vld [vmem:[#allocation3 + $0x38] sm:$0xff]
  %1836 = vrot.lane.b32.xlu0 %v1820, 68
  %v1837 = vpop.permute.xlu0 %1836
  %1838 = vrot.lane.b32.xlu0 %v1821, 68
  %v1839 = vpop.permute.xlu0 %1838
  %1840 = vrot.lane.b32.xlu0 %v1822, 68
  %v1841 = vpop.permute.xlu0 %1840
  %1842 = vrot.lane.b32.xlu0 %v1823, 68
  %v1843 = vpop.permute.xlu0 %1842
  %1844 = vrot.lane.b32.xlu0 %v1824, 68
  %v1845 = vpop.permute.xlu0 %1844
  %1846 = vrot.lane.b32.xlu0 %v1825, 68
  %v1847 = vpop.permute.xlu0 %1846
  %1848 = vrot.lane.b32.xlu0 %v1826, 68
  %v1849 = vpop.permute.xlu0 %1848
  %1850 = vrot.lane.b32.xlu0 %v1827, 68
  %v1851 = vpop.permute.xlu0 %1850
  %vm1852 = vcmask 556032
  %v1853 = vsel %vm1852, %v1837, %v1839
  %v1854 = vsel %vm1852, %v1841, %v1843
  %v1855 = vsel %vm1852, %v1845, %v1847
  %v1856 = vsel %vm1852, %v1849, %v1851
  %1861 = vst.msk [vmem:[#allocation4 + $0x2c0] sm:$0xff] %vm342, %v1853
  %1862 = vst.msk [vmem:[#allocation4 + $0x2c8] sm:$0xff] %vm342, %v1854
  %1863 = vst.msk [vmem:[#allocation4 + $0x2d0] sm:$0xff] %vm342, %v1855
  %1864 = vst.msk [vmem:[#allocation4 + $0x2d8] sm:$0xff] %vm342, %v1856
  %v1865 = vld [vmem:[#allocation3] sm:$0xff]
  %v1866 = vld [vmem:[#allocation3 + $0x10] sm:$0xff]
  %v1867 = vld [vmem:[#allocation3 + $0x20] sm:$0xff]
  %v1868 = vld [vmem:[#allocation3 + $0x30] sm:$0xff]
  %1873 = vrot.lane.b32.xlu0 %v1865, 105
  %v1874 = vpop.permute.xlu0 %1873
  %1875 = vrot.lane.b32.xlu0 %v1866, 105
  %v1876 = vpop.permute.xlu0 %1875
  %1877 = vrot.lane.b32.xlu0 %v1867, 105
  %v1878 = vpop.permute.xlu0 %1877
  %1879 = vrot.lane.b32.xlu0 %v1868, 105
  %v1880 = vpop.permute.xlu0 %1879
  %1885 = vst.msk [vmem:[#allocation4 + $0x2e0] sm:$0xff] %vm296, %v1874
  %1886 = vst.msk [vmem:[#allocation4 + $0x2e8] sm:$0xff] %vm296, %v1876
  %1887 = vst.msk [vmem:[#allocation4 + $0x2f0] sm:$0xff] %vm296, %v1878
  %1888 = vst.msk [vmem:[#allocation4 + $0x2f8] sm:$0xff] %vm296, %v1880
  %v1889 = vld [vmem:[#allocation3] sm:$0xff]
  %v1890 = vld [vmem:[#allocation3 + $0x8] sm:$0xff]
  %v1891 = vld [vmem:[#allocation3 + $0x10] sm:$0xff]
  %v1892 = vld [vmem:[#allocation3 + $0x18] sm:$0xff]
  %v1893 = vld [vmem:[#allocation3 + $0x20] sm:$0xff]
  %v1894 = vld [vmem:[#allocation3 + $0x28] sm:$0xff]
  %v1895 = vld [vmem:[#allocation3 + $0x30] sm:$0xff]
  %v1896 = vld [vmem:[#allocation3 + $0x38] sm:$0xff]
  %1905 = vrot.lane.b32.xlu0 %v1889, 67
  %v1906 = vpop.permute.xlu0 %1905
  %1907 = vrot.lane.b32.xlu0 %v1890, 67
  %v1908 = vpop.permute.xlu0 %1907
  %1909 = vrot.lane.b32.xlu0 %v1891, 67
  %v1910 = vpop.permute.xlu0 %1909
  %1911 = vrot.lane.b32.xlu0 %v1892, 67
  %v1912 = vpop.permute.xlu0 %1911
  %1913 = vrot.lane.b32.xlu0 %v1893, 67
  %v1914 = vpop.permute.xlu0 %1913
  %1915 = vrot.lane.b32.xlu0 %v1894, 67
  %v1916 = vpop.permute.xlu0 %1915
  %1917 = vrot.lane.b32.xlu0 %v1895, 67
  %v1918 = vpop.permute.xlu0 %1917
  %1919 = vrot.lane.b32.xlu0 %v1896, 67
  %v1920 = vpop.permute.xlu0 %1919
  %vm1921 = vcmask 547840
  %v1922 = vsel %vm1921, %v1906, %v1908
  %v1923 = vsel %vm1921, %v1910, %v1912
  %v1924 = vsel %vm1921, %v1914, %v1916
  %v1925 = vsel %vm1921, %v1918, %v1920
  %1930 = vst.msk [vmem:[#allocation4 + $0x2e0] sm:$0xff] %vm342, %v1922
  %1931 = vst.msk [vmem:[#allocation4 + $0x2e8] sm:$0xff] %vm342, %v1923
  %1932 = vst.msk [vmem:[#allocation4 + $0x2f0] sm:$0xff] %vm342, %v1924
  %1933 = vst.msk [vmem:[#allocation4 + $0x2f8] sm:$0xff] %vm342, %v1925
  %v1934 = vld [vmem:[#allocation3] sm:$0xff]
  %v1935 = vld [vmem:[#allocation3 + $0x10] sm:$0xff]
  %v1936 = vld [vmem:[#allocation3 + $0x20] sm:$0xff]
  %v1937 = vld [vmem:[#allocation3 + $0x30] sm:$0xff]
  %1942 = vrot.lane.b32.xlu0 %v1934, 104
  %v1943 = vpop.permute.xlu0 %1942
  %1944 = vrot.lane.b32.xlu0 %v1935, 104
  %v1945 = vpop.permute.xlu0 %1944
  %1946 = vrot.lane.b32.xlu0 %v1936, 104
  %v1947 = vpop.permute.xlu0 %1946
  %1948 = vrot.lane.b32.xlu0 %v1937, 104
  %v1949 = vpop.permute.xlu0 %1948
  %1954 = vst.msk [vmem:[#allocation4 + $0x300] sm:$0xff] %vm296, %v1943
  %1955 = vst.msk [vmem:[#allocation4 + $0x308] sm:$0xff] %vm296, %v1945
  %1956 = vst.msk [vmem:[#allocation4 + $0x310] sm:$0xff] %vm296, %v1947
  %1957 = vst.msk [vmem:[#allocation4 + $0x318] sm:$0xff] %vm296, %v1949
  %v1958 = vld [vmem:[#allocation3] sm:$0xff]
  %v1959 = vld [vmem:[#allocation3 + $0x8] sm:$0xff]
  %v1960 = vld [vmem:[#allocation3 + $0x10] sm:$0xff]
  %v1961 = vld [vmem:[#allocation3 + $0x18] sm:$0xff]
  %v1962 = vld [vmem:[#allocation3 + $0x20] sm:$0xff]
  %v1963 = vld [vmem:[#allocation3 + $0x28] sm:$0xff]
  %v1964 = vld [vmem:[#allocation3 + $0x30] sm:$0xff]
  %v1965 = vld [vmem:[#allocation3 + $0x38] sm:$0xff]
  %1974 = vrot.lane.b32.xlu0 %v1958, 66
  %v1975 = vpop.permute.xlu0 %1974
  %1976 = vrot.lane.b32.xlu0 %v1959, 66
  %v1977 = vpop.permute.xlu0 %1976
  %1978 = vrot.lane.b32.xlu0 %v1960, 66
  %v1979 = vpop.permute.xlu0 %1978
  %1980 = vrot.lane.b32.xlu0 %v1961, 66
  %v1981 = vpop.permute.xlu0 %1980
  %1982 = vrot.lane.b32.xlu0 %v1962, 66
  %v1983 = vpop.permute.xlu0 %1982
  %1984 = vrot.lane.b32.xlu0 %v1963, 66
  %v1985 = vpop.permute.xlu0 %1984
  %1986 = vrot.lane.b32.xlu0 %v1964, 66
  %v1987 = vpop.permute.xlu0 %1986
  %1988 = vrot.lane.b32.xlu0 %v1965, 66
  %v1989 = vpop.permute.xlu0 %1988
  %vm1990 = vcmask 539648
  %v1991 = vsel %vm1990, %v1975, %v1977
  %v1992 = vsel %vm1990, %v1979, %v1981
  %v1993 = vsel %vm1990, %v1983, %v1985
  %v1994 = vsel %vm1990, %v1987, %v1989
  %1999 = vst.msk [vmem:[#allocation4 + $0x300] sm:$0xff] %vm342, %v1991
  %2000 = vst.msk [vmem:[#allocation4 + $0x308] sm:$0xff] %vm342, %v1992
  %2001 = vst.msk [vmem:[#allocation4 + $0x310] sm:$0xff] %vm342, %v1993
  %2002 = vst.msk [vmem:[#allocation4 + $0x318] sm:$0xff] %vm342, %v1994
  %v2003 = vld [vmem:[#allocation3] sm:$0xff]
  %v2004 = vld [vmem:[#allocation3 + $0x10] sm:$0xff]
  %v2005 = vld [vmem:[#allocation3 + $0x20] sm:$0xff]
  %v2006 = vld [vmem:[#allocation3 + $0x30] sm:$0xff]
  %2011 = vrot.lane.b32.xlu0 %v2003, 103
  %v2012 = vpop.permute.xlu0 %2011
  %2013 = vrot.lane.b32.xlu0 %v2004, 103
  %v2014 = vpop.permute.xlu0 %2013
  %2015 = vrot.lane.b32.xlu0 %v2005, 103
  %v2016 = vpop.permute.xlu0 %2015
  %2017 = vrot.lane.b32.xlu0 %v2006, 103
  %v2018 = vpop.permute.xlu0 %2017
  %2023 = vst.msk [vmem:[#allocation4 + $0x320] sm:$0xff] %vm296, %v2012
  %2024 = vst.msk [vmem:[#allocation4 + $0x328] sm:$0xff] %vm296, %v2014
  %2025 = vst.msk [vmem:[#allocation4 + $0x330] sm:$0xff] %vm296, %v2016
  %2026 = vst.msk [vmem:[#allocation4 + $0x338] sm:$0xff] %vm296, %v2018
  %v2027 = vld [vmem:[#allocation3] sm:$0xff]
  %v2028 = vld [vmem:[#allocation3 + $0x8] sm:$0xff]
  %v2029 = vld [vmem:[#allocation3 + $0x10] sm:$0xff]
  %v2030 = vld [vmem:[#allocation3 + $0x18] sm:$0xff]
  %v2031 = vld [vmem:[#allocation3 + $0x20] sm:$0xff]
  %v2032 = vld [vmem:[#allocation3 + $0x28] sm:$0xff]
  %v2033 = vld [vmem:[#allocation3 + $0x30] sm:$0xff]
  %v2034 = vld [vmem:[#allocation3 + $0x38] sm:$0xff]
  %2043 = vrot.lane.b32.xlu0 %v2027, 65
  %v2044 = vpop.permute.xlu0 %2043
  %2045 = vrot.lane.b32.xlu0 %v2028, 65
  %v2046 = vpop.permute.xlu0 %2045
  %2047 = vrot.lane.b32.xlu0 %v2029, 65
  %v2048 = vpop.permute.xlu0 %2047
  %2049 = vrot.lane.b32.xlu0 %v2030, 65
  %v2050 = vpop.permute.xlu0 %2049
  %2051 = vrot.lane.b32.xlu0 %v2031, 65
  %v2052 = vpop.permute.xlu0 %2051
  %2053 = vrot.lane.b32.xlu0 %v2032, 65
  %v2054 = vpop.permute.xlu0 %2053
  %2055 = vrot.lane.b32.xlu0 %v2033, 65
  %v2056 = vpop.permute.xlu0 %2055
  %2057 = vrot.lane.b32.xlu0 %v2034, 65
  %v2058 = vpop.permute.xlu0 %2057
  %vm2059 = vcmask 531456
  %v2060 = vsel %vm2059, %v2044, %v2046
  %v2061 = vsel %vm2059, %v2048, %v2050
  %v2062 = vsel %vm2059, %v2052, %v2054
  %v2063 = vsel %vm2059, %v2056, %v2058
  %2068 = vst.msk [vmem:[#allocation4 + $0x320] sm:$0xff] %vm342, %v2060
  %2069 = vst.msk [vmem:[#allocation4 + $0x328] sm:$0xff] %vm342, %v2061
  %2070 = vst.msk [vmem:[#allocation4 + $0x330] sm:$0xff] %vm342, %v2062
  %2071 = vst.msk [vmem:[#allocation4 + $0x338] sm:$0xff] %vm342, %v2063
  %v2072 = vld [vmem:[#allocation3] sm:$0xff]
  %v2073 = vld [vmem:[#allocation3 + $0x10] sm:$0xff]
  %v2074 = vld [vmem:[#allocation3 + $0x20] sm:$0xff]
  %v2075 = vld [vmem:[#allocation3 + $0x30] sm:$0xff]
  %2080 = vrot.lane.b32.xlu0 %v2072, 102
  %v2081 = vpop.permute.xlu0 %2080
  %2082 = vrot.lane.b32.xlu0 %v2073, 102
  %v2083 = vpop.permute.xlu0 %2082
  %2084 = vrot.lane.b32.xlu0 %v2074, 102
  %v2085 = vpop.permute.xlu0 %2084
  %2086 = vrot.lane.b32.xlu0 %v2075, 102
  %v2087 = vpop.permute.xlu0 %2086
  %2092 = vst.msk [vmem:[#allocation4 + $0x340] sm:$0xff] %vm296, %v2081
  %2093 = vst.msk [vmem:[#allocation4 + $0x348] sm:$0xff] %vm296, %v2083
  %2094 = vst.msk [vmem:[#allocation4 + $0x350] sm:$0xff] %vm296, %v2085
  %2095 = vst.msk [vmem:[#allocation4 + $0x358] sm:$0xff] %vm296, %v2087
  %v2096 = vld [vmem:[#allocation3 + $0x8] sm:$0xff]
  %v2097 = vld [vmem:[#allocation3 + $0x18] sm:$0xff]
  %v2098 = vld [vmem:[#allocation3 + $0x28] sm:$0xff]
  %v2099 = vld [vmem:[#allocation3 + $0x38] sm:$0xff]
  %2104 = vrot.lane.b32.xlu0 %v2096, 64
  %v2105 = vpop.permute.xlu0 %2104
  %2106 = vrot.lane.b32.xlu0 %v2097, 64
  %v2107 = vpop.permute.xlu0 %2106
  %2108 = vrot.lane.b32.xlu0 %v2098, 64
  %v2109 = vpop.permute.xlu0 %2108
  %2110 = vrot.lane.b32.xlu0 %v2099, 64
  %v2111 = vpop.permute.xlu0 %2110
  %2116 = vst.msk [vmem:[#allocation4 + $0x340] sm:$0xff] %vm342, %v2105
  %2117 = vst.msk [vmem:[#allocation4 + $0x348] sm:$0xff] %vm342, %v2107
  %2118 = vst.msk [vmem:[#allocation4 + $0x350] sm:$0xff] %vm342, %v2109
  %2119 = vst.msk [vmem:[#allocation4 + $0x358] sm:$0xff] %vm342, %v2111
  %v2120 = vld [vmem:[#allocation3] sm:$0xff]
  %v2121 = vld [vmem:[#allocation3 + $0x10] sm:$0xff]
  %v2122 = vld [vmem:[#allocation3 + $0x20] sm:$0xff]
  %v2123 = vld [vmem:[#allocation3 + $0x30] sm:$0xff]
  %2128 = vrot.lane.b32.xlu0 %v2120, 101
  %v2129 = vpop.permute.xlu0 %2128
  %2130 = vrot.lane.b32.xlu0 %v2121, 101
  %v2131 = vpop.permute.xlu0 %2130
  %2132 = vrot.lane.b32.xlu0 %v2122, 101
  %v2133 = vpop.permute.xlu0 %2132
  %2134 = vrot.lane.b32.xlu0 %v2123, 101
  %v2135 = vpop.permute.xlu0 %2134
  %2140 = vst.msk [vmem:[#allocation4 + $0x360] sm:$0xff] %vm296, %v2129
  %2141 = vst.msk [vmem:[#allocation4 + $0x368] sm:$0xff] %vm296, %v2131
  %2142 = vst.msk [vmem:[#allocation4 + $0x370] sm:$0xff] %vm296, %v2133
  %2143 = vst.msk [vmem:[#allocation4 + $0x378] sm:$0xff] %vm296, %v2135
  %v2144 = vld [vmem:[#allocation3 + $0x8] sm:$0xff]
  %v2145 = vld [vmem:[#allocation3 + $0x18] sm:$0xff]
  %v2146 = vld [vmem:[#allocation3 + $0x28] sm:$0xff]
  %v2147 = vld [vmem:[#allocation3 + $0x38] sm:$0xff]
  %2152 = vrot.lane.b32.xlu0 %v2144, 63
  %v2153 = vpop.permute.xlu0 %2152
  %2154 = vrot.lane.b32.xlu0 %v2145, 63
  %v2155 = vpop.permute.xlu0 %2154
  %2156 = vrot.lane.b32.xlu0 %v2146, 63
  %v2157 = vpop.permute.xlu0 %2156
  %2158 = vrot.lane.b32.xlu0 %v2147, 63
  %v2159 = vpop.permute.xlu0 %2158
  %2164 = vst.msk [vmem:[#allocation4 + $0x360] sm:$0xff] %vm342, %v2153
  %2165 = vst.msk [vmem:[#allocation4 + $0x368] sm:$0xff] %vm342, %v2155
  %2166 = vst.msk [vmem:[#allocation4 + $0x370] sm:$0xff] %vm342, %v2157
  %2167 = vst.msk [vmem:[#allocation4 + $0x378] sm:$0xff] %vm342, %v2159
  %v2168 = vld [vmem:[#allocation3] sm:$0xff]
  %v2169 = vld [vmem:[#allocation3 + $0x10] sm:$0xff]
  %v2170 = vld [vmem:[#allocation3 + $0x20] sm:$0xff]
  %v2171 = vld [vmem:[#allocation3 + $0x30] sm:$0xff]
  %2176 = vrot.lane.b32.xlu0 %v2168, 100
  %v2177 = vpop.permute.xlu0 %2176
  %2178 = vrot.lane.b32.xlu0 %v2169, 100
  %v2179 = vpop.permute.xlu0 %2178
  %2180 = vrot.lane.b32.xlu0 %v2170, 100
  %v2181 = vpop.permute.xlu0 %2180
  %2182 = vrot.lane.b32.xlu0 %v2171, 100
  %v2183 = vpop.permute.xlu0 %2182
  %2188 = vst.msk [vmem:[#allocation4 + $0x380] sm:$0xff] %vm296, %v2177
  %2189 = vst.msk [vmem:[#allocation4 + $0x388] sm:$0xff] %vm296, %v2179
  %2190 = vst.msk [vmem:[#allocation4 + $0x390] sm:$0xff] %vm296, %v2181
  %2191 = vst.msk [vmem:[#allocation4 + $0x398] sm:$0xff] %vm296, %v2183
  %v2192 = vld [vmem:[#allocation3 + $0x8] sm:$0xff]
  %v2193 = vld [vmem:[#allocation3 + $0x18] sm:$0xff]
  %v2194 = vld [vmem:[#allocation3 + $0x28] sm:$0xff]
  %v2195 = vld [vmem:[#allocation3 + $0x38] sm:$0xff]
  %2200 = vrot.lane.b32.xlu0 %v2192, 62
  %v2201 = vpop.permute.xlu0 %2200
  %2202 = vrot.lane.b32.xlu0 %v2193, 62
  %v2203 = vpop.permute.xlu0 %2202
  %2204 = vrot.lane.b32.xlu0 %v2194, 62
  %v2205 = vpop.permute.xlu0 %2204
  %2206 = vrot.lane.b32.xlu0 %v2195, 62
  %v2207 = vpop.permute.xlu0 %2206
  %2212 = vst.msk [vmem:[#allocation4 + $0x380] sm:$0xff] %vm342, %v2201
  %2213 = vst.msk [vmem:[#allocation4 + $0x388] sm:$0xff] %vm342, %v2203
  %2214 = vst.msk [vmem:[#allocation4 + $0x390] sm:$0xff] %vm342, %v2205
  %2215 = vst.msk [vmem:[#allocation4 + $0x398] sm:$0xff] %vm342, %v2207
  %v2216 = vld [vmem:[#allocation3] sm:$0xff]
  %v2217 = vld [vmem:[#allocation3 + $0x10] sm:$0xff]
  %v2218 = vld [vmem:[#allocation3 + $0x20] sm:$0xff]
  %v2219 = vld [vmem:[#allocation3 + $0x30] sm:$0xff]
  %2224 = vrot.lane.b32.xlu0 %v2216, 99
  %v2225 = vpop.permute.xlu0 %2224
  %2226 = vrot.lane.b32.xlu0 %v2217, 99
  %v2227 = vpop.permute.xlu0 %2226
  %2228 = vrot.lane.b32.xlu0 %v2218, 99
  %v2229 = vpop.permute.xlu0 %2228
  %2230 = vrot.lane.b32.xlu0 %v2219, 99
  %v2231 = vpop.permute.xlu0 %2230
  %2236 = vst.msk [vmem:[#allocation4 + $0x3a0] sm:$0xff] %vm296, %v2225
  %2237 = vst.msk [vmem:[#allocation4 + $0x3a8] sm:$0xff] %vm296, %v2227
  %2238 = vst.msk [vmem:[#allocation4 + $0x3b0] sm:$0xff] %vm296, %v2229
  %2239 = vst.msk [vmem:[#allocation4 + $0x3b8] sm:$0xff] %vm296, %v2231
  %v2240 = vld [vmem:[#allocation3 + $0x8] sm:$0xff]
  %v2241 = vld [vmem:[#allocation3 + $0x18] sm:$0xff]
  %v2242 = vld [vmem:[#allocation3 + $0x28] sm:$0xff]
  %v2243 = vld [vmem:[#allocation3 + $0x38] sm:$0xff]
  %2248 = vrot.lane.b32.xlu0 %v2240, 61
  %v2249 = vpop.permute.xlu0 %2248
  %2250 = vrot.lane.b32.xlu0 %v2241, 61
  %v2251 = vpop.permute.xlu0 %2250
  %2252 = vrot.lane.b32.xlu0 %v2242, 61
  %v2253 = vpop.permute.xlu0 %2252
  %2254 = vrot.lane.b32.xlu0 %v2243, 61
  %v2255 = vpop.permute.xlu0 %2254
  %2260 = vst.msk [vmem:[#allocation4 + $0x3a0] sm:$0xff] %vm342, %v2249
  %2261 = vst.msk [vmem:[#allocation4 + $0x3a8] sm:$0xff] %vm342, %v2251
  %2262 = vst.msk [vmem:[#allocation4 + $0x3b0] sm:$0xff] %vm342, %v2253
  %2263 = vst.msk [vmem:[#allocation4 + $0x3b8] sm:$0xff] %vm342, %v2255
  %v2264 = vld [vmem:[#allocation3] sm:$0xff]
  %v2265 = vld [vmem:[#allocation3 + $0x10] sm:$0xff]
  %v2266 = vld [vmem:[#allocation3 + $0x20] sm:$0xff]
  %v2267 = vld [vmem:[#allocation3 + $0x30] sm:$0xff]
  %2272 = vrot.lane.b32.xlu0 %v2264, 98
  %v2273 = vpop.permute.xlu0 %2272
  %2274 = vrot.lane.b32.xlu0 %v2265, 98
  %v2275 = vpop.permute.xlu0 %2274
  %2276 = vrot.lane.b32.xlu0 %v2266, 98
  %v2277 = vpop.permute.xlu0 %2276
  %2278 = vrot.lane.b32.xlu0 %v2267, 98
  %v2279 = vpop.permute.xlu0 %2278
  %2284 = vst.msk [vmem:[#allocation4 + $0x3c0] sm:$0xff] %vm296, %v2273
  %2285 = vst.msk [vmem:[#allocation4 + $0x3c8] sm:$0xff] %vm296, %v2275
  %2286 = vst.msk [vmem:[#allocation4 + $0x3d0] sm:$0xff] %vm296, %v2277
  %2287 = vst.msk [vmem:[#allocation4 + $0x3d8] sm:$0xff] %vm296, %v2279
  %v2288 = vld [vmem:[#allocation3 + $0x8] sm:$0xff]
  %v2289 = vld [vmem:[#allocation3 + $0x18] sm:$0xff]
  %v2290 = vld [vmem:[#allocation3 + $0x28] sm:$0xff]
  %v2291 = vld [vmem:[#allocation3 + $0x38] sm:$0xff]
  %2296 = vrot.lane.b32.xlu0 %v2288, 60
  %v2297 = vpop.permute.xlu0 %2296
  %2298 = vrot.lane.b32.xlu0 %v2289, 60
  %v2299 = vpop.permute.xlu0 %2298
  %2300 = vrot.lane.b32.xlu0 %v2290, 60
  %v2301 = vpop.permute.xlu0 %2300
  %2302 = vrot.lane.b32.xlu0 %v2291, 60
  %v2303 = vpop.permute.xlu0 %2302
  %2308 = vst.msk [vmem:[#allocation4 + $0x3c0] sm:$0xff] %vm342, %v2297
  %2309 = vst.msk [vmem:[#allocation4 + $0x3c8] sm:$0xff] %vm342, %v2299
  %2310 = vst.msk [vmem:[#allocation4 + $0x3d0] sm:$0xff] %vm342, %v2301
  %2311 = vst.msk [vmem:[#allocation4 + $0x3d8] sm:$0xff] %vm342, %v2303
  %v2312 = vld [vmem:[#allocation3] sm:$0xff]
  %v2313 = vld [vmem:[#allocation3 + $0x10] sm:$0xff]
  %v2314 = vld [vmem:[#allocation3 + $0x20] sm:$0xff]
  %v2315 = vld [vmem:[#allocation3 + $0x30] sm:$0xff]
  %2320 = vrot.lane.b32.xlu0 %v2312, 97
  %v2321 = vpop.permute.xlu0 %2320
  %2322 = vrot.lane.b32.xlu0 %v2313, 97
  %v2323 = vpop.permute.xlu0 %2322
  %2324 = vrot.lane.b32.xlu0 %v2314, 97
  %v2325 = vpop.permute.xlu0 %2324
  %2326 = vrot.lane.b32.xlu0 %v2315, 97
  %v2327 = vpop.permute.xlu0 %2326
  %2332 = vst.msk [vmem:[#allocation4 + $0x3e0] sm:$0xff] %vm296, %v2321
  %2333 = vst.msk [vmem:[#allocation4 + $0x3e8] sm:$0xff] %vm296, %v2323
  %2334 = vst.msk [vmem:[#allocation4 + $0x3f0] sm:$0xff] %vm296, %v2325
  %2335 = vst.msk [vmem:[#allocation4 + $0x3f8] sm:$0xff] %vm296, %v2327
  %v2336 = vld [vmem:[#allocation3 + $0x8] sm:$0xff]
  %v2337 = vld [vmem:[#allocation3 + $0x18] sm:$0xff]
  %v2338 = vld [vmem:[#allocation3 + $0x28] sm:$0xff]
  %v2339 = vld [vmem:[#allocation3 + $0x38] sm:$0xff]
  %2344 = vrot.lane.b32.xlu0 %v2336, 59
  %v2345 = vpop.permute.xlu0 %2344
  %2346 = vrot.lane.b32.xlu0 %v2337, 59
  %v2347 = vpop.permute.xlu0 %2346
  %2348 = vrot.lane.b32.xlu0 %v2338, 59
  %v2349 = vpop.permute.xlu0 %2348
  %2350 = vrot.lane.b32.xlu0 %v2339, 59
  %v2351 = vpop.permute.xlu0 %2350
  %2356 = vst.msk [vmem:[#allocation4 + $0x3e0] sm:$0xff] %vm342, %v2345
  %2357 = vst.msk [vmem:[#allocation4 + $0x3e8] sm:$0xff] %vm342, %v2347
  %2358 = vst.msk [vmem:[#allocation4 + $0x3f0] sm:$0xff] %vm342, %v2349
  %2359 = vst.msk [vmem:[#allocation4 + $0x3f8] sm:$0xff] %vm342, %v2351
  %v2360 = vld [vmem:[#allocation3] sm:$0xff]
  %v2361 = vld [vmem:[#allocation3 + $0x10] sm:$0xff]
  %v2362 = vld [vmem:[#allocation3 + $0x20] sm:$0xff]
  %v2363 = vld [vmem:[#allocation3 + $0x30] sm:$0xff]
  %2368 = vrot.lane.b32.xlu0 %v2360, 96
  %v2369 = vpop.permute.xlu0 %2368
  %2370 = vrot.lane.b32.xlu0 %v2361, 96
  %v2371 = vpop.permute.xlu0 %2370
  %2372 = vrot.lane.b32.xlu0 %v2362, 96
  %v2373 = vpop.permute.xlu0 %2372
  %2374 = vrot.lane.b32.xlu0 %v2363, 96
  %v2375 = vpop.permute.xlu0 %2374
  %2380 = vst.msk [vmem:[#allocation4 + $0x400] sm:$0xff] %vm296, %v2369
  %2381 = vst.msk [vmem:[#allocation4 + $0x408] sm:$0xff] %vm296, %v2371
  %2382 = vst.msk [vmem:[#allocation4 + $0x410] sm:$0xff] %vm296, %v2373
  %2383 = vst.msk [vmem:[#allocation4 + $0x418] sm:$0xff] %vm296, %v2375
  %v2384 = vld [vmem:[#allocation3 + $0x8] sm:$0xff]
  %v2385 = vld [vmem:[#allocation3 + $0x18] sm:$0xff]
  %v2386 = vld [vmem:[#allocation3 + $0x28] sm:$0xff]
  %v2387 = vld [vmem:[#allocation3 + $0x38] sm:$0xff]
  %2392 = vrot.lane.b32.xlu0 %v2384, 58
  %v2393 = vpop.permute.xlu0 %2392
  %2394 = vrot.lane.b32.xlu0 %v2385, 58
  %v2395 = vpop.permute.xlu0 %2394
  %2396 = vrot.lane.b32.xlu0 %v2386, 58
  %v2397 = vpop.permute.xlu0 %2396
  %2398 = vrot.lane.b32.xlu0 %v2387, 58
  %v2399 = vpop.permute.xlu0 %2398
  %2404 = vst.msk [vmem:[#allocation4 + $0x400] sm:$0xff] %vm342, %v2393
  %2405 = vst.msk [vmem:[#allocation4 + $0x408] sm:$0xff] %vm342, %v2395
  %2406 = vst.msk [vmem:[#allocation4 + $0x410] sm:$0xff] %vm342, %v2397
  %2407 = vst.msk [vmem:[#allocation4 + $0x418] sm:$0xff] %vm342, %v2399
  %v2408 = vld [vmem:[#allocation3] sm:$0xff]
  %v2409 = vld [vmem:[#allocation3 + $0x10] sm:$0xff]
  %v2410 = vld [vmem:[#allocation3 + $0x20] sm:$0xff]
  %v2411 = vld [vmem:[#allocation3 + $0x30] sm:$0xff]
  %2416 = vrot.lane.b32.xlu0 %v2408, 95
  %v2417 = vpop.permute.xlu0 %2416
  %2418 = vrot.lane.b32.xlu0 %v2409, 95
  %v2419 = vpop.permute.xlu0 %2418
  %2420 = vrot.lane.b32.xlu0 %v2410, 95
  %v2421 = vpop.permute.xlu0 %2420
  %2422 = vrot.lane.b32.xlu0 %v2411, 95
  %v2423 = vpop.permute.xlu0 %2422
  %2428 = vst.msk [vmem:[#allocation4 + $0x420] sm:$0xff] %vm296, %v2417
  %2429 = vst.msk [vmem:[#allocation4 + $0x428] sm:$0xff] %vm296, %v2419
  %2430 = vst.msk [vmem:[#allocation4 + $0x430] sm:$0xff] %vm296, %v2421
  %2431 = vst.msk [vmem:[#allocation4 + $0x438] sm:$0xff] %vm296, %v2423
  %v2432 = vld [vmem:[#allocation3 + $0x8] sm:$0xff]
  %v2433 = vld [vmem:[#allocation3 + $0x18] sm:$0xff]
  %v2434 = vld [vmem:[#allocation3 + $0x28] sm:$0xff]
  %v2435 = vld [vmem:[#allocation3 + $0x38] sm:$0xff]
  %2440 = vrot.lane.b32.xlu0 %v2432, 57
  %v2441 = vpop.permute.xlu0 %2440
  %2442 = vrot.lane.b32.xlu0 %v2433, 57
  %v2443 = vpop.permute.xlu0 %2442
  %2444 = vrot.lane.b32.xlu0 %v2434, 57
  %v2445 = vpop.permute.xlu0 %2444
  %2446 = vrot.lane.b32.xlu0 %v2435, 57
  %v2447 = vpop.permute.xlu0 %2446
  %2452 = vst.msk [vmem:[#allocation4 + $0x420] sm:$0xff] %vm342, %v2441
  %2453 = vst.msk [vmem:[#allocation4 + $0x428] sm:$0xff] %vm342, %v2443
  %2454 = vst.msk [vmem:[#allocation4 + $0x430] sm:$0xff] %vm342, %v2445
  %2455 = vst.msk [vmem:[#allocation4 + $0x438] sm:$0xff] %vm342, %v2447
  %v2456 = vld [vmem:[#allocation3] sm:$0xff]
  %v2457 = vld [vmem:[#allocation3 + $0x10] sm:$0xff]
  %v2458 = vld [vmem:[#allocation3 + $0x20] sm:$0xff]
  %v2459 = vld [vmem:[#allocation3 + $0x30] sm:$0xff]
  %2464 = vrot.lane.b32.xlu0 %v2456, 94
  %v2465 = vpop.permute.xlu0 %2464
  %2466 = vrot.lane.b32.xlu0 %v2457, 94
  %v2467 = vpop.permute.xlu0 %2466
  %2468 = vrot.lane.b32.xlu0 %v2458, 94
  %v2469 = vpop.permute.xlu0 %2468
  %2470 = vrot.lane.b32.xlu0 %v2459, 94
  %v2471 = vpop.permute.xlu0 %2470
  %2476 = vst.msk [vmem:[#allocation4 + $0x440] sm:$0xff] %vm296, %v2465
  %2477 = vst.msk [vmem:[#allocation4 + $0x448] sm:$0xff] %vm296, %v2467
  %2478 = vst.msk [vmem:[#allocation4 + $0x450] sm:$0xff] %vm296, %v2469
  %2479 = vst.msk [vmem:[#allocation4 + $0x458] sm:$0xff] %vm296, %v2471
  %v2480 = vld [vmem:[#allocation3 + $0x8] sm:$0xff]
  %v2481 = vld [vmem:[#allocation3 + $0x18] sm:$0xff]
  %v2482 = vld [vmem:[#allocation3 + $0x28] sm:$0xff]
  %v2483 = vld [vmem:[#allocation3 + $0x38] sm:$0xff]
  %2488 = vrot.lane.b32.xlu0 %v2480, 56
  %v2489 = vpop.permute.xlu0 %2488
  %2490 = vrot.lane.b32.xlu0 %v2481, 56
  %v2491 = vpop.permute.xlu0 %2490
  %2492 = vrot.lane.b32.xlu0 %v2482, 56
  %v2493 = vpop.permute.xlu0 %2492
  %2494 = vrot.lane.b32.xlu0 %v2483, 56
  %v2495 = vpop.permute.xlu0 %2494
  %2500 = vst.msk [vmem:[#allocation4 + $0x440] sm:$0xff] %vm342, %v2489
  %2501 = vst.msk [vmem:[#allocation4 + $0x448] sm:$0xff] %vm342, %v2491
  %2502 = vst.msk [vmem:[#allocation4 + $0x450] sm:$0xff] %vm342, %v2493
  %2503 = vst.msk [vmem:[#allocation4 + $0x458] sm:$0xff] %vm342, %v2495
  %v2504 = vld [vmem:[#allocation3] sm:$0xff]
  %v2505 = vld [vmem:[#allocation3 + $0x10] sm:$0xff]
  %v2506 = vld [vmem:[#allocation3 + $0x20] sm:$0xff]
  %v2507 = vld [vmem:[#allocation3 + $0x30] sm:$0xff]
  %2512 = vrot.lane.b32.xlu0 %v2504, 93
  %v2513 = vpop.permute.xlu0 %2512
  %2514 = vrot.lane.b32.xlu0 %v2505, 93
  %v2515 = vpop.permute.xlu0 %2514
  %2516 = vrot.lane.b32.xlu0 %v2506, 93
  %v2517 = vpop.permute.xlu0 %2516
  %2518 = vrot.lane.b32.xlu0 %v2507, 93
  %v2519 = vpop.permute.xlu0 %2518
  %2524 = vst.msk [vmem:[#allocation4 + $0x460] sm:$0xff] %vm296, %v2513
  %2525 = vst.msk [vmem:[#allocation4 + $0x468] sm:$0xff] %vm296, %v2515
  %2526 = vst.msk [vmem:[#allocation4 + $0x470] sm:$0xff] %vm296, %v2517
  %2527 = vst.msk [vmem:[#allocation4 + $0x478] sm:$0xff] %vm296, %v2519
  %v2528 = vld [vmem:[#allocation3 + $0x8] sm:$0xff]
  %v2529 = vld [vmem:[#allocation3 + $0x18] sm:$0xff]
  %v2530 = vld [vmem:[#allocation3 + $0x28] sm:$0xff]
  %v2531 = vld [vmem:[#allocation3 + $0x38] sm:$0xff]
  %2536 = vrot.lane.b32.xlu0 %v2528, 55
  %v2537 = vpop.permute.xlu0 %2536
  %2538 = vrot.lane.b32.xlu0 %v2529, 55
  %v2539 = vpop.permute.xlu0 %2538
  %2540 = vrot.lane.b32.xlu0 %v2530, 55
  %v2541 = vpop.permute.xlu0 %2540
  %2542 = vrot.lane.b32.xlu0 %v2531, 55
  %v2543 = vpop.permute.xlu0 %2542
  %2548 = vst.msk [vmem:[#allocation4 + $0x460] sm:$0xff] %vm342, %v2537
  %2549 = vst.msk [vmem:[#allocation4 + $0x468] sm:$0xff] %vm342, %v2539
  %2550 = vst.msk [vmem:[#allocation4 + $0x470] sm:$0xff] %vm342, %v2541
  %2551 = vst.msk [vmem:[#allocation4 + $0x478] sm:$0xff] %vm342, %v2543
  %v2552 = vld [vmem:[#allocation3] sm:$0xff]
  %v2553 = vld [vmem:[#allocation3 + $0x10] sm:$0xff]
  %v2554 = vld [vmem:[#allocation3 + $0x20] sm:$0xff]
  %v2555 = vld [vmem:[#allocation3 + $0x30] sm:$0xff]
  %2560 = vrot.lane.b32.xlu0 %v2552, 92
  %v2561 = vpop.permute.xlu0 %2560
  %2562 = vrot.lane.b32.xlu0 %v2553, 92
  %v2563 = vpop.permute.xlu0 %2562
  %2564 = vrot.lane.b32.xlu0 %v2554, 92
  %v2565 = vpop.permute.xlu0 %2564
  %2566 = vrot.lane.b32.xlu0 %v2555, 92
  %v2567 = vpop.permute.xlu0 %2566
  %2572 = vst.msk [vmem:[#allocation4 + $0x480] sm:$0xff] %vm296, %v2561
  %2573 = vst.msk [vmem:[#allocation4 + $0x488] sm:$0xff] %vm296, %v2563
  %2574 = vst.msk [vmem:[#allocation4 + $0x490] sm:$0xff] %vm296, %v2565
  %2575 = vst.msk [vmem:[#allocation4 + $0x498] sm:$0xff] %vm296, %v2567
  %v2576 = vld [vmem:[#allocation3 + $0x8] sm:$0xff]
  %v2577 = vld [vmem:[#allocation3 + $0x18] sm:$0xff]
  %v2578 = vld [vmem:[#allocation3 + $0x28] sm:$0xff]
  %v2579 = vld [vmem:[#allocation3 + $0x38] sm:$0xff]
  %2584 = vrot.lane.b32.xlu0 %v2576, 54
  %v2585 = vpop.permute.xlu0 %2584
  %2586 = vrot.lane.b32.xlu0 %v2577, 54
  %v2587 = vpop.permute.xlu0 %2586
  %2588 = vrot.lane.b32.xlu0 %v2578, 54
  %v2589 = vpop.permute.xlu0 %2588
  %2590 = vrot.lane.b32.xlu0 %v2579, 54
  %v2591 = vpop.permute.xlu0 %2590
  %2596 = vst.msk [vmem:[#allocation4 + $0x480] sm:$0xff] %vm342, %v2585
  %2597 = vst.msk [vmem:[#allocation4 + $0x488] sm:$0xff] %vm342, %v2587
  %2598 = vst.msk [vmem:[#allocation4 + $0x490] sm:$0xff] %vm342, %v2589
  %2599 = vst.msk [vmem:[#allocation4 + $0x498] sm:$0xff] %vm342, %v2591
  %v2600 = vld [vmem:[#allocation3] sm:$0xff]
  %v2601 = vld [vmem:[#allocation3 + $0x10] sm:$0xff]
  %v2602 = vld [vmem:[#allocation3 + $0x20] sm:$0xff]
  %v2603 = vld [vmem:[#allocation3 + $0x30] sm:$0xff]
  %2608 = vrot.lane.b32.xlu0 %v2600, 91
  %v2609 = vpop.permute.xlu0 %2608
  %2610 = vrot.lane.b32.xlu0 %v2601, 91
  %v2611 = vpop.permute.xlu0 %2610
  %2612 = vrot.lane.b32.xlu0 %v2602, 91
  %v2613 = vpop.permute.xlu0 %2612
  %2614 = vrot.lane.b32.xlu0 %v2603, 91
  %v2615 = vpop.permute.xlu0 %2614
  %2620 = vst.msk [vmem:[#allocation4 + $0x4a0] sm:$0xff] %vm296, %v2609
  %2621 = vst.msk [vmem:[#allocation4 + $0x4a8] sm:$0xff] %vm296, %v2611
  %2622 = vst.msk [vmem:[#allocation4 + $0x4b0] sm:$0xff] %vm296, %v2613
  %2623 = vst.msk [vmem:[#allocation4 + $0x4b8] sm:$0xff] %vm296, %v2615
  %v2624 = vld [vmem:[#allocation3 + $0x8] sm:$0xff]
  %v2625 = vld [vmem:[#allocation3 + $0x18] sm:$0xff]
  %v2626 = vld [vmem:[#allocation3 + $0x28] sm:$0xff]
  %v2627 = vld [vmem:[#allocation3 + $0x38] sm:$0xff]
  %2632 = vrot.lane.b32.xlu0 %v2624, 53
  %v2633 = vpop.permute.xlu0 %2632
  %2634 = vrot.lane.b32.xlu0 %v2625, 53
  %v2635 = vpop.permute.xlu0 %2634
  %2636 = vrot.lane.b32.xlu0 %v2626, 53
  %v2637 = vpop.permute.xlu0 %2636
  %2638 = vrot.lane.b32.xlu0 %v2627, 53
  %v2639 = vpop.permute.xlu0 %2638
  %2644 = vst.msk [vmem:[#allocation4 + $0x4a0] sm:$0xff] %vm342, %v2633
  %2645 = vst.msk [vmem:[#allocation4 + $0x4a8] sm:$0xff] %vm342, %v2635
  %2646 = vst.msk [vmem:[#allocation4 + $0x4b0] sm:$0xff] %vm342, %v2637
  %2647 = vst.msk [vmem:[#allocation4 + $0x4b8] sm:$0xff] %vm342, %v2639
  %v2648 = vld [vmem:[#allocation3] sm:$0xff]
  %v2649 = vld [vmem:[#allocation3 + $0x10] sm:$0xff]
  %v2650 = vld [vmem:[#allocation3 + $0x20] sm:$0xff]
  %v2651 = vld [vmem:[#allocation3 + $0x30] sm:$0xff]
  %2656 = vrot.lane.b32.xlu0 %v2648, 90
  %v2657 = vpop.permute.xlu0 %2656
  %2658 = vrot.lane.b32.xlu0 %v2649, 90
  %v2659 = vpop.permute.xlu0 %2658
  %2660 = vrot.lane.b32.xlu0 %v2650, 90
  %v2661 = vpop.permute.xlu0 %2660
  %2662 = vrot.lane.b32.xlu0 %v2651, 90
  %v2663 = vpop.permute.xlu0 %2662
  %2668 = vst.msk [vmem:[#allocation4 + $0x4c0] sm:$0xff] %vm296, %v2657
  %2669 = vst.msk [vmem:[#allocation4 + $0x4c8] sm:$0xff] %vm296, %v2659
  %2670 = vst.msk [vmem:[#allocation4 + $0x4d0] sm:$0xff] %vm296, %v2661
  %2671 = vst.msk [vmem:[#allocation4 + $0x4d8] sm:$0xff] %vm296, %v2663
  %v2672 = vld [vmem:[#allocation3 + $0x8] sm:$0xff]
  %v2673 = vld [vmem:[#allocation3 + $0x18] sm:$0xff]
  %v2674 = vld [vmem:[#allocation3 + $0x28] sm:$0xff]
  %v2675 = vld [vmem:[#allocation3 + $0x38] sm:$0xff]
  %2680 = vrot.lane.b32.xlu0 %v2672, 52
  %v2681 = vpop.permute.xlu0 %2680
  %2682 = vrot.lane.b32.xlu0 %v2673, 52
  %v2683 = vpop.permute.xlu0 %2682
  %2684 = vrot.lane.b32.xlu0 %v2674, 52
  %v2685 = vpop.permute.xlu0 %2684
  %2686 = vrot.lane.b32.xlu0 %v2675, 52
  %v2687 = vpop.permute.xlu0 %2686
  %2692 = vst.msk [vmem:[#allocation4 + $0x4c0] sm:$0xff] %vm342, %v2681
  %2693 = vst.msk [vmem:[#allocation4 + $0x4c8] sm:$0xff] %vm342, %v2683
  %2694 = vst.msk [vmem:[#allocation4 + $0x4d0] sm:$0xff] %vm342, %v2685
  %2695 = vst.msk [vmem:[#allocation4 + $0x4d8] sm:$0xff] %vm342, %v2687
  %v2696 = vld [vmem:[%s3] sm:$0xff]
  %v2697 = vld [vmem:[%s3 + $0x8] sm:$0xff]
  %v2698 = vld [vmem:[%s3 + $0x10] sm:$0xff]
  %v2699 = vld [vmem:[%s3 + $0x18] sm:$0xff]
  %v2700 = vld [vmem:[%s3 + $0x20] sm:$0xff]
  %v2701 = vld [vmem:[%s3 + $0x28] sm:$0xff]
  %v2702 = vld [vmem:[%s3 + $0x30] sm:$0xff]
  %v2703 = vld [vmem:[%s3 + $0x38] sm:$0xff]
  %v2704 = vld [vmem:[%s3 + $0x40] sm:$0xff]
  %v2705 = vld [vmem:[%s3 + $0x48] sm:$0xff]
  %v2706 = vld [vmem:[%s3 + $0x50] sm:$0xff]
  %v2707 = vld [vmem:[%s3 + $0x58] sm:$0xff]
  %v2708 = vld [vmem:[%s3 + $0x60] sm:$0xff]
  %v2709 = vld [vmem:[%s3 + $0x68] sm:$0xff]
  %v2710 = vld [vmem:[%s3 + $0x70] sm:$0xff]
  %v2711 = vld [vmem:[%s3 + $0x78] sm:$0xff]
  %v2712 = vld [vmem:[%s3 + $0x80] sm:$0xff]
  %v2713 = vld [vmem:[%s3 + $0x88] sm:$0xff]
  %v2714 = vld [vmem:[%s3 + $0x90] sm:$0xff]
  %v2715 = vld [vmem:[%s3 + $0x98] sm:$0xff]
  %v2716 = vld [vmem:[%s3 + $0xa0] sm:$0xff]
  %v2717 = vld [vmem:[%s3 + $0xa8] sm:$0xff]
  %v2718 = vld [vmem:[%s3 + $0xb0] sm:$0xff]
  %v2719 = vld [vmem:[%s3 + $0xb8] sm:$0xff]
  %v2720 = vld [vmem:[%s3 + $0xc0] sm:$0xff]
  %v2721 = vld [vmem:[%s3 + $0xc8] sm:$0xff]
  %v2722 = vld [vmem:[%s3 + $0xd0] sm:$0xff]
  %v2723 = vld [vmem:[%s3 + $0xd8] sm:$0xff]
  %v2724 = vld [vmem:[%s3 + $0xe0] sm:$0xff]
  %v2725 = vld [vmem:[%s3 + $0xe8] sm:$0xff]
  %v2726 = vld [vmem:[%s3 + $0xf0] sm:$0xff]
  %v2727 = vld [vmem:[%s3 + $0xf8] sm:$0xff]
  %v2728 = vld [vmem:[%s3 + $0x100] sm:$0xff]
  %v2729 = vld [vmem:[%s3 + $0x108] sm:$0xff]
  %v2730 = vld [vmem:[%s3 + $0x110] sm:$0xff]
  %v2731 = vld [vmem:[%s3 + $0x118] sm:$0xff]
  %v2732 = vld [vmem:[%s3 + $0x120] sm:$0xff]
  %v2733 = vld [vmem:[%s3 + $0x128] sm:$0xff]
  %v2734 = vld [vmem:[%s3 + $0x130] sm:$0xff]
  %v2735 = vld [vmem:[%s3 + $0x138] sm:$0xff]
  %v2736 = vld [vmem:[%s3 + $0x140] sm:$0xff]
  %v2737 = vld [vmem:[%s3 + $0x148] sm:$0xff]
  %v2738 = vld [vmem:[%s3 + $0x150] sm:$0xff]
  %v2739 = vld [vmem:[%s3 + $0x158] sm:$0xff]
  %v2740 = vld [vmem:[%s3 + $0x160] sm:$0xff]
  %v2741 = vld [vmem:[%s3 + $0x168] sm:$0xff]
  %v2742 = vld [vmem:[%s3 + $0x170] sm:$0xff]
  %v2743 = vld [vmem:[%s3 + $0x178] sm:$0xff]
  %v2744 = vld [vmem:[%s3 + $0x180] sm:$0xff]
  %v2745 = vld [vmem:[%s3 + $0x188] sm:$0xff]
  %v2746 = vld [vmem:[%s3 + $0x190] sm:$0xff]
  %v2747 = vld [vmem:[%s3 + $0x198] sm:$0xff]
  %v2748 = vld [vmem:[%s3 + $0x1a0] sm:$0xff]
  %v2749 = vld [vmem:[%s3 + $0x1a8] sm:$0xff]
  %v2750 = vld [vmem:[%s3 + $0x1b0] sm:$0xff]
  %v2751 = vld [vmem:[%s3 + $0x1b8] sm:$0xff]
  %v2752 = vld [vmem:[%s3 + $0x1c0] sm:$0xff]
  %v2753 = vld [vmem:[%s3 + $0x1c8] sm:$0xff]
  %v2754 = vld [vmem:[%s3 + $0x1d0] sm:$0xff]
  %v2755 = vld [vmem:[%s3 + $0x1d8] sm:$0xff]
  %v2756 = vld [vmem:[%s3 + $0x1e0] sm:$0xff]
  %v2757 = vld [vmem:[%s3 + $0x1e8] sm:$0xff]
  %v2758 = vld [vmem:[%s3 + $0x1f0] sm:$0xff]
  %v2759 = vld [vmem:[%s3 + $0x1f8] sm:$0xff]
  %v2760 = vld [vmem:[%s3 + $0x200] sm:$0xff]
  %v2761 = vld [vmem:[%s3 + $0x208] sm:$0xff]
  %v2762 = vld [vmem:[%s3 + $0x210] sm:$0xff]
  %v2763 = vld [vmem:[%s3 + $0x218] sm:$0xff]
  %v2764 = vld [vmem:[%s3 + $0x220] sm:$0xff]
  %v2765 = vld [vmem:[%s3 + $0x228] sm:$0xff]
  %v2766 = vld [vmem:[%s3 + $0x230] sm:$0xff]
  %v2767 = vld [vmem:[%s3 + $0x238] sm:$0xff]
  %v2768 = vld [vmem:[%s3 + $0x240] sm:$0xff]
  %v2769 = vld [vmem:[%s3 + $0x248] sm:$0xff]
  %v2770 = vld [vmem:[%s3 + $0x250] sm:$0xff]
  %v2771 = vld [vmem:[%s3 + $0x258] sm:$0xff]
  %v2772 = vld [vmem:[%s3 + $0x260] sm:$0xff]
  %v2773 = vld [vmem:[%s3 + $0x268] sm:$0xff]
  %v2774 = vld [vmem:[%s3 + $0x270] sm:$0xff]
  %v2775 = vld [vmem:[%s3 + $0x278] sm:$0xff]
  %v2776 = vld [vmem:[%s3 + $0x280] sm:$0xff]
  %v2777 = vld [vmem:[%s3 + $0x288] sm:$0xff]
  %v2778 = vld [vmem:[%s3 + $0x290] sm:$0xff]
  %v2779 = vld [vmem:[%s3 + $0x298] sm:$0xff]
  %v2780 = vld [vmem:[%s3 + $0x2a0] sm:$0xff]
  %v2781 = vld [vmem:[%s3 + $0x2a8] sm:$0xff]
  %v2782 = vld [vmem:[%s3 + $0x2b0] sm:$0xff]
  %v2783 = vld [vmem:[%s3 + $0x2b8] sm:$0xff]
  %v2784 = vld [vmem:[%s3 + $0x2c0] sm:$0xff]
  %v2785 = vld [vmem:[%s3 + $0x2c8] sm:$0xff]
  %v2786 = vld [vmem:[%s3 + $0x2d0] sm:$0xff]
  %v2787 = vld [vmem:[%s3 + $0x2d8] sm:$0xff]
  %v2788 = vld [vmem:[%s3 + $0x2e0] sm:$0xff]
  %v2789 = vld [vmem:[%s3 + $0x2e8] sm:$0xff]
  %v2790 = vld [vmem:[%s3 + $0x2f0] sm:$0xff]
  %v2791 = vld [vmem:[%s3 + $0x2f8] sm:$0xff]
  %v2792 = vld [vmem:[%s3 + $0x300] sm:$0xff]
  %v2793 = vld [vmem:[%s3 + $0x308] sm:$0xff]
  %v2794 = vld [vmem:[%s3 + $0x310] sm:$0xff]
  %v2795 = vld [vmem:[%s3 + $0x318] sm:$0xff]
  %v2796 = vld [vmem:[%s3 + $0x320] sm:$0xff]
  %v2797 = vld [vmem:[%s3 + $0x328] sm:$0xff]
  %v2798 = vld [vmem:[%s3 + $0x330] sm:$0xff]
  %v2799 = vld [vmem:[%s3 + $0x338] sm:$0xff]
  %v2800 = vld [vmem:[%s3 + $0x340] sm:$0xff]
  %v2801 = vld [vmem:[%s3 + $0x348] sm:$0xff]
  %v2802 = vld [vmem:[%s3 + $0x350] sm:$0xff]
  %v2803 = vld [vmem:[%s3 + $0x358] sm:$0xff]
  %v2804 = vld [vmem:[%s3 + $0x360] sm:$0xff]
  %v2805 = vld [vmem:[%s3 + $0x368] sm:$0xff]
  %v2806 = vld [vmem:[%s3 + $0x370] sm:$0xff]
  %v2807 = vld [vmem:[%s3 + $0x378] sm:$0xff]
  %v2808 = vld [vmem:[%s3 + $0x380] sm:$0xff]
  %v2809 = vld [vmem:[%s3 + $0x388] sm:$0xff]
  %v2810 = vld [vmem:[%s3 + $0x390] sm:$0xff]
  %v2811 = vld [vmem:[%s3 + $0x398] sm:$0xff]
  %v2812 = vld [vmem:[%s3 + $0x3a0] sm:$0xff]
  %v2813 = vld [vmem:[%s3 + $0x3a8] sm:$0xff]
  %v2814 = vld [vmem:[%s3 + $0x3b0] sm:$0xff]
  %v2815 = vld [vmem:[%s3 + $0x3b8] sm:$0xff]
  %v2816 = vld [vmem:[#allocation4] sm:$0xff]
  %v2817 = vld [vmem:[#allocation4 + $0x8] sm:$0xff]
  %v2818 = vld [vmem:[#allocation4 + $0x10] sm:$0xff]
  %v2819 = vld [vmem:[#allocation4 + $0x18] sm:$0xff]
  %v2820 = vld [vmem:[#allocation4 + $0x20] sm:$0xff]
  %v2821 = vld [vmem:[#allocation4 + $0x28] sm:$0xff]
  %v2822 = vld [vmem:[#allocation4 + $0x30] sm:$0xff]
  %v2823 = vld [vmem:[#allocation4 + $0x38] sm:$0xff]
  %v2824 = vld [vmem:[#allocation4 + $0x40] sm:$0xff]
  %v2825 = vld [vmem:[#allocation4 + $0x48] sm:$0xff]
  %v2826 = vld [vmem:[#allocation4 + $0x50] sm:$0xff]
  %v2827 = vld [vmem:[#allocation4 + $0x58] sm:$0xff]
  %v2828 = vld [vmem:[#allocation4 + $0x60] sm:$0xff]
  %v2829 = vld [vmem:[#allocation4 + $0x68] sm:$0xff]
  %v2830 = vld [vmem:[#allocation4 + $0x70] sm:$0xff]
  %v2831 = vld [vmem:[#allocation4 + $0x78] sm:$0xff]
  %v2832 = vld [vmem:[#allocation4 + $0x80] sm:$0xff]
  %v2833 = vld [vmem:[#allocation4 + $0x88] sm:$0xff]
  %v2834 = vld [vmem:[#allocation4 + $0x90] sm:$0xff]
  %v2835 = vld [vmem:[#allocation4 + $0x98] sm:$0xff]
  %v2836 = vld [vmem:[#allocation4 + $0xa0] sm:$0xff]
  %v2837 = vld [vmem:[#allocation4 + $0xa8] sm:$0xff]
  %v2838 = vld [vmem:[#allocation4 + $0xb0] sm:$0xff]
  %v2839 = vld [vmem:[#allocation4 + $0xb8] sm:$0xff]
  %v2840 = vld [vmem:[#allocation4 + $0xc0] sm:$0xff]
  %v2841 = vld [vmem:[#allocation4 + $0xc8] sm:$0xff]
  %v2842 = vld [vmem:[#allocation4 + $0xd0] sm:$0xff]
  %v2843 = vld [vmem:[#allocation4 + $0xd8] sm:$0xff]
  %v2844 = vld [vmem:[#allocation4 + $0xe0] sm:$0xff]
  %v2845 = vld [vmem:[#allocation4 + $0xe8] sm:$0xff]
  %v2846 = vld [vmem:[#allocation4 + $0xf0] sm:$0xff]
  %v2847 = vld [vmem:[#allocation4 + $0xf8] sm:$0xff]
  %v2848 = vld [vmem:[#allocation4 + $0x100] sm:$0xff]
  %v2849 = vld [vmem:[#allocation4 + $0x108] sm:$0xff]
  %v2850 = vld [vmem:[#allocation4 + $0x110] sm:$0xff]
  %v2851 = vld [vmem:[#allocation4 + $0x118] sm:$0xff]
  %v2852 = vld [vmem:[#allocation4 + $0x120] sm:$0xff]
  %v2853 = vld [vmem:[#allocation4 + $0x128] sm:$0xff]
  %v2854 = vld [vmem:[#allocation4 + $0x130] sm:$0xff]
  %v2855 = vld [vmem:[#allocation4 + $0x138] sm:$0xff]
  %v2856 = vld [vmem:[#allocation4 + $0x140] sm:$0xff]
  %v2857 = vld [vmem:[#allocation4 + $0x148] sm:$0xff]
  %v2858 = vld [vmem:[#allocation4 + $0x150] sm:$0xff]
  %v2859 = vld [vmem:[#allocation4 + $0x158] sm:$0xff]
  %v2860 = vld [vmem:[#allocation4 + $0x160] sm:$0xff]
  %v2861 = vld [vmem:[#allocation4 + $0x168] sm:$0xff]
  %v2862 = vld [vmem:[#allocation4 + $0x170] sm:$0xff]
  %v2863 = vld [vmem:[#allocation4 + $0x178] sm:$0xff]
  %v2864 = vld [vmem:[#allocation4 + $0x180] sm:$0xff]
  %v2865 = vld [vmem:[#allocation4 + $0x188] sm:$0xff]
  %v2866 = vld [vmem:[#allocation4 + $0x190] sm:$0xff]
  %v2867 = vld [vmem:[#allocation4 + $0x198] sm:$0xff]
  %v2868 = vld [vmem:[#allocation4 + $0x1a0] sm:$0xff]
  %v2869 = vld [vmem:[#allocation4 + $0x1a8] sm:$0xff]
  %v2870 = vld [vmem:[#allocation4 + $0x1b0] sm:$0xff]
  %v2871 = vld [vmem:[#allocation4 + $0x1b8] sm:$0xff]
  %v2872 = vld [vmem:[#allocation4 + $0x1c0] sm:$0xff]
  %v2873 = vld [vmem:[#allocation4 + $0x1c8] sm:$0xff]
  %v2874 = vld [vmem:[#allocation4 + $0x1d0] sm:$0xff]
  %v2875 = vld [vmem:[#allocation4 + $0x1d8] sm:$0xff]
  %v2876 = vld [vmem:[#allocation4 + $0x1e0] sm:$0xff]
  %v2877 = vld [vmem:[#allocation4 + $0x1e8] sm:$0xff]
  %v2878 = vld [vmem:[#allocation4 + $0x1f0] sm:$0xff]
  %v2879 = vld [vmem:[#allocation4 + $0x1f8] sm:$0xff]
  %v2880 = vld [vmem:[#allocation4 + $0x200] sm:$0xff]
  %v2881 = vld [vmem:[#allocation4 + $0x208] sm:$0xff]
  %v2882 = vld [vmem:[#allocation4 + $0x210] sm:$0xff]
  %v2883 = vld [vmem:[#allocation4 + $0x218] sm:$0xff]
  %v2884 = vld [vmem:[#allocation4 + $0x220] sm:$0xff]
  %v2885 = vld [vmem:[#allocation4 + $0x228] sm:$0xff]
  %v2886 = vld [vmem:[#allocation4 + $0x230] sm:$0xff]
  %v2887 = vld [vmem:[#allocation4 + $0x238] sm:$0xff]
  %v2888 = vld [vmem:[#allocation4 + $0x240] sm:$0xff]
  %v2889 = vld [vmem:[#allocation4 + $0x248] sm:$0xff]
  %v2890 = vld [vmem:[#allocation4 + $0x250] sm:$0xff]
  %v2891 = vld [vmem:[#allocation4 + $0x258] sm:$0xff]
  %v2892 = vld [vmem:[#allocation4 + $0x260] sm:$0xff]
  %v2893 = vld [vmem:[#allocation4 + $0x268] sm:$0xff]
  %v2894 = vld [vmem:[#allocation4 + $0x270] sm:$0xff]
  %v2895 = vld [vmem:[#allocation4 + $0x278] sm:$0xff]
  %v2896 = vld [vmem:[#allocation4 + $0x280] sm:$0xff]
  %v2897 = vld [vmem:[#allocation4 + $0x288] sm:$0xff]
  %v2898 = vld [vmem:[#allocation4 + $0x290] sm:$0xff]
  %v2899 = vld [vmem:[#allocation4 + $0x298] sm:$0xff]
  %v2900 = vld [vmem:[#allocation4 + $0x2a0] sm:$0xff]
  %v2901 = vld [vmem:[#allocation4 + $0x2a8] sm:$0xff]
  %v2902 = vld [vmem:[#allocation4 + $0x2b0] sm:$0xff]
  %v2903 = vld [vmem:[#allocation4 + $0x2b8] sm:$0xff]
  %v2904 = vld [vmem:[#allocation4 + $0x2c0] sm:$0xff]
  %v2905 = vld [vmem:[#allocation4 + $0x2c8] sm:$0xff]
  %v2906 = vld [vmem:[#allocation4 + $0x2d0] sm:$0xff]
  %v2907 = vld [vmem:[#allocation4 + $0x2d8] sm:$0xff]
  %v2908 = vld [vmem:[#allocation4 + $0x2e0] sm:$0xff]
  %v2909 = vld [vmem:[#allocation4 + $0x2e8] sm:$0xff]
  %v2910 = vld [vmem:[#allocation4 + $0x2f0] sm:$0xff]
  %v2911 = vld [vmem:[#allocation4 + $0x2f8] sm:$0xff]
  %v2912 = vld [vmem:[#allocation4 + $0x300] sm:$0xff]
  %v2913 = vld [vmem:[#allocation4 + $0x308] sm:$0xff]
  %v2914 = vld [vmem:[#allocation4 + $0x310] sm:$0xff]
  %v2915 = vld [vmem:[#allocation4 + $0x318] sm:$0xff]
  %v2916 = vld [vmem:[#allocation4 + $0x320] sm:$0xff]
  %v2917 = vld [vmem:[#allocation4 + $0x328] sm:$0xff]
  %v2918 = vld [vmem:[#allocation4 + $0x330] sm:$0xff]
  %v2919 = vld [vmem:[#allocation4 + $0x338] sm:$0xff]
  %v2920 = vld [vmem:[#allocation4 + $0x340] sm:$0xff]
  %v2921 = vld [vmem:[#allocation4 + $0x348] sm:$0xff]
  %v2922 = vld [vmem:[#allocation4 + $0x350] sm:$0xff]
  %v2923 = vld [vmem:[#allocation4 + $0x358] sm:$0xff]
  %v2924 = vld [vmem:[#allocation4 + $0x360] sm:$0xff]
  %v2925 = vld [vmem:[#allocation4 + $0x368] sm:$0xff]
  %v2926 = vld [vmem:[#allocation4 + $0x370] sm:$0xff]
  %v2927 = vld [vmem:[#allocation4 + $0x378] sm:$0xff]
  %v2928 = vld [vmem:[#allocation4 + $0x380] sm:$0xff]
  %v2929 = vld [vmem:[#allocation4 + $0x388] sm:$0xff]
  %v2930 = vld [vmem:[#allocation4 + $0x390] sm:$0xff]
  %v2931 = vld [vmem:[#allocation4 + $0x398] sm:$0xff]
  %v2932 = vld [vmem:[#allocation4 + $0x3a0] sm:$0xff]
  %v2933 = vld [vmem:[#allocation4 + $0x3a8] sm:$0xff]
  %v2934 = vld [vmem:[#allocation4 + $0x3b0] sm:$0xff]
  %v2935 = vld [vmem:[#allocation4 + $0x3b8] sm:$0xff]
  %v2936 = vld [vmem:[#allocation4 + $0x3c0] sm:$0xff]
  %v2937 = vld [vmem:[#allocation4 + $0x3c8] sm:$0xff]
  %v2938 = vld [vmem:[#allocation4 + $0x3d0] sm:$0xff]
  %v2939 = vld [vmem:[#allocation4 + $0x3d8] sm:$0xff]
  %v2940 = vld [vmem:[#allocation4 + $0x3e0] sm:$0xff]
  %v2941 = vld [vmem:[#allocation4 + $0x3e8] sm:$0xff]
  %v2942 = vld [vmem:[#allocation4 + $0x3f0] sm:$0xff]
  %v2943 = vld [vmem:[#allocation4 + $0x3f8] sm:$0xff]
  %v2944 = vld [vmem:[#allocation4 + $0x400] sm:$0xff]
  %v2945 = vld [vmem:[#allocation4 + $0x408] sm:$0xff]
  %v2946 = vld [vmem:[#allocation4 + $0x410] sm:$0xff]
  %v2947 = vld [vmem:[#allocation4 + $0x418] sm:$0xff]
  %v2948 = vld [vmem:[#allocation4 + $0x420] sm:$0xff]
  %v2949 = vld [vmem:[#allocation4 + $0x428] sm:$0xff]
  %v2950 = vld [vmem:[#allocation4 + $0x430] sm:$0xff]
  %v2951 = vld [vmem:[#allocation4 + $0x438] sm:$0xff]
  %v2952 = vld [vmem:[#allocation4 + $0x440] sm:$0xff]
  %v2953 = vld [vmem:[#allocation4 + $0x448] sm:$0xff]
  %v2954 = vld [vmem:[#allocation4 + $0x450] sm:$0xff]
  %v2955 = vld [vmem:[#allocation4 + $0x458] sm:$0xff]
  %v2956 = vld [vmem:[#allocation4 + $0x460] sm:$0xff]
  %v2957 = vld [vmem:[#allocation4 + $0x468] sm:$0xff]
  %v2958 = vld [vmem:[#allocation4 + $0x470] sm:$0xff]
  %v2959 = vld [vmem:[#allocation4 + $0x478] sm:$0xff]
  %v2960 = vld [vmem:[#allocation4 + $0x480] sm:$0xff]
  %v2961 = vld [vmem:[#allocation4 + $0x488] sm:$0xff]
  %v2962 = vld [vmem:[#allocation4 + $0x490] sm:$0xff]
  %v2963 = vld [vmem:[#allocation4 + $0x498] sm:$0xff]
  %v2964 = vld [vmem:[#allocation4 + $0x4a0] sm:$0xff]
  %v2965 = vld [vmem:[#allocation4 + $0x4a8] sm:$0xff]
  %v2966 = vld [vmem:[#allocation4 + $0x4b0] sm:$0xff]
  %v2967 = vld [vmem:[#allocation4 + $0x4b8] sm:$0xff]
  %v2968 = vld [vmem:[#allocation4 + $0x4c0] sm:$0xff]
  %v2969 = vld [vmem:[#allocation4 + $0x4c8] sm:$0xff]
  %v2970 = vld [vmem:[#allocation4 + $0x4d0] sm:$0xff]
  %v2971 = vld [vmem:[#allocation4 + $0x4d8] sm:$0xff]
  %v2972 = vld [vmem:[%s4] sm:$0xff]
  %v2973 = vld [vmem:[%s4 + $0x8] sm:$0xff]
  %v2974 = vld [vmem:[%s4 + $0x10] sm:$0xff]
  %v2975 = vld [vmem:[%s4 + $0x18] sm:$0xff]
  %v2976 = vld [vmem:[%s4 + $0x20] sm:$0xff]
  %v2977 = vld [vmem:[%s4 + $0x28] sm:$0xff]
  %v2978 = vld [vmem:[%s4 + $0x30] sm:$0xff]
  %v2979 = vld [vmem:[%s4 + $0x38] sm:$0xff]
  %v2980 = vld [vmem:[%s4 + $0x40] sm:$0xff]
  %v2981 = vld [vmem:[%s4 + $0x48] sm:$0xff]
  %v2982 = vld [vmem:[%s4 + $0x50] sm:$0xff]
  %v2983 = vld [vmem:[%s4 + $0x58] sm:$0xff]
  %2985 = vset.pattern.permute.xlu0 0
  %2986 = vperm.xlu0 %2985, %v2972
  %v2987 = vpop.permute.xlu0 %2986
  %2990 = vset.pattern.permute.xlu0 0
  %2991 = vperm.xlu0 %2990, %v2973
  %v2992 = vpop.permute.xlu0 %2991
  %2995 = vset.pattern.permute.xlu0 0
  %2996 = vperm.xlu0 %2995, %v2974
  %v2997 = vpop.permute.xlu0 %2996
  %3000 = vset.pattern.permute.xlu0 0
  %3001 = vperm.xlu0 %3000, %v2975
  %v3002 = vpop.permute.xlu0 %3001
  %3005 = vset.pattern.permute.xlu0 0
  %3006 = vperm.xlu0 %3005, %v2976
  %v3007 = vpop.permute.xlu0 %3006
  %3010 = vset.pattern.permute.xlu0 0
  %3011 = vperm.xlu0 %3010, %v2977
  %v3012 = vpop.permute.xlu0 %3011
  %3015 = vset.pattern.permute.xlu0 0
  %3016 = vperm.xlu0 %3015, %v2978
  %v3017 = vpop.permute.xlu0 %3016
  %3020 = vset.pattern.permute.xlu0 0
  %3021 = vperm.xlu0 %3020, %v2979
  %v3022 = vpop.permute.xlu0 %3021
  %3025 = vset.pattern.permute.xlu0 0
  %3026 = vperm.xlu0 %3025, %v2980
  %v3027 = vpop.permute.xlu0 %3026
  %3030 = vset.pattern.permute.xlu0 0
  %3031 = vperm.xlu0 %3030, %v2981
  %v3032 = vpop.permute.xlu0 %3031
  %3035 = vset.pattern.permute.xlu0 0
  %3036 = vperm.xlu0 %3035, %v2982
  %v3037 = vpop.permute.xlu0 %3036
  %3040 = vset.pattern.permute.xlu0 0
  %3041 = vperm.xlu0 %3040, %v2983
  %v3042 = vpop.permute.xlu0 %3041
  %vm3044 = vcmask 785408
  %v3046 = vsel %vm3044, %v2705, 0
  %v3049 = vsel %vm3044, %v2715, 0
  %v3052 = vsel %vm3044, %v2725, 0
  %v3055 = vsel %vm3044, %v2735, 0
  %v3058 = vsel %vm3044, %v2745, 0
  %v3061 = vsel %vm3044, %v2755, 0
  %v3064 = vsel %vm3044, %v2765, 0
  %v3067 = vsel %vm3044, %v2775, 0
  %v3070 = vsel %vm3044, %v2785, 0
  %v3073 = vsel %vm3044, %v2795, 0
  %v3076 = vsel %vm3044, %v2805, 0
  %v3079 = vsel %vm3044, %v2815, 0
  %3081 = vmatpush.msra.mxu0 %v2831
  %3082 = vmatpush.msra.mxu0 %v2830
  %3083 = vmatpush.msra.mxu0 %v2829
  %3084 = vmatpush.msra.mxu0 %v2828
  %3085 = vmatpush.msra.mxu0 %v2827
  %3086 = vmatpush.msra.mxu0 %v2826
  %3087 = vmatpush.msra.mxu0 %v2825
  %3088 = vmatpush.msra.mxu0 %v2824
  %3089 = vmatpush.msra.mxu0 %v2823
  %3090 = vmatpush.msra.mxu0 %v2822
  %3091 = vmatpush.msra.mxu0 %v2821
  %3092 = vmatpush.msra.mxu0 %v2820
  %3093 = vmatpush.msra.mxu0 %v2819
  %3094 = vmatpush.msra.mxu0 %v2818
  %3095 = vmatpush.msra.mxu0 %v2817
  %3096 = vmatpush.msra.mxu0 %v2816
  %3097 = vmatmul.f32.gmra.mxu0 %v2696
  %v3098 = vpop.f32.mrf.mxu0
  %v3099 = vadd.f32 %v2987, %v3098
  %3100 = vmatmul.f32.gmra.mxu0 %v2706
  %v3101 = vpop.f32.mrf.mxu0
  %v3102 = vadd.f32 %v2992, %v3101
  %3103 = vmatmul.f32.gmra.mxu0 %v2716
  %v3104 = vpop.f32.mrf.mxu0
  %v3105 = vadd.f32 %v2997, %v3104
  %3106 = vmatmul.f32.gmra.mxu0 %v2726
  %v3107 = vpop.f32.mrf.mxu0
  %v3108 = vadd.f32 %v3002, %v3107
  %3109 = vmatmul.f32.gmra.mxu0 %v2736
  %v3110 = vpop.f32.mrf.mxu0
  %v3111 = vadd.f32 %v3007, %v3110
  %3112 = vmatmul.f32.gmra.mxu0 %v2746
  %v3113 = vpop.f32.mrf.mxu0
  %v3114 = vadd.f32 %v3012, %v3113
  %3115 = vmatmul.f32.gmra.mxu0 %v2756
  %v3116 = vpop.f32.mrf.mxu0
  %v3117 = vadd.f32 %v3017, %v3116
  %3118 = vmatmul.f32.gmra.mxu0 %v2766
  %v3119 = vpop.f32.mrf.mxu0
  %v3120 = vadd.f32 %v3022, %v3119
  %3121 = vmatmul.f32.gmra.mxu0 %v2776
  %v3122 = vpop.f32.mrf.mxu0
  %v3123 = vadd.f32 %v3027, %v3122
  %3124 = vmatmul.f32.gmra.mxu0 %v2786
  %v3125 = vpop.f32.mrf.mxu0
  %v3126 = vadd.f32 %v3032, %v3125
  %3127 = vmatmul.f32.gmra.mxu0 %v2796
  %v3128 = vpop.f32.mrf.mxu0
  %v3129 = vadd.f32 %v3037, %v3128
  %3130 = vmatmul.f32.gmra.mxu0 %v2806
  %v3131 = vpop.f32.mrf.mxu0
  %v3132 = vadd.f32 %v3042, %v3131
  %3133 = vdwg.mxu0
  %3134 = vmatpush.msra.mxu0 %v2847
  %3135 = vmatpush.msra.mxu0 %v2846
  %3136 = vmatpush.msra.mxu0 %v2845
  %3137 = vmatpush.msra.mxu0 %v2844
  %3138 = vmatpush.msra.mxu0 %v2843
  %3139 = vmatpush.msra.mxu0 %v2842
  %3140 = vmatpush.msra.mxu0 %v2841
  %3141 = vmatpush.msra.mxu0 %v2840
  %3142 = vmatpush.msra.mxu0 %v2839
  %3143 = vmatpush.msra.mxu0 %v2838
  %3144 = vmatpush.msra.mxu0 %v2837
  %3145 = vmatpush.msra.mxu0 %v2836
  %3146 = vmatpush.msra.mxu0 %v2835
  %3147 = vmatpush.msra.mxu0 %v2834
  %3148 = vmatpush.msra.mxu0 %v2833
  %3149 = vmatpush.msra.mxu0 %v2832
  %3150 = vmatmul.f32.gmra.mxu0 %v2697
  %v3151 = vpop.f32.mrf.mxu0
  %v3152 = vadd.f32 %v3099, %v3151
  %3153 = vmatmul.f32.gmra.mxu0 %v2707
  %v3154 = vpop.f32.mrf.mxu0
  %v3155 = vadd.f32 %v3102, %v3154
  %3156 = vmatmul.f32.gmra.mxu0 %v2717
  %v3157 = vpop.f32.mrf.mxu0
  %v3158 = vadd.f32 %v3105, %v3157
  %3159 = vmatmul.f32.gmra.mxu0 %v2727
  %v3160 = vpop.f32.mrf.mxu0
  %v3161 = vadd.f32 %v3108, %v3160
  %3162 = vmatmul.f32.gmra.mxu0 %v2737
  %v3163 = vpop.f32.mrf.mxu0
  %v3164 = vadd.f32 %v3111, %v3163
  %3165 = vmatmul.f32.gmra.mxu0 %v2747
  %v3166 = vpop.f32.mrf.mxu0
  %v3167 = vadd.f32 %v3114, %v3166
  %3168 = vmatmul.f32.gmra.mxu0 %v2757
  %v3169 = vpop.f32.mrf.mxu0
  %v3170 = vadd.f32 %v3117, %v3169
  %3171 = vmatmul.f32.gmra.mxu0 %v2767
  %v3172 = vpop.f32.mrf.mxu0
  %v3173 = vadd.f32 %v3120, %v3172
  %3174 = vmatmul.f32.gmra.mxu0 %v2777
  %v3175 = vpop.f32.mrf.mxu0
  %v3176 = vadd.f32 %v3123, %v3175
  %3177 = vmatmul.f32.gmra.mxu0 %v2787
  %v3178 = vpop.f32.mrf.mxu0
  %v3179 = vadd.f32 %v3126, %v3178
  %3180 = vmatmul.f32.gmra.mxu0 %v2797
  %v3181 = vpop.f32.mrf.mxu0
  %v3182 = vadd.f32 %v3129, %v3181
  %3183 = vmatmul.f32.gmra.mxu0 %v2807
  %v3184 = vpop.f32.mrf.mxu0
  %v3185 = vadd.f32 %v3132, %v3184
  %3186 = vdwg.mxu0
  %3187 = vmatpush.msra.mxu0 %v2863
  %3188 = vmatpush.msra.mxu0 %v2862
  %3189 = vmatpush.msra.mxu0 %v2861
  %3190 = vmatpush.msra.mxu0 %v2860
  %3191 = vmatpush.msra.mxu0 %v2859
  %3192 = vmatpush.msra.mxu0 %v2858
  %3193 = vmatpush.msra.mxu0 %v2857
  %3194 = vmatpush.msra.mxu0 %v2856
  %3195 = vmatpush.msra.mxu0 %v2855
  %3196 = vmatpush.msra.mxu0 %v2854
  %3197 = vmatpush.msra.mxu0 %v2853
  %3198 = vmatpush.msra.mxu0 %v2852
  %3199 = vmatpush.msra.mxu0 %v2851
  %3200 = vmatpush.msra.mxu0 %v2850
  %3201 = vmatpush.msra.mxu0 %v2849
  %3202 = vmatpush.msra.mxu0 %v2848
  %3203 = vmatmul.f32.gmra.mxu0 %v2698
  %v3204 = vpop.f32.mrf.mxu0
  %v3205 = vadd.f32 %v3152, %v3204
  %3206 = vmatmul.f32.gmra.mxu0 %v2708
  %v3207 = vpop.f32.mrf.mxu0
  %v3208 = vadd.f32 %v3155, %v3207
  %3209 = vmatmul.f32.gmra.mxu0 %v2718
  %v3210 = vpop.f32.mrf.mxu0
  %v3211 = vadd.f32 %v3158, %v3210
  %3212 = vmatmul.f32.gmra.mxu0 %v2728
  %v3213 = vpop.f32.mrf.mxu0
  %v3214 = vadd.f32 %v3161, %v3213
  %3215 = vmatmul.f32.gmra.mxu0 %v2738
  %v3216 = vpop.f32.mrf.mxu0
  %v3217 = vadd.f32 %v3164, %v3216
  %3218 = vmatmul.f32.gmra.mxu0 %v2748
  %v3219 = vpop.f32.mrf.mxu0
  %v3220 = vadd.f32 %v3167, %v3219
  %3221 = vmatmul.f32.gmra.mxu0 %v2758
  %v3222 = vpop.f32.mrf.mxu0
  %v3223 = vadd.f32 %v3170, %v3222
  %3224 = vmatmul.f32.gmra.mxu0 %v2768
  %v3225 = vpop.f32.mrf.mxu0
  %v3226 = vadd.f32 %v3173, %v3225
  %3227 = vmatmul.f32.gmra.mxu0 %v2778
  %v3228 = vpop.f32.mrf.mxu0
  %v3229 = vadd.f32 %v3176, %v3228
  %3230 = vmatmul.f32.gmra.mxu0 %v2788
  %v3231 = vpop.f32.mrf.mxu0
  %v3232 = vadd.f32 %v3179, %v3231
  %3233 = vmatmul.f32.gmra.mxu0 %v2798
  %v3234 = vpop.f32.mrf.mxu0
  %v3235 = vadd.f32 %v3182, %v3234
  %3236 = vmatmul.f32.gmra.mxu0 %v2808
  %v3237 = vpop.f32.mrf.mxu0
  %v3238 = vadd.f32 %v3185, %v3237
  %3239 = vdwg.mxu0
  %3240 = vmatpush.msra.mxu0 %v2879
  %3241 = vmatpush.msra.mxu0 %v2878
  %3242 = vmatpush.msra.mxu0 %v2877
  %3243 = vmatpush.msra.mxu0 %v2876
  %3244 = vmatpush.msra.mxu0 %v2875
  %3245 = vmatpush.msra.mxu0 %v2874
  %3246 = vmatpush.msra.mxu0 %v2873
  %3247 = vmatpush.msra.mxu0 %v2872
  %3248 = vmatpush.msra.mxu0 %v2871
  %3249 = vmatpush.msra.mxu0 %v2870
  %3250 = vmatpush.msra.mxu0 %v2869
  %3251 = vmatpush.msra.mxu0 %v2868
  %3252 = vmatpush.msra.mxu0 %v2867
  %3253 = vmatpush.msra.mxu0 %v2866
  %3254 = vmatpush.msra.mxu0 %v2865
  %3255 = vmatpush.msra.mxu0 %v2864
  %3256 = vmatmul.f32.gmra.mxu0 %v2699
  %v3257 = vpop.f32.mrf.mxu0
  %v3258 = vadd.f32 %v3205, %v3257
  %3259 = vmatmul.f32.gmra.mxu0 %v2709
  %v3260 = vpop.f32.mrf.mxu0
  %v3261 = vadd.f32 %v3208, %v3260
  %3262 = vmatmul.f32.gmra.mxu0 %v2719
  %v3263 = vpop.f32.mrf.mxu0
  %v3264 = vadd.f32 %v3211, %v3263
  %3265 = vmatmul.f32.gmra.mxu0 %v2729
  %v3266 = vpop.f32.mrf.mxu0
  %v3267 = vadd.f32 %v3214, %v3266
  %3268 = vmatmul.f32.gmra.mxu0 %v2739
  %v3269 = vpop.f32.mrf.mxu0
  %v3270 = vadd.f32 %v3217, %v3269
  %3271 = vmatmul.f32.gmra.mxu0 %v2749
  %v3272 = vpop.f32.mrf.mxu0
  %v3273 = vadd.f32 %v3220, %v3272
  %3274 = vmatmul.f32.gmra.mxu0 %v2759
  %v3275 = vpop.f32.mrf.mxu0
  %v3276 = vadd.f32 %v3223, %v3275
  %3277 = vmatmul.f32.gmra.mxu0 %v2769
  %v3278 = vpop.f32.mrf.mxu0
  %v3279 = vadd.f32 %v3226, %v3278
  %3280 = vmatmul.f32.gmra.mxu0 %v2779
  %v3281 = vpop.f32.mrf.mxu0
  %v3282 = vadd.f32 %v3229, %v3281
  %3283 = vmatmul.f32.gmra.mxu0 %v2789
  %v3284 = vpop.f32.mrf.mxu0
  %v3285 = vadd.f32 %v3232, %v3284
  %3286 = vmatmul.f32.gmra.mxu0 %v2799
  %v3287 = vpop.f32.mrf.mxu0
  %v3288 = vadd.f32 %v3235, %v3287
  %3289 = vmatmul.f32.gmra.mxu0 %v2809
  %v3290 = vpop.f32.mrf.mxu0
  %v3291 = vadd.f32 %v3238, %v3290
  %3292 = vdwg.mxu0
  %3293 = vmatpush.msra.mxu0 %v2895
  %3294 = vmatpush.msra.mxu0 %v2894
  %3295 = vmatpush.msra.mxu0 %v2893
  %3296 = vmatpush.msra.mxu0 %v2892
  %3297 = vmatpush.msra.mxu0 %v2891
  %3298 = vmatpush.msra.mxu0 %v2890
  %3299 = vmatpush.msra.mxu0 %v2889
  %3300 = vmatpush.msra.mxu0 %v2888
  %3301 = vmatpush.msra.mxu0 %v2887
  %3302 = vmatpush.msra.mxu0 %v2886
  %3303 = vmatpush.msra.mxu0 %v2885
  %3304 = vmatpush.msra.mxu0 %v2884
  %3305 = vmatpush.msra.mxu0 %v2883
  %3306 = vmatpush.msra.mxu0 %v2882
  %3307 = vmatpush.msra.mxu0 %v2881
  %3308 = vmatpush.msra.mxu0 %v2880
  %3309 = vmatmul.f32.gmra.mxu0 %v2700
  %v3310 = vpop.f32.mrf.mxu0
  %v3311 = vadd.f32 %v3258, %v3310
  %3312 = vmatmul.f32.gmra.mxu0 %v2710
  %v3313 = vpop.f32.mrf.mxu0
  %v3314 = vadd.f32 %v3261, %v3313
  %3315 = vmatmul.f32.gmra.mxu0 %v2720
  %v3316 = vpop.f32.mrf.mxu0
  %v3317 = vadd.f32 %v3264, %v3316
  %3318 = vmatmul.f32.gmra.mxu0 %v2730
  %v3319 = vpop.f32.mrf.mxu0
  %v3320 = vadd.f32 %v3267, %v3319
  %3321 = vmatmul.f32.gmra.mxu0 %v2740
  %v3322 = vpop.f32.mrf.mxu0
  %v3323 = vadd.f32 %v3270, %v3322
  %3324 = vmatmul.f32.gmra.mxu0 %v2750
  %v3325 = vpop.f32.mrf.mxu0
  %v3326 = vadd.f32 %v3273, %v3325
  %3327 = vmatmul.f32.gmra.mxu0 %v2760
  %v3328 = vpop.f32.mrf.mxu0
  %v3329 = vadd.f32 %v3276, %v3328
  %3330 = vmatmul.f32.gmra.mxu0 %v2770
  %v3331 = vpop.f32.mrf.mxu0
  %v3332 = vadd.f32 %v3279, %v3331
  %3333 = vmatmul.f32.gmra.mxu0 %v2780
  %v3334 = vpop.f32.mrf.mxu0
  %v3335 = vadd.f32 %v3282, %v3334
  %3336 = vmatmul.f32.gmra.mxu0 %v2790
  %v3337 = vpop.f32.mrf.mxu0
  %v3338 = vadd.f32 %v3285, %v3337
  %3339 = vmatmul.f32.gmra.mxu0 %v2800
  %v3340 = vpop.f32.mrf.mxu0
  %v3341 = vadd.f32 %v3288, %v3340
  %3342 = vmatmul.f32.gmra.mxu0 %v2810
  %v3343 = vpop.f32.mrf.mxu0
  %v3344 = vadd.f32 %v3291, %v3343
  %3345 = vdwg.mxu0
  %3346 = vmatpush.msra.mxu0 %v2911
  %3347 = vmatpush.msra.mxu0 %v2910
  %3348 = vmatpush.msra.mxu0 %v2909
  %3349 = vmatpush.msra.mxu0 %v2908
  %3350 = vmatpush.msra.mxu0 %v2907
  %3351 = vmatpush.msra.mxu0 %v2906
  %3352 = vmatpush.msra.mxu0 %v2905
  %3353 = vmatpush.msra.mxu0 %v2904
  %3354 = vmatpush.msra.mxu0 %v2903
  %3355 = vmatpush.msra.mxu0 %v2902
  %3356 = vmatpush.msra.mxu0 %v2901
  %3357 = vmatpush.msra.mxu0 %v2900
  %3358 = vmatpush.msra.mxu0 %v2899
  %3359 = vmatpush.msra.mxu0 %v2898
  %3360 = vmatpush.msra.mxu0 %v2897
  %3361 = vmatpush.msra.mxu0 %v2896
  %3362 = vmatmul.f32.gmra.mxu0 %v2701
  %v3363 = vpop.f32.mrf.mxu0
  %v3364 = vadd.f32 %v3311, %v3363
  %3365 = vmatmul.f32.gmra.mxu0 %v2711
  %v3366 = vpop.f32.mrf.mxu0
  %v3367 = vadd.f32 %v3314, %v3366
  %3368 = vmatmul.f32.gmra.mxu0 %v2721
  %v3369 = vpop.f32.mrf.mxu0
  %v3370 = vadd.f32 %v3317, %v3369
  %3371 = vmatmul.f32.gmra.mxu0 %v2731
  %v3372 = vpop.f32.mrf.mxu0
  %v3373 = vadd.f32 %v3320, %v3372
  %3374 = vmatmul.f32.gmra.mxu0 %v2741
  %v3375 = vpop.f32.mrf.mxu0
  %v3376 = vadd.f32 %v3323, %v3375
  %3377 = vmatmul.f32.gmra.mxu0 %v2751
  %v3378 = vpop.f32.mrf.mxu0
  %v3379 = vadd.f32 %v3326, %v3378
  %3380 = vmatmul.f32.gmra.mxu0 %v2761
  %v3381 = vpop.f32.mrf.mxu0
  %v3382 = vadd.f32 %v3329, %v3381
  %3383 = vmatmul.f32.gmra.mxu0 %v2771
  %v3384 = vpop.f32.mrf.mxu0
  %v3385 = vadd.f32 %v3332, %v3384
  %3386 = vmatmul.f32.gmra.mxu0 %v2781
  %v3387 = vpop.f32.mrf.mxu0
  %v3388 = vadd.f32 %v3335, %v3387
  %3389 = vmatmul.f32.gmra.mxu0 %v2791
  %v3390 = vpop.f32.mrf.mxu0
  %v3391 = vadd.f32 %v3338, %v3390
  %3392 = vmatmul.f32.gmra.mxu0 %v2801
  %v3393 = vpop.f32.mrf.mxu0
  %v3394 = vadd.f32 %v3341, %v3393
  %3395 = vmatmul.f32.gmra.mxu0 %v2811
  %v3396 = vpop.f32.mrf.mxu0
  %v3397 = vadd.f32 %v3344, %v3396
  %3398 = vdwg.mxu0
  %3399 = vmatpush.msra.mxu0 %v2927
  %3400 = vmatpush.msra.mxu0 %v2926
  %3401 = vmatpush.msra.mxu0 %v2925
  %3402 = vmatpush.msra.mxu0 %v2924
  %3403 = vmatpush.msra.mxu0 %v2923
  %3404 = vmatpush.msra.mxu0 %v2922
  %3405 = vmatpush.msra.mxu0 %v2921
  %3406 = vmatpush.msra.mxu0 %v2920
  %3407 = vmatpush.msra.mxu0 %v2919
  %3408 = vmatpush.msra.mxu0 %v2918
  %3409 = vmatpush.msra.mxu0 %v2917
  %3410 = vmatpush.msra.mxu0 %v2916
  %3411 = vmatpush.msra.mxu0 %v2915
  %3412 = vmatpush.msra.mxu0 %v2914
  %3413 = vmatpush.msra.mxu0 %v2913
  %3414 = vmatpush.msra.mxu0 %v2912
  %3415 = vmatmul.f32.gmra.mxu0 %v2702
  %v3416 = vpop.f32.mrf.mxu0
  %v3417 = vadd.f32 %v3364, %v3416
  %3418 = vmatmul.f32.gmra.mxu0 %v2712
  %v3419 = vpop.f32.mrf.mxu0
  %v3420 = vadd.f32 %v3367, %v3419
  %3421 = vmatmul.f32.gmra.mxu0 %v2722
  %v3422 = vpop.f32.mrf.mxu0
  %v3423 = vadd.f32 %v3370, %v3422
  %3424 = vmatmul.f32.gmra.mxu0 %v2732
  %v3425 = vpop.f32.mrf.mxu0
  %v3426 = vadd.f32 %v3373, %v3425
  %3427 = vmatmul.f32.gmra.mxu0 %v2742
  %v3428 = vpop.f32.mrf.mxu0
  %v3429 = vadd.f32 %v3376, %v3428
  %3430 = vmatmul.f32.gmra.mxu0 %v2752
  %v3431 = vpop.f32.mrf.mxu0
  %v3432 = vadd.f32 %v3379, %v3431
  %3433 = vmatmul.f32.gmra.mxu0 %v2762
  %v3434 = vpop.f32.mrf.mxu0
  %v3435 = vadd.f32 %v3382, %v3434
  %3436 = vmatmul.f32.gmra.mxu0 %v2772
  %v3437 = vpop.f32.mrf.mxu0
  %v3438 = vadd.f32 %v3385, %v3437
  %3439 = vmatmul.f32.gmra.mxu0 %v2782
  %v3440 = vpop.f32.mrf.mxu0
  %v3441 = vadd.f32 %v3388, %v3440
  %3442 = vmatmul.f32.gmra.mxu0 %v2792
  %v3443 = vpop.f32.mrf.mxu0
  %v3444 = vadd.f32 %v3391, %v3443
  %3445 = vmatmul.f32.gmra.mxu0 %v2802
  %v3446 = vpop.f32.mrf.mxu0
  %v3447 = vadd.f32 %v3394, %v3446
  %3448 = vmatmul.f32.gmra.mxu0 %v2812
  %v3449 = vpop.f32.mrf.mxu0
  %v3450 = vadd.f32 %v3397, %v3449
  %3451 = vdwg.mxu0
  %3452 = vmatpush.msra.mxu0 %v2943
  %3453 = vmatpush.msra.mxu0 %v2942
  %3454 = vmatpush.msra.mxu0 %v2941
  %3455 = vmatpush.msra.mxu0 %v2940
  %3456 = vmatpush.msra.mxu0 %v2939
  %3457 = vmatpush.msra.mxu0 %v2938
  %3458 = vmatpush.msra.mxu0 %v2937
  %3459 = vmatpush.msra.mxu0 %v2936
  %3460 = vmatpush.msra.mxu0 %v2935
  %3461 = vmatpush.msra.mxu0 %v2934
  %3462 = vmatpush.msra.mxu0 %v2933
  %3463 = vmatpush.msra.mxu0 %v2932
  %3464 = vmatpush.msra.mxu0 %v2931
  %3465 = vmatpush.msra.mxu0 %v2930
  %3466 = vmatpush.msra.mxu0 %v2929
  %3467 = vmatpush.msra.mxu0 %v2928
  %3468 = vmatmul.f32.gmra.mxu0 %v2703
  %v3469 = vpop.f32.mrf.mxu0
  %v3470 = vadd.f32 %v3417, %v3469
  %3471 = vmatmul.f32.gmra.mxu0 %v2713
  %v3472 = vpop.f32.mrf.mxu0
  %v3473 = vadd.f32 %v3420, %v3472
  %3474 = vmatmul.f32.gmra.mxu0 %v2723
  %v3475 = vpop.f32.mrf.mxu0
  %v3476 = vadd.f32 %v3423, %v3475
  %3477 = vmatmul.f32.gmra.mxu0 %v2733
  %v3478 = vpop.f32.mrf.mxu0
  %v3479 = vadd.f32 %v3426, %v3478
  %3480 = vmatmul.f32.gmra.mxu0 %v2743
  %v3481 = vpop.f32.mrf.mxu0
  %v3482 = vadd.f32 %v3429, %v3481
  %3483 = vmatmul.f32.gmra.mxu0 %v2753
  %v3484 = vpop.f32.mrf.mxu0
  %v3485 = vadd.f32 %v3432, %v3484
  %3486 = vmatmul.f32.gmra.mxu0 %v2763
  %v3487 = vpop.f32.mrf.mxu0
  %v3488 = vadd.f32 %v3435, %v3487
  %3489 = vmatmul.f32.gmra.mxu0 %v2773
  %v3490 = vpop.f32.mrf.mxu0
  %v3491 = vadd.f32 %v3438, %v3490
  %3492 = vmatmul.f32.gmra.mxu0 %v2783
  %v3493 = vpop.f32.mrf.mxu0
  %v3494 = vadd.f32 %v3441, %v3493
  %3495 = vmatmul.f32.gmra.mxu0 %v2793
  %v3496 = vpop.f32.mrf.mxu0
  %v3497 = vadd.f32 %v3444, %v3496
  %3498 = vmatmul.f32.gmra.mxu0 %v2803
  %v3499 = vpop.f32.mrf.mxu0
  %v3500 = vadd.f32 %v3447, %v3499
  %3501 = vmatmul.f32.gmra.mxu0 %v2813
  %v3502 = vpop.f32.mrf.mxu0
  %v3503 = vadd.f32 %v3450, %v3502
  %3504 = vdwg.mxu0
  %3505 = vmatpush.msra.mxu0 %v2959
  %3506 = vmatpush.msra.mxu0 %v2958
  %3507 = vmatpush.msra.mxu0 %v2957
  %3508 = vmatpush.msra.mxu0 %v2956
  %3509 = vmatpush.msra.mxu0 %v2955
  %3510 = vmatpush.msra.mxu0 %v2954
  %3511 = vmatpush.msra.mxu0 %v2953
  %3512 = vmatpush.msra.mxu0 %v2952
  %3513 = vmatpush.msra.mxu0 %v2951
  %3514 = vmatpush.msra.mxu0 %v2950
  %3515 = vmatpush.msra.mxu0 %v2949
  %3516 = vmatpush.msra.mxu0 %v2948
  %3517 = vmatpush.msra.mxu0 %v2947
  %3518 = vmatpush.msra.mxu0 %v2946
  %3519 = vmatpush.msra.mxu0 %v2945
  %3520 = vmatpush.msra.mxu0 %v2944
  %3521 = vmatmul.f32.gmra.mxu0 %v2704
  %v3522 = vpop.f32.mrf.mxu0
  %v3523 = vadd.f32 %v3470, %v3522
  %3524 = vmatmul.f32.gmra.mxu0 %v2714
  %v3525 = vpop.f32.mrf.mxu0
  %v3526 = vadd.f32 %v3473, %v3525
  %3527 = vmatmul.f32.gmra.mxu0 %v2724
  %v3528 = vpop.f32.mrf.mxu0
  %v3529 = vadd.f32 %v3476, %v3528
  %3530 = vmatmul.f32.gmra.mxu0 %v2734
  %v3531 = vpop.f32.mrf.mxu0
  %v3532 = vadd.f32 %v3479, %v3531
  %3533 = vmatmul.f32.gmra.mxu0 %v2744
  %v3534 = vpop.f32.mrf.mxu0
  %v3535 = vadd.f32 %v3482, %v3534
  %3536 = vmatmul.f32.gmra.mxu0 %v2754
  %v3537 = vpop.f32.mrf.mxu0
  %v3538 = vadd.f32 %v3485, %v3537
  %3539 = vmatmul.f32.gmra.mxu0 %v2764
  %v3540 = vpop.f32.mrf.mxu0
  %v3541 = vadd.f32 %v3488, %v3540
  %3542 = vmatmul.f32.gmra.mxu0 %v2774
  %v3543 = vpop.f32.mrf.mxu0
  %v3544 = vadd.f32 %v3491, %v3543
  %3545 = vmatmul.f32.gmra.mxu0 %v2784
  %v3546 = vpop.f32.mrf.mxu0
  %v3547 = vadd.f32 %v3494, %v3546
  %3548 = vmatmul.f32.gmra.mxu0 %v2794
  %v3549 = vpop.f32.mrf.mxu0
  %v3550 = vadd.f32 %v3497, %v3549
  %3551 = vmatmul.f32.gmra.mxu0 %v2804
  %v3552 = vpop.f32.mrf.mxu0
  %v3553 = vadd.f32 %v3500, %v3552
  %3554 = vmatmul.f32.gmra.mxu0 %v2814
  %v3555 = vpop.f32.mrf.mxu0
  %v3556 = vadd.f32 %v3503, %v3555
  %3557 = vdwg.mxu0
  %3558 = vmatpush.msra.mxu0 0.0
  %3559 = vmatpush.msra.mxu0 0.0
  %3560 = vmatpush.msra.mxu0 0.0
  %3561 = vmatpush.msra.mxu0 0.0
  %3562 = vmatpush.msra.mxu0 %v2971
  %3563 = vmatpush.msra.mxu0 %v2970
  %3564 = vmatpush.msra.mxu0 %v2969
  %3565 = vmatpush.msra.mxu0 %v2968
  %3566 = vmatpush.msra.mxu0 %v2967
  %3567 = vmatpush.msra.mxu0 %v2966
  %3568 = vmatpush.msra.mxu0 %v2965
  %3569 = vmatpush.msra.mxu0 %v2964
  %3570 = vmatpush.msra.mxu0 %v2963
  %3571 = vmatpush.msra.mxu0 %v2962
  %3572 = vmatpush.msra.mxu0 %v2961
  %3573 = vmatpush.msra.mxu0 %v2960
  %3574 = vmatmul.f32.gmra.mxu0 %v3046
  %v3575 = vpop.f32.mrf.mxu0
  %v3576 = vadd.f32 %v3523, %v3575
  %3577 = vmatmul.f32.gmra.mxu0 %v3049
  %v3578 = vpop.f32.mrf.mxu0
  %v3579 = vadd.f32 %v3526, %v3578
  %3580 = vmatmul.f32.gmra.mxu0 %v3052
  %v3581 = vpop.f32.mrf.mxu0
  %v3582 = vadd.f32 %v3529, %v3581
  %3583 = vmatmul.f32.gmra.mxu0 %v3055
  %v3584 = vpop.f32.mrf.mxu0
  %v3585 = vadd.f32 %v3532, %v3584
  %3586 = vmatmul.f32.gmra.mxu0 %v3058
  %v3587 = vpop.f32.mrf.mxu0
  %v3588 = vadd.f32 %v3535, %v3587
  %3589 = vmatmul.f32.gmra.mxu0 %v3061
  %v3590 = vpop.f32.mrf.mxu0
  %v3591 = vadd.f32 %v3538, %v3590
  %3592 = vmatmul.f32.gmra.mxu0 %v3064
  %v3593 = vpop.f32.mrf.mxu0
  %v3594 = vadd.f32 %v3541, %v3593
  %3595 = vmatmul.f32.gmra.mxu0 %v3067
  %v3596 = vpop.f32.mrf.mxu0
  %v3597 = vadd.f32 %v3544, %v3596
  %3598 = vmatmul.f32.gmra.mxu0 %v3070
  %v3599 = vpop.f32.mrf.mxu0
  %v3600 = vadd.f32 %v3547, %v3599
  %3601 = vmatmul.f32.gmra.mxu0 %v3073
  %v3602 = vpop.f32.mrf.mxu0
  %v3603 = vadd.f32 %v3550, %v3602
  %3604 = vmatmul.f32.gmra.mxu0 %v3076
  %v3605 = vpop.f32.mrf.mxu0
  %v3606 = vadd.f32 %v3553, %v3605
  %3607 = vmatmul.f32.gmra.mxu0 %v3079
  %v3608 = vpop.f32.mrf.mxu0
  %v3609 = vadd.f32 %v3556, %v3608
  %3610 = vdwg.mxu0
  %3611 = vst [vmem:[%s5] sm:$0xff] %v3576
  %3612 = vst [vmem:[%s5 + $0x8] sm:$0xff] %v3579
  %3613 = vst [vmem:[%s5 + $0x10] sm:$0xff] %v3582
  %3614 = vst [vmem:[%s5 + $0x18] sm:$0xff] %v3585
  %3615 = vst [vmem:[%s5 + $0x20] sm:$0xff] %v3588
  %3616 = vst [vmem:[%s5 + $0x28] sm:$0xff] %v3591
  %3617 = vst [vmem:[%s5 + $0x30] sm:$0xff] %v3594
  %3618 = vst [vmem:[%s5 + $0x38] sm:$0xff] %v3597
  %3619 = vst [vmem:[%s5 + $0x40] sm:$0xff] %v3600
  %3620 = vst [vmem:[%s5 + $0x48] sm:$0xff] %v3603
  %3621 = vst [vmem:[%s5 + $0x50] sm:$0xff] %v3606
  %3622 = vst [vmem:[%s5 + $0x58] sm:$0xff] %v3609
  %3623 = vst [vmem:[%s5 + $0x60] sm:$0xff] %v225
  %3624 = vst [vmem:[%s5 + $0x68] sm:$0xff] %v226
  %3625 = vst [vmem:[%s5 + $0x70] sm:$0xff] %v227
  %3626 = vst [vmem:[%s5 + $0x78] sm:$0xff] %v228
  %3627 = vadd.xlane.f32.xlu0 %v3576
  %v3628 = vpop.xlane.xlu0 %3627
  %3629 = vadd.xlane.f32.xlu0 %v3579
  %v3630 = vpop.xlane.xlu0 %3629
  %3631 = vadd.xlane.f32.xlu0 %v3582
  %v3632 = vpop.xlane.xlu0 %3631
  %3633 = vadd.xlane.f32.xlu0 %v3585
  %v3634 = vpop.xlane.xlu0 %3633
  %3635 = vadd.xlane.f32.xlu0 %v3588
  %v3636 = vpop.xlane.xlu0 %3635
  %3637 = vadd.xlane.f32.xlu0 %v3591
  %v3638 = vpop.xlane.xlu0 %3637
  %3639 = vadd.xlane.f32.xlu0 %v3594
  %v3640 = vpop.xlane.xlu0 %3639
  %3641 = vadd.xlane.f32.xlu0 %v3597
  %v3642 = vpop.xlane.xlu0 %3641
  %3643 = vadd.xlane.f32.xlu0 %v3600
  %v3644 = vpop.xlane.xlu0 %3643
  %3645 = vadd.xlane.f32.xlu0 %v3603
  %v3646 = vpop.xlane.xlu0 %3645
  %3647 = vadd.xlane.f32.xlu0 %v3606
  %v3648 = vpop.xlane.xlu0 %3647
  %3649 = vadd.xlane.f32.xlu0 %v3609
  %v3650 = vpop.xlane.xlu0 %3649
  %vm3651 = vcmask 7168
  %3652 = vst.msk [vmem:[%s6] sm:$0xff] %vm3651, %v3628
  %3653 = vst.msk [vmem:[%s6 + $0x8] sm:$0xff] %vm3651, %v3630
  %3654 = vst.msk [vmem:[%s6 + $0x10] sm:$0xff] %vm3651, %v3632
  %3655 = vst.msk [vmem:[%s6 + $0x18] sm:$0xff] %vm3651, %v3634
  %3656 = vst.msk [vmem:[%s6 + $0x20] sm:$0xff] %vm3651, %v3636
  %3657 = vst.msk [vmem:[%s6 + $0x28] sm:$0xff] %vm3651, %v3638
  %3658 = vst.msk [vmem:[%s6 + $0x30] sm:$0xff] %vm3651, %v3640
  %3659 = vst.msk [vmem:[%s6 + $0x38] sm:$0xff] %vm3651, %v3642
  %3660 = vst.msk [vmem:[%s6 + $0x40] sm:$0xff] %vm3651, %v3644
  %3661 = vst.msk [vmem:[%s6 + $0x48] sm:$0xff] %vm3651, %v3646
  %3662 = vst.msk [vmem:[%s6 + $0x50] sm:$0xff] %vm3651, %v3648
  %3663 = vst.msk [vmem:[%s6 + $0x58] sm:$0xff] %vm3651, %v3650
  %v3664 = vmul.f32 %v3576, %v3576
  %v3665 = vmul.f32 %v3579, %v3579
  %v3666 = vmul.f32 %v3582, %v3582
  %v3667 = vmul.f32 %v3585, %v3585
  %v3668 = vmul.f32 %v3588, %v3588
  %v3669 = vmul.f32 %v3591, %v3591
  %v3670 = vmul.f32 %v3594, %v3594
  %v3671 = vmul.f32 %v3597, %v3597
  %v3672 = vmul.f32 %v3600, %v3600
  %v3673 = vmul.f32 %v3603, %v3603
  %v3674 = vmul.f32 %v3606, %v3606
  %v3675 = vmul.f32 %v3609, %v3609
  %3676 = vadd.xlane.f32.xlu0 %v3664
  %v3677 = vpop.xlane.xlu0 %3676
  %3678 = vadd.xlane.f32.xlu0 %v3665
  %v3679 = vpop.xlane.xlu0 %3678
  %3680 = vadd.xlane.f32.xlu0 %v3666
  %v3681 = vpop.xlane.xlu0 %3680
  %3682 = vadd.xlane.f32.xlu0 %v3667
  %v3683 = vpop.xlane.xlu0 %3682
  %3684 = vadd.xlane.f32.xlu0 %v3668
  %v3685 = vpop.xlane.xlu0 %3684
  %3686 = vadd.xlane.f32.xlu0 %v3669
  %v3687 = vpop.xlane.xlu0 %3686
  %3688 = vadd.xlane.f32.xlu0 %v3670
  %v3689 = vpop.xlane.xlu0 %3688
  %3690 = vadd.xlane.f32.xlu0 %v3671
  %v3691 = vpop.xlane.xlu0 %3690
  %3692 = vadd.xlane.f32.xlu0 %v3672
  %v3693 = vpop.xlane.xlu0 %3692
  %3694 = vadd.xlane.f32.xlu0 %v3673
  %v3695 = vpop.xlane.xlu0 %3694
  %3696 = vadd.xlane.f32.xlu0 %v3674
  %v3697 = vpop.xlane.xlu0 %3696
  %3698 = vadd.xlane.f32.xlu0 %v3675
  %v3699 = vpop.xlane.xlu0 %3698
  %vm3700 = vcmask 15368
  %3701 = vst.msk [vmem:[%s6] sm:$0xff] %vm3700, %v3677
  %3702 = vst.msk [vmem:[%s6 + $0x8] sm:$0xff] %vm3700, %v3679
  %3703 = vst.msk [vmem:[%s6 + $0x10] sm:$0xff] %vm3700, %v3681
  %3704 = vst.msk [vmem:[%s6 + $0x18] sm:$0xff] %vm3700, %v3683
  %3705 = vst.msk [vmem:[%s6 + $0x20] sm:$0xff] %vm3700, %v3685
  %3706 = vst.msk [vmem:[%s6 + $0x28] sm:$0xff] %vm3700, %v3687
  %3707 = vst.msk [vmem:[%s6 + $0x30] sm:$0xff] %vm3700, %v3689
  %3708 = vst.msk [vmem:[%s6 + $0x38] sm:$0xff] %vm3700, %v3691
  %3709 = vst.msk [vmem:[%s6 + $0x40] sm:$0xff] %vm3700, %v3693
  %3710 = vst.msk [vmem:[%s6 + $0x48] sm:$0xff] %vm3700, %v3695
  %3711 = vst.msk [vmem:[%s6 + $0x50] sm:$0xff] %vm3700, %v3697
  %3712 = vst.msk [vmem:[%s6 + $0x58] sm:$0xff] %vm3700, %v3699
  %3713 = vadd.xlane.f32.xlu0 %v225
  %v3714 = vpop.xlane.xlu0 %3713
  %3715 = vadd.xlane.f32.xlu0 %v226
  %v3716 = vpop.xlane.xlu0 %3715
  %3717 = vadd.xlane.f32.xlu0 %v227
  %v3718 = vpop.xlane.xlu0 %3717
  %3719 = vadd.xlane.f32.xlu0 %v228
  %v3720 = vpop.xlane.xlu0 %3719
  %3721 = vst.msk [vmem:[%s6 + $0x60] sm:$0xff] %vm3651, %v3714
  %3722 = vst.msk [vmem:[%s6 + $0x68] sm:$0xff] %vm3651, %v3716
  %3723 = vst.msk [vmem:[%s6 + $0x70] sm:$0xff] %vm3651, %v3718
  %3724 = vst.msk [vmem:[%s6 + $0x78] sm:$0xff] %vm3651, %v3720
  %v3725 = vmul.f32 %v225, %v225
  %v3726 = vmul.f32 %v226, %v226
  %v3727 = vmul.f32 %v227, %v227
  %v3728 = vmul.f32 %v228, %v228
  %3729 = vadd.xlane.f32.xlu0 %v3725
  %v3730 = vpop.xlane.xlu0 %3729
  %3731 = vadd.xlane.f32.xlu0 %v3726
  %v3732 = vpop.xlane.xlu0 %3731
  %3733 = vadd.xlane.f32.xlu0 %v3727
  %v3734 = vpop.xlane.xlu0 %3733
  %3735 = vadd.xlane.f32.xlu0 %v3728
  %v3736 = vpop.xlane.xlu0 %3735
  %3737 = vst.msk [vmem:[%s6 + $0x60] sm:$0xff] %vm3700, %v3730
  %3738 = vst.msk [vmem:[%s6 + $0x68] sm:$0xff] %vm3700, %v3732
  %3739 = vst.msk [vmem:[%s6 + $0x70] sm:$0xff] %vm3700, %v3734
  %3740 = vst.msk [vmem:[%s6 + $0x78] sm:$0xff] %vm3700, %v3736
  // Predicated region
  $region22: #{inception_layer.2} parent=0 // pred_check
    _
  $region23: #{inception_layer.2} parent=0 // pred_check_branch
    %3742 = sbr.rel (0) target = $region25
  $region24: #{inception_layer.2} parent=0 // pred_region
    _
  $region25: #{inception_layer.2} parent=0 // pred_fallthru
    _
  // Predicated region
  $region26: #{inception_layer.2} parent=0 // pred_check
    _
  $region27: #{inception_layer.2} parent=0 // pred_check_branch
    %3744 = sbr.rel (0) target = $region29
  $region28: #{inception_layer.2} parent=0 // pred_region
    _
  $region29: #{inception_layer.2} parent=0 // pred_fallthru
    _
  // Predicated region
  $region30: #{inception_layer.2} parent=0 // pred_check
    _
  $region31: #{inception_layer.2} parent=0 // pred_check_branch
    %3746 = sbr.rel (0) target = $region33
  $region32: #{inception_layer.2} parent=0 // pred_region
    _
  $region33: #{inception_layer.2} parent=0 // pred_fallthru
    _
  // Predicated region
  $region34: #{inception_layer.2} parent=0 // pred_check
    _
  $region35: #{inception_layer.2} parent=0 // pred_check_branch
    %3748 = sbr.rel (0) target = $region37
  $region36: #{inception_layer.2} parent=0 // pred_region
    _
  $region37: #{inception_layer.2} parent=0 // pred_fallthru
    _

</llo_original>
